<compile_context>
chip_gen: v7x
topology: tpu7x:2x2x1
jax: 0.10.0
libtpu: 0.0.40
codegen_flags: <defaults>
</compile_context>

<pallas_src>
import functools

import jax
import jax.numpy as jnp
from jax import lax
from jax.experimental import pallas as pl
from jax.experimental.pallas import tpu as pltpu


def _round_up(x, m):
    return ((x + m - 1) // m) * m


# ------------------------------ Pallas kernel ------------------------------ #

def _nn_fused_kernel(xp_ref, w1_ref, w2_ref, w3_ref, b1_ref, b2_ref, halo_ref,
                     b3_ref, o_ref, y2c_ref, *, H, W, Hc, Wc):
    """Full NN forward for one image, fully resident in VMEM.

    xp_ref  : (1, H*W, 128)  bf16 conv1 im2col patches (9*Cin stacked in K)
    w1_ref  : (128, Cmid_p)  bf16 stacked conv1 weight (ActNorm scale folded)
    w2_ref  : (Cmid_p, Cmid_p) bf16 1x1 conv2 weight (scale folded)
    w3_ref  : (9, Cmid_p, Cout_p) bf16 conv3 tap weights (exp(3*logs) folded)
    b*_ref  : (1, C) f32 folded biases; halo_ref = leaky(conv2 bias) constant
    y2c_ref : (Hc, Wc, Cmid_p) f32 scratch canvas for conv2's padded output
    """
    cmid_p = w2_ref.shape[1]
    cout_p = w3_ref.shape[2]
    hw = H * W
    mm = w1_ref.dtype                      # bf16 matmul operands

    # ---- conv1 (3x3, pad=1) as ONE stacked-K matmul on the HxW interior ----
    z1 = jnp.dot(xp_ref[0], w1_ref[...],
                 preferred_element_type=jnp.float32) + b1_ref[...]
    y1 = jnp.maximum(z1, 0.01 * z1)                       # leaky_relu

    # ---- conv2 (1x1) + ActNorm + leaky on the interior only ----
    z2 = jnp.dot(y1.astype(mm), w2_ref[...],
                 preferred_element_type=jnp.float32) + b2_ref[...]
    y2 = jnp.maximum(z2, 0.01 * z2)                       # (H*W, Cmid_p) f32

    # conv2's pad=1 halo is the constant leaky((b2+an2_bias)*exp(logs)) row:
    # fill the whole canvas with it, then drop the interior block at (1, 1).
    y2c_ref[...] = jnp.broadcast_to(halo_ref[...].reshape(1, 1, cmid_p),
                                    (Hc, Wc, cmid_p))
    y2c_ref[1:1 + H, 1:1 + W, :] = y2.reshape(H, W, cmid_p)

    # ---- conv3 (3x3, pad=0): accumulate the 9 taps directly into the ----
    # ---- VMEM-resident f32 output block (no live register accumulator) ----
    o_ref[0] = jnp.broadcast_to(b3_ref[...], (hw, cout_p))
    for t in range(9):
        di, dj = t // 3, t % 3
        ys = y2c_ref[di:di + H, dj:dj + W, :].reshape(hw, cmid_p)
        o_ref[0] += jnp.dot(ys.astype(mm), w3_ref[t],
                            preferred_element_type=jnp.float32)


# -------------------------------- wrapper ---------------------------------- #

def nn_forward(x_nchw, params):
    N, Cin, H, W = x_nchw.shape
    Cmid = params["w1"].shape[0]
    Cout = params["w3"].shape[0]
    if (H * W) % 8 != 0:
        raise ValueError("H*W must be a multiple of 8 for this kernel")

    cmid_p = _round_up(Cmid, 128)
    cout_p = _round_up(Cout, 128)
    k1p = _round_up(9 * Cin, 128)          # stacked K for conv1 (taps x Cin)

    Hc = H + 2                             # conv2 (1x1, pad=1) output height
    Wc = _round_up(W + 2, 8)               # canvas width, sublane aligned
    HW = H * W

    # ---- fold ActNorm / exp(3*logs) scales into conv weights & biases ----
    s1 = jnp.exp(params["an1_logs"])
    s2 = jnp.exp(params["an2_logs"])
    s3 = jnp.exp(params["logs3"] * 3.0)
    b1 = (params["b1"] + params["an1_bias"]) * s1
    b2 = (params["b2"] + params["an2_bias"]) * s2
    b3 = params["b3"] * s3
    halo = jnp.maximum(b2, 0.01 * b2)      # conv2's zero-pad border, post-leaky

    # conv1: (Cmid,Cin,3,3) -> stacked (9*Cin, Cmid); tap-major, channel-minor.
    w1 = jnp.transpose(params["w1"] * s1[:, None, None, None],
                       (2, 3, 1, 0)).reshape(9 * Cin, Cmid)
    w1 = jnp.pad(w1, ((0, k1p - 9 * Cin), (0, cmid_p - Cmid))).astype(jnp.bfloat16)
    # conv2: (Cmid,Cmid,1,1) -> (Cin_mid, Cout_mid)
    w2 = jnp.transpose(params["w2"][:, :, 0, 0] * s2[:, None], (1, 0))
    w2 = jnp.pad(w2, ((0, cmid_p - Cmid), (0, cmid_p - Cmid))).astype(jnp.bfloat16)
    # conv3: (Cout,Cmid,3,3) -> (9, Cmid, Cout)
    w3 = jnp.transpose(params["w3"] * s3[:, None, None, None],
                       (2, 3, 1, 0)).reshape(9, Cmid, Cout)
    w3 = jnp.pad(w3, ((0, 0), (0, cmid_p - Cmid),
                      (0, cout_p - Cout))).astype(jnp.bfloat16)

    b1 = jnp.pad(b1, (0, cmid_p - Cmid)).reshape(1, cmid_p).astype(jnp.float32)
    b2 = jnp.pad(b2, (0, cmid_p - Cmid)).reshape(1, cmid_p).astype(jnp.float32)
    halo = jnp.pad(halo, (0, cmid_p - Cmid)).reshape(1, cmid_p).astype(jnp.float32)
    b3 = jnp.pad(b3, (0, cout_p - Cout)).reshape(1, cout_p).astype(jnp.float32)

    # ---- conv1 im2col in the wrapper: (N, H*W, 9*Cin) bf16 patches ----
    x = jnp.transpose(x_nchw, (0, 2, 3, 1))                       # NHWC
    xpad = jnp.pad(x, ((0, 0), (1, 1), (1, 1), (0, 0)))           # conv1 pad=1
    taps = [xpad[:, di:di + H, dj:dj + W, :]
            for di in range(3) for dj in range(3)]
    patches = jnp.stack(taps, axis=3).reshape(N, HW, 9 * Cin)
    patches = jnp.pad(patches, ((0, 0), (0, 0), (0, k1p - 9 * Cin)))
    patches = patches.astype(jnp.bfloat16)

    kernel = functools.partial(_nn_fused_kernel, H=H, W=W, Hc=Hc, Wc=Wc)
    out = pl.pallas_call(
        kernel,
        out_shape=jax.ShapeDtypeStruct((N, HW, cout_p), jnp.float32),
        grid_spec=pltpu.PrefetchScalarGridSpec(
            num_scalar_prefetch=0,
            grid=(N,),                     # one image per step; N=2 -> both v7x TCs
            in_specs=[
                pl.BlockSpec((1, HW, k1p), lambda n: (n, 0, 0)),
                pl.BlockSpec((k1p, cmid_p), lambda n: (0, 0)),
                pl.BlockSpec((cmid_p, cmid_p), lambda n: (0, 0)),
                pl.BlockSpec((9, cmid_p, cout_p), lambda n: (0, 0, 0)),
                pl.BlockSpec((1, cmid_p), lambda n: (0, 0)),
                pl.BlockSpec((1, cmid_p), lambda n: (0, 0)),
                pl.BlockSpec((1, cmid_p), lambda n: (0, 0)),
                pl.BlockSpec((1, cout_p), lambda n: (0, 0)),
            ],
            out_specs=pl.BlockSpec((1, HW, cout_p), lambda n: (n, 0, 0)),
            scratch_shapes=[pltpu.VMEM((Hc, Wc, cmid_p), jnp.float32)],
        ),
        compiler_params=pltpu.CompilerParams(
            dimension_semantics=("parallel",)),
    )(patches, w1, w2, w3, b1, b2, halo, b3)

    out = out[:, :, :Cout].reshape(N, H, W, Cout)
    return jnp.transpose(out, (0, 3, 1, 2))               # NHWC -> NCHW


# ------------------------- pure-JAX reference (f32) ------------------------ #

def nn_reference(x, params):
    def leaky(v):
        return jnp.where(v >= 0, v, 0.01 * v)

    def conv(v, w, b, pad):
        y = lax.conv_general_dilated(v, w, (1, 1), ((pad, pad), (pad, pad)),
                                     dimension_numbers=("NCHW", "OIHW", "NCHW"))
        return y + b[None, :, None, None]

    s1 = jnp.exp(params["an1_logs"])[None, :, None, None]
    s2 = jnp.exp(params["an2_logs"])[None, :, None, None]
    y = leaky((conv(x, params["w1"], params["b1"], 1)
               + params["an1_bias"][None, :, None, None]) * s1)
    y = leaky((conv(y, params["w2"], params["b2"], 1)
               + params["an2_bias"][None, :, None, None]) * s2)
    y = conv(y, params["w3"], params["b3"], 0)
    return y * jnp.exp(params["logs3"] * 3.0)[None, :, None, None]


def init_params(key, in_dim, mid_dim, out_dim):
    k1, k2 = jax.random.split(key, 2)
    return {
        # conv1: weight ~ N(0, 0.05), bias zero, ActNorm params zero
        "w1": 0.05 * jax.random.normal(k1, (mid_dim, in_dim, 3, 3), jnp.float32),
        "b1": jnp.zeros((mid_dim,), jnp.float32),
        "an1_bias": jnp.zeros((mid_dim,), jnp.float32),
        "an1_logs": jnp.zeros((mid_dim,), jnp.float32),
        # conv2 (1x1, padding=1)
        "w2": 0.05 * jax.random.normal(k2, (mid_dim, mid_dim, 1, 1), jnp.float32),
        "b2": jnp.zeros((mid_dim,), jnp.float32),
        "an2_bias": jnp.zeros((mid_dim,), jnp.float32),
        "an2_logs": jnp.zeros((mid_dim,), jnp.float32),
        # conv3 (last layer): zero-initialized weight/bias/logs
        "w3": jnp.zeros((out_dim, mid_dim, 3, 3), jnp.float32),
        "b3": jnp.zeros((out_dim,), jnp.float32),
        "logs3": jnp.zeros((out_dim,), jnp.float32),
    }


if __name__ == "__main__":
    key = jax.random.PRNGKey(0)
    kp, kx, kt = jax.random.split(key, 3)

    N, in_dim, mid_dim, out_dim, H, W = 2, 4, 8, 4, 16, 16
    x = jax.random.normal(kx, (N, in_dim, H, W), jnp.float32)
    params = init_params(kp, in_dim, mid_dim, out_dim)

    # The module zero-inits conv3/logs3 (output would be exactly zero), so also
    # exercise the conv3 / ActNorm-folding paths with non-zero values.
    ks = jax.random.split(kt, 6)
    params_t = dict(params)
    params_t["w3"] = 0.05 * jax.random.normal(ks[0], params["w3"].shape, jnp.float32)
    params_t["b3"] = 0.02 * jax.random.normal(ks[1], params["b3"].shape, jnp.float32)
    params_t["logs3"] = 0.1 * jax.random.normal(ks[2], params["logs3"].shape, jnp.float32)
    params_t["an1_bias"] = 0.1 * jax.random.normal(ks[3], params["an1_bias"].shape, jnp.float32)
    params_t["an2_bias"] = 0.1 * jax.random.normal(ks[4], params["an2_bias"].shape, jnp.float32)
    params_t["an1_logs"] = 0.1 * jax.random.normal(ks[5], params["an1_logs"].shape, jnp.float32)

    fwd = jax.jit(nn_forward)
    out = jax.block_until_ready(fwd(x, params_t))
    assert out.shape == (N, out_dim, H, W), out.shape
    ref = nn_reference(x, params_t)
    err = float(jnp.max(jnp.abs(out - ref)))
    assert err < 5e-3, f"max abs error vs reference: {err}"

    out0 = jax.block_until_ready(fwd(x, params))     # true zero-init module
    assert out0.shape == (N, out_dim, H, W), out0.shape
    assert float(jnp.max(jnp.abs(out0))) < 1e-6      # zero-init conv3 -> zero

    print("KERNEL_OK")
</pallas_src>

<mosaic_0001>
module attributes {stable_mosaic.version = 11 : i64} {
  func.func @_nn_fused_kernel(%arg0: i32, %arg1: memref<1x256x128xbf16, #tpu.memory_space<vmem>>, %arg2: memref<128x128xbf16, #tpu.memory_space<vmem>>, %arg3: memref<128x128xbf16, #tpu.memory_space<vmem>>, %arg4: memref<9x128x128xbf16, #tpu.memory_space<vmem>>, %arg5: memref<1x128xf32, #tpu.memory_space<vmem>>, %arg6: memref<1x128xf32, #tpu.memory_space<vmem>>, %arg7: memref<1x128xf32, #tpu.memory_space<vmem>>, %arg8: memref<1x128xf32, #tpu.memory_space<vmem>>, %arg9: memref<1x256x128xf32, #tpu.memory_space<vmem>>, %arg10: memref<18x24x128xf32, #tpu.memory_space<vmem>>) attributes {dimension_semantics = [#tpu.dimension_semantics<parallel>], iteration_bounds = array<i64: 2>, scalar_prefetch = 0 : i64, scratch_operands = 1 : i64, tpu.core_type = #tpu.core_type<tc>, window_params = [{transform_indices = @transform_0, window_bounds = array<i64: 1, 256, 128>}, {pipeline_mode = #tpu.pipeline_mode<synchronous>, transform_indices = @transform_1, window_bounds = array<i64: 128, 128>}, {pipeline_mode = #tpu.pipeline_mode<synchronous>, transform_indices = @transform_2, window_bounds = array<i64: 128, 128>}, {pipeline_mode = #tpu.pipeline_mode<synchronous>, transform_indices = @transform_3, window_bounds = array<i64: 9, 128, 128>}, {pipeline_mode = #tpu.pipeline_mode<synchronous>, transform_indices = @transform_4, window_bounds = array<i64: 1, 128>}, {pipeline_mode = #tpu.pipeline_mode<synchronous>, transform_indices = @transform_5, window_bounds = array<i64: 1, 128>}, {pipeline_mode = #tpu.pipeline_mode<synchronous>, transform_indices = @transform_6, window_bounds = array<i64: 1, 128>}, {pipeline_mode = #tpu.pipeline_mode<synchronous>, transform_indices = @transform_7, window_bounds = array<i64: 1, 128>}, {transform_indices = @transform_8, window_bounds = array<i64: 1, 256, 128>}]} {
    %c0 = arith.constant 0 : index
    %c0_0 = arith.constant 0 : index
    %c0_1 = arith.constant 0 : index
    %0 = vector.load %arg1[%c0, %c0_0, %c0_1] : memref<1x256x128xbf16, #tpu.memory_space<vmem>>, vector<1x256x128xbf16>
    %1 = vector.shape_cast %0 : vector<1x256x128xbf16> to vector<256x128xbf16>
    %c0_2 = arith.constant 0 : index
    %c0_3 = arith.constant 0 : index
    %2 = vector.load %arg2[%c0_2, %c0_3] : memref<128x128xbf16, #tpu.memory_space<vmem>>, vector<128x128xbf16>
    %cst = arith.constant dense<0.000000e+00> : vector<256x128xf32>
    %3 = tpu.matmul %1, %2, %cst {dimension_numbers = #tpu.dot_dimension_numbers<[1], [0], [0], [1], [0, 0, 1, 1], [], []>} : vector<256x128xbf16>, vector<128x128xbf16>, vector<256x128xf32> -> vector<256x128xf32>
    %c0_4 = arith.constant 0 : index
    %c0_5 = arith.constant 0 : index
    %4 = vector.load %arg5[%c0_4, %c0_5] : memref<1x128xf32, #tpu.memory_space<vmem>>, vector<1x128xf32>
    %5 = vector.broadcast %4 : vector<1x128xf32> to vector<256x128xf32>
    %6 = arith.addf %3, %5 : vector<256x128xf32>
    %cst_6 = arith.constant 0.00999999977 : f32
    %7 = vector.broadcast %cst_6 : f32 to vector<256x128xf32>
    %8 = arith.mulf %7, %6 : vector<256x128xf32>
    %9 = arith.maximumf %6, %8 : vector<256x128xf32>
    %10 = arith.truncf %9 : vector<256x128xf32> to vector<256x128xbf16>
    %c0_7 = arith.constant 0 : index
    %c0_8 = arith.constant 0 : index
    %11 = vector.load %arg3[%c0_7, %c0_8] : memref<128x128xbf16, #tpu.memory_space<vmem>>, vector<128x128xbf16>
    %cst_9 = arith.constant dense<0.000000e+00> : vector<256x128xf32>
    %12 = tpu.matmul %10, %11, %cst_9 {dimension_numbers = #tpu.dot_dimension_numbers<[1], [0], [0], [1], [0, 0, 1, 1], [], []>} : vector<256x128xbf16>, vector<128x128xbf16>, vector<256x128xf32> -> vector<256x128xf32>
    %c0_10 = arith.constant 0 : index
    %c0_11 = arith.constant 0 : index
    %13 = vector.load %arg6[%c0_10, %c0_11] : memref<1x128xf32, #tpu.memory_space<vmem>>, vector<1x128xf32>
    %14 = vector.broadcast %13 : vector<1x128xf32> to vector<256x128xf32>
    %15 = arith.addf %12, %14 : vector<256x128xf32>
    %cst_12 = arith.constant 0.00999999977 : f32
    %16 = vector.broadcast %cst_12 : f32 to vector<256x128xf32>
    %17 = arith.mulf %16, %15 : vector<256x128xf32>
    %18 = arith.maximumf %15, %17 : vector<256x128xf32>
    %c0_13 = arith.constant 0 : index
    %c0_14 = arith.constant 0 : index
    %19 = vector.load %arg7[%c0_13, %c0_14] : memref<1x128xf32, #tpu.memory_space<vmem>>, vector<1x128xf32>
    %20 = vector.shape_cast %19 : vector<1x128xf32> to vector<1x1x128xf32>
    %21 = vector.shape_cast %20 : vector<1x1x128xf32> to vector<1x1x128xf32>
    %22 = vector.broadcast %21 : vector<1x1x128xf32> to vector<18x24x128xf32>
    %c0_15 = arith.constant 0 : index
    %c0_16 = arith.constant 0 : index
    %c0_17 = arith.constant 0 : index
    %23 = vector.load %arg10[%c0_15, %c0_16, %c0_17] : memref<18x24x128xf32, #tpu.memory_space<vmem>>, vector<18x24x128xf32>
    tpu.vector_store %arg10[%c0_15, %c0_16, %c0_17], %22 {strides = array<i32>} : memref<18x24x128xf32, #tpu.memory_space<vmem>>, vector<18x24x128xf32>,
    %24 = vector.shape_cast %18 : vector<256x128xf32> to vector<16x16x128xf32>
    %c1 = arith.constant 1 : index
    %c1_18 = arith.constant 1 : index
    %c0_19 = arith.constant 0 : index
    %25 = vector.load %arg10[%c1, %c1_18, %c0_19] : memref<18x24x128xf32, #tpu.memory_space<vmem>>, vector<16x16x128xf32>
    tpu.vector_store %arg10[%c1, %c1_18, %c0_19], %24 {strides = array<i32>} : memref<18x24x128xf32, #tpu.memory_space<vmem>>, vector<16x16x128xf32>,
    %c0_20 = arith.constant 0 : index
    %c0_21 = arith.constant 0 : index
    %26 = vector.load %arg8[%c0_20, %c0_21] : memref<1x128xf32, #tpu.memory_space<vmem>>, vector<1x128xf32>
    %27 = vector.shape_cast %26 : vector<1x128xf32> to vector<1x128xf32>
    %28 = vector.broadcast %27 : vector<1x128xf32> to vector<256x128xf32>
    %c0_22 = arith.constant 0 : index
    %c0_23 = arith.constant 0 : index
    %c0_24 = arith.constant 0 : index
    %29 = vector.load %arg9[%c0_22, %c0_23, %c0_24] : memref<1x256x128xf32, #tpu.memory_space<vmem>>, vector<1x256x128xf32>
    %30 = vector.shape_cast %29 : vector<1x256x128xf32> to vector<256x128xf32>
    %31 = vector.shape_cast %28 : vector<256x128xf32> to vector<1x256x128xf32>
    tpu.vector_store %arg9[%c0_22, %c0_23, %c0_24], %31 {strides = array<i32>} : memref<1x256x128xf32, #tpu.memory_space<vmem>>, vector<1x256x128xf32>,
    %c0_25 = arith.constant 0 : index
    %c0_26 = arith.constant 0 : index
    %c0_27 = arith.constant 0 : index
    %32 = vector.load %arg10[%c0_25, %c0_26, %c0_27] : memref<18x24x128xf32, #tpu.memory_space<vmem>>, vector<16x16x128xf32>
    %33 = vector.shape_cast %32 : vector<16x16x128xf32> to vector<256x128xf32>
    %c0_28 = arith.constant 0 : index
    %c0_29 = arith.constant 0 : index
    %c0_30 = arith.constant 0 : index
    %34 = vector.load %arg9[%c0_28, %c0_29, %c0_30] : memref<1x256x128xf32, #tpu.memory_space<vmem>>, vector<1x256x128xf32>
    %35 = vector.shape_cast %34 : vector<1x256x128xf32> to vector<256x128xf32>
    %36 = arith.truncf %33 : vector<256x128xf32> to vector<256x128xbf16>
    %c0_31 = arith.constant 0 : index
    %c0_32 = arith.constant 0 : index
    %c0_33 = arith.constant 0 : index
    %37 = vector.load %arg4[%c0_31, %c0_32, %c0_33] : memref<9x128x128xbf16, #tpu.memory_space<vmem>>, vector<1x128x128xbf16>
    %38 = vector.shape_cast %37 : vector<1x128x128xbf16> to vector<128x128xbf16>
    %cst_34 = arith.constant dense<0.000000e+00> : vector<256x128xf32>
    %39 = tpu.matmul %36, %38, %cst_34 {dimension_numbers = #tpu.dot_dimension_numbers<[1], [0], [0], [1], [0, 0, 1, 1], [], []>} : vector<256x128xbf16>, vector<128x128xbf16>, vector<256x128xf32> -> vector<256x128xf32>
    %40 = arith.addf %35, %39 : vector<256x128xf32>
    %c0_35 = arith.constant 0 : index
    %c0_36 = arith.constant 0 : index
    %c0_37 = arith.constant 0 : index
    %41 = vector.load %arg9[%c0_35, %c0_36, %c0_37] : memref<1x256x128xf32, #tpu.memory_space<vmem>>, vector<1x256x128xf32>
    %42 = vector.shape_cast %41 : vector<1x256x128xf32> to vector<256x128xf32>
    %43 = vector.shape_cast %40 : vector<256x128xf32> to vector<1x256x128xf32>
    tpu.vector_store %arg9[%c0_35, %c0_36, %c0_37], %43 {strides = array<i32>} : memref<1x256x128xf32, #tpu.memory_space<vmem>>, vector<1x256x128xf32>,
    %c0_38 = arith.constant 0 : index
    %c1_39 = arith.constant 1 : index
    %c0_40 = arith.constant 0 : index
    %44 = vector.load %arg10[%c0_38, %c1_39, %c0_40] : memref<18x24x128xf32, #tpu.memory_space<vmem>>, vector<16x16x128xf32>
    %45 = vector.shape_cast %44 : vector<16x16x128xf32> to vector<256x128xf32>
    %c0_41 = arith.constant 0 : index
    %c0_42 = arith.constant 0 : index
    %c0_43 = arith.constant 0 : index
    %46 = vector.load %arg9[%c0_41, %c0_42, %c0_43] : memref<1x256x128xf32, #tpu.memory_space<vmem>>, vector<1x256x128xf32>
    %47 = vector.shape_cast %46 : vector<1x256x128xf32> to vector<256x128xf32>
    %48 = arith.truncf %45 : vector<256x128xf32> to vector<256x128xbf16>
    %c1_44 = arith.constant 1 : index
    %c0_45 = arith.constant 0 : index
    %c0_46 = arith.constant 0 : index
    %49 = vector.load %arg4[%c1_44, %c0_45, %c0_46] : memref<9x128x128xbf16, #tpu.memory_space<vmem>>, vector<1x128x128xbf16>
    %50 = vector.shape_cast %49 : vector<1x128x128xbf16> to vector<128x128xbf16>
    %cst_47 = arith.constant dense<0.000000e+00> : vector<256x128xf32>
    %51 = tpu.matmul %48, %50, %cst_47 {dimension_numbers = #tpu.dot_dimension_numbers<[1], [0], [0], [1], [0, 0, 1, 1], [], []>} : vector<256x128xbf16>, vector<128x128xbf16>, vector<256x128xf32> -> vector<256x128xf32>
    %52 = arith.addf %47, %51 : vector<256x128xf32>
    %c0_48 = arith.constant 0 : index
    %c0_49 = arith.constant 0 : index
    %c0_50 = arith.constant 0 : index
    %53 = vector.load %arg9[%c0_48, %c0_49, %c0_50] : memref<1x256x128xf32, #tpu.memory_space<vmem>>, vector<1x256x128xf32>
    %54 = vector.shape_cast %53 : vector<1x256x128xf32> to vector<256x128xf32>
    %55 = vector.shape_cast %52 : vector<256x128xf32> to vector<1x256x128xf32>
    tpu.vector_store %arg9[%c0_48, %c0_49, %c0_50], %55 {strides = array<i32>} : memref<1x256x128xf32, #tpu.memory_space<vmem>>, vector<1x256x128xf32>,
    %c0_51 = arith.constant 0 : index
    %c2 = arith.constant 2 : index
    %c0_52 = arith.constant 0 : index
    %56 = vector.load %arg10[%c0_51, %c2, %c0_52] : memref<18x24x128xf32, #tpu.memory_space<vmem>>, vector<16x16x128xf32>
    %57 = vector.shape_cast %56 : vector<16x16x128xf32> to vector<256x128xf32>
    %c0_53 = arith.constant 0 : index
    %c0_54 = arith.constant 0 : index
    %c0_55 = arith.constant 0 : index
    %58 = vector.load %arg9[%c0_53, %c0_54, %c0_55] : memref<1x256x128xf32, #tpu.memory_space<vmem>>, vector<1x256x128xf32>
    %59 = vector.shape_cast %58 : vector<1x256x128xf32> to vector<256x128xf32>
    %60 = arith.truncf %57 : vector<256x128xf32> to vector<256x128xbf16>
    %c2_56 = arith.constant 2 : index
    %c0_57 = arith.constant 0 : index
    %c0_58 = arith.constant 0 : index
    %61 = vector.load %arg4[%c2_56, %c0_57, %c0_58] : memref<9x128x128xbf16, #tpu.memory_space<vmem>>, vector<1x128x128xbf16>
    %62 = vector.shape_cast %61 : vector<1x128x128xbf16> to vector<128x128xbf16>
    %cst_59 = arith.constant dense<0.000000e+00> : vector<256x128xf32>
    %63 = tpu.matmul %60, %62, %cst_59 {dimension_numbers = #tpu.dot_dimension_numbers<[1], [0], [0], [1], [0, 0, 1, 1], [], []>} : vector<256x128xbf16>, vector<128x128xbf16>, vector<256x128xf32> -> vector<256x128xf32>
    %64 = arith.addf %59, %63 : vector<256x128xf32>
    %c0_60 = arith.constant 0 : index
    %c0_61 = arith.constant 0 : index
    %c0_62 = arith.constant 0 : index
    %65 = vector.load %arg9[%c0_60, %c0_61, %c0_62] : memref<1x256x128xf32, #tpu.memory_space<vmem>>, vector<1x256x128xf32>
    %66 = vector.shape_cast %65 : vector<1x256x128xf32> to vector<256x128xf32>
    %67 = vector.shape_cast %64 : vector<256x128xf32> to vector<1x256x128xf32>
    tpu.vector_store %arg9[%c0_60, %c0_61, %c0_62], %67 {strides = array<i32>} : memref<1x256x128xf32, #tpu.memory_space<vmem>>, vector<1x256x128xf32>,
    %c1_63 = arith.constant 1 : index
    %c0_64 = arith.constant 0 : index
    %c0_65 = arith.constant 0 : index
    %68 = vector.load %arg10[%c1_63, %c0_64, %c0_65] : memref<18x24x128xf32, #tpu.memory_space<vmem>>, vector<16x16x128xf32>
    %69 = vector.shape_cast %68 : vector<16x16x128xf32> to vector<256x128xf32>
    %c0_66 = arith.constant 0 : index
    %c0_67 = arith.constant 0 : index
    %c0_68 = arith.constant 0 : index
    %70 = vector.load %arg9[%c0_66, %c0_67, %c0_68] : memref<1x256x128xf32, #tpu.memory_space<vmem>>, vector<1x256x128xf32>
    %71 = vector.shape_cast %70 : vector<1x256x128xf32> to vector<256x128xf32>
    %72 = arith.truncf %69 : vector<256x128xf32> to vector<256x128xbf16>
    %c3 = arith.constant 3 : index
    %c0_69 = arith.constant 0 : index
    %c0_70 = arith.constant 0 : index
    %73 = vector.load %arg4[%c3, %c0_69, %c0_70] : memref<9x128x128xbf16, #tpu.memory_space<vmem>>, vector<1x128x128xbf16>
    %74 = vector.shape_cast %73 : vector<1x128x128xbf16> to vector<128x128xbf16>
    %cst_71 = arith.constant dense<0.000000e+00> : vector<256x128xf32>
    %75 = tpu.matmul %72, %74, %cst_71 {dimension_numbers = #tpu.dot_dimension_numbers<[1], [0], [0], [1], [0, 0, 1, 1], [], []>} : vector<256x128xbf16>, vector<128x128xbf16>, vector<256x128xf32> -> vector<256x128xf32>
    %76 = arith.addf %71, %75 : vector<256x128xf32>
    %c0_72 = arith.constant 0 : index
    %c0_73 = arith.constant 0 : index
    %c0_74 = arith.constant 0 : index
    %77 = vector.load %arg9[%c0_72, %c0_73, %c0_74] : memref<1x256x128xf32, #tpu.memory_space<vmem>>, vector<1x256x128xf32>
    %78 = vector.shape_cast %77 : vector<1x256x128xf32> to vector<256x128xf32>
    %79 = vector.shape_cast %76 : vector<256x128xf32> to vector<1x256x128xf32>
    tpu.vector_store %arg9[%c0_72, %c0_73, %c0_74], %79 {strides = array<i32>} : memref<1x256x128xf32, #tpu.memory_space<vmem>>, vector<1x256x128xf32>,
    %c1_75 = arith.constant 1 : index
    %c1_76 = arith.constant 1 : index
    %c0_77 = arith.constant 0 : index
    %80 = vector.load %arg10[%c1_75, %c1_76, %c0_77] : memref<18x24x128xf32, #tpu.memory_space<vmem>>, vector<16x16x128xf32>
    %81 = vector.shape_cast %80 : vector<16x16x128xf32> to vector<256x128xf32>
    %c0_78 = arith.constant 0 : index
    %c0_79 = arith.constant 0 : index
    %c0_80 = arith.constant 0 : index
    %82 = vector.load %arg9[%c0_78, %c0_79, %c0_80] : memref<1x256x128xf32, #tpu.memory_space<vmem>>, vector<1x256x128xf32>
    %83 = vector.shape_cast %82 : vector<1x256x128xf32> to vector<256x128xf32>
    %84 = arith.truncf %81 : vector<256x128xf32> to vector<256x128xbf16>
    %c4 = arith.constant 4 : index
    %c0_81 = arith.constant 0 : index
    %c0_82 = arith.constant 0 : index
    %85 = vector.load %arg4[%c4, %c0_81, %c0_82] : memref<9x128x128xbf16, #tpu.memory_space<vmem>>, vector<1x128x128xbf16>
    %86 = vector.shape_cast %85 : vector<1x128x128xbf16> to vector<128x128xbf16>
    %cst_83 = arith.constant dense<0.000000e+00> : vector<256x128xf32>
    %87 = tpu.matmul %84, %86, %cst_83 {dimension_numbers = #tpu.dot_dimension_numbers<[1], [0], [0], [1], [0, 0, 1, 1], [], []>} : vector<256x128xbf16>, vector<128x128xbf16>, vector<256x128xf32> -> vector<256x128xf32>
    %88 = arith.addf %83, %87 : vector<256x128xf32>
    %c0_84 = arith.constant 0 : index
    %c0_85 = arith.constant 0 : index
    %c0_86 = arith.constant 0 : index
    %89 = vector.load %arg9[%c0_84, %c0_85, %c0_86] : memref<1x256x128xf32, #tpu.memory_space<vmem>>, vector<1x256x128xf32>
    %90 = vector.shape_cast %89 : vector<1x256x128xf32> to vector<256x128xf32>
    %91 = vector.shape_cast %88 : vector<256x128xf32> to vector<1x256x128xf32>
    tpu.vector_store %arg9[%c0_84, %c0_85, %c0_86], %91 {strides = array<i32>} : memref<1x256x128xf32, #tpu.memory_space<vmem>>, vector<1x256x128xf32>,
    %c1_87 = arith.constant 1 : index
    %c2_88 = arith.constant 2 : index
    %c0_89 = arith.constant 0 : index
    %92 = vector.load %arg10[%c1_87, %c2_88, %c0_89] : memref<18x24x128xf32, #tpu.memory_space<vmem>>, vector<16x16x128xf32>
    %93 = vector.shape_cast %92 : vector<16x16x128xf32> to vector<256x128xf32>
    %c0_90 = arith.constant 0 : index
    %c0_91 = arith.constant 0 : index
    %c0_92 = arith.constant 0 : index
    %94 = vector.load %arg9[%c0_90, %c0_91, %c0_92] : memref<1x256x128xf32, #tpu.memory_space<vmem>>, vector<1x256x128xf32>
    %95 = vector.shape_cast %94 : vector<1x256x128xf32> to vector<256x128xf32>
    %96 = arith.truncf %93 : vector<256x128xf32> to vector<256x128xbf16>
    %c5 = arith.constant 5 : index
    %c0_93 = arith.constant 0 : index
    %c0_94 = arith.constant 0 : index
    %97 = vector.load %arg4[%c5, %c0_93, %c0_94] : memref<9x128x128xbf16, #tpu.memory_space<vmem>>, vector<1x128x128xbf16>
    %98 = vector.shape_cast %97 : vector<1x128x128xbf16> to vector<128x128xbf16>
    %cst_95 = arith.constant dense<0.000000e+00> : vector<256x128xf32>
    %99 = tpu.matmul %96, %98, %cst_95 {dimension_numbers = #tpu.dot_dimension_numbers<[1], [0], [0], [1], [0, 0, 1, 1], [], []>} : vector<256x128xbf16>, vector<128x128xbf16>, vector<256x128xf32> -> vector<256x128xf32>
    %100 = arith.addf %95, %99 : vector<256x128xf32>
    %c0_96 = arith.constant 0 : index
    %c0_97 = arith.constant 0 : index
    %c0_98 = arith.constant 0 : index
    %101 = vector.load %arg9[%c0_96, %c0_97, %c0_98] : memref<1x256x128xf32, #tpu.memory_space<vmem>>, vector<1x256x128xf32>
    %102 = vector.shape_cast %101 : vector<1x256x128xf32> to vector<256x128xf32>
    %103 = vector.shape_cast %100 : vector<256x128xf32> to vector<1x256x128xf32>
    tpu.vector_store %arg9[%c0_96, %c0_97, %c0_98], %103 {strides = array<i32>} : memref<1x256x128xf32, #tpu.memory_space<vmem>>, vector<1x256x128xf32>,
    %c2_99 = arith.constant 2 : index
    %c0_100 = arith.constant 0 : index
    %c0_101 = arith.constant 0 : index
    %104 = vector.load %arg10[%c2_99, %c0_100, %c0_101] : memref<18x24x128xf32, #tpu.memory_space<vmem>>, vector<16x16x128xf32>
    %105 = vector.shape_cast %104 : vector<16x16x128xf32> to vector<256x128xf32>
    %c0_102 = arith.constant 0 : index
    %c0_103 = arith.constant 0 : index
    %c0_104 = arith.constant 0 : index
    %106 = vector.load %arg9[%c0_102, %c0_103, %c0_104] : memref<1x256x128xf32, #tpu.memory_space<vmem>>, vector<1x256x128xf32>
    %107 = vector.shape_cast %106 : vector<1x256x128xf32> to vector<256x128xf32>
    %108 = arith.truncf %105 : vector<256x128xf32> to vector<256x128xbf16>
    %c6 = arith.constant 6 : index
    %c0_105 = arith.constant 0 : index
    %c0_106 = arith.constant 0 : index
    %109 = vector.load %arg4[%c6, %c0_105, %c0_106] : memref<9x128x128xbf16, #tpu.memory_space<vmem>>, vector<1x128x128xbf16>
    %110 = vector.shape_cast %109 : vector<1x128x128xbf16> to vector<128x128xbf16>
    %cst_107 = arith.constant dense<0.000000e+00> : vector<256x128xf32>
    %111 = tpu.matmul %108, %110, %cst_107 {dimension_numbers = #tpu.dot_dimension_numbers<[1], [0], [0], [1], [0, 0, 1, 1], [], []>} : vector<256x128xbf16>, vector<128x128xbf16>, vector<256x128xf32> -> vector<256x128xf32>
    %112 = arith.addf %107, %111 : vector<256x128xf32>
    %c0_108 = arith.constant 0 : index
    %c0_109 = arith.constant 0 : index
    %c0_110 = arith.constant 0 : index
    %113 = vector.load %arg9[%c0_108, %c0_109, %c0_110] : memref<1x256x128xf32, #tpu.memory_space<vmem>>, vector<1x256x128xf32>
    %114 = vector.shape_cast %113 : vector<1x256x128xf32> to vector<256x128xf32>
    %115 = vector.shape_cast %112 : vector<256x128xf32> to vector<1x256x128xf32>
    tpu.vector_store %arg9[%c0_108, %c0_109, %c0_110], %115 {strides = array<i32>} : memref<1x256x128xf32, #tpu.memory_space<vmem>>, vector<1x256x128xf32>,
    %c2_111 = arith.constant 2 : index
    %c1_112 = arith.constant 1 : index
    %c0_113 = arith.constant 0 : index
    %116 = vector.load %arg10[%c2_111, %c1_112, %c0_113] : memref<18x24x128xf32, #tpu.memory_space<vmem>>, vector<16x16x128xf32>
    %117 = vector.shape_cast %116 : vector<16x16x128xf32> to vector<256x128xf32>
    %c0_114 = arith.constant 0 : index
    %c0_115 = arith.constant 0 : index
    %c0_116 = arith.constant 0 : index
    %118 = vector.load %arg9[%c0_114, %c0_115, %c0_116] : memref<1x256x128xf32, #tpu.memory_space<vmem>>, vector<1x256x128xf32>
    %119 = vector.shape_cast %118 : vector<1x256x128xf32> to vector<256x128xf32>
    %120 = arith.truncf %117 : vector<256x128xf32> to vector<256x128xbf16>
    %c7 = arith.constant 7 : index
    %c0_117 = arith.constant 0 : index
    %c0_118 = arith.constant 0 : index
    %121 = vector.load %arg4[%c7, %c0_117, %c0_118] : memref<9x128x128xbf16, #tpu.memory_space<vmem>>, vector<1x128x128xbf16>
    %122 = vector.shape_cast %121 : vector<1x128x128xbf16> to vector<128x128xbf16>
    %cst_119 = arith.constant dense<0.000000e+00> : vector<256x128xf32>
    %123 = tpu.matmul %120, %122, %cst_119 {dimension_numbers = #tpu.dot_dimension_numbers<[1], [0], [0], [1], [0, 0, 1, 1], [], []>} : vector<256x128xbf16>, vector<128x128xbf16>, vector<256x128xf32> -> vector<256x128xf32>
    %124 = arith.addf %119, %123 : vector<256x128xf32>
    %c0_120 = arith.constant 0 : index
    %c0_121 = arith.constant 0 : index
    %c0_122 = arith.constant 0 : index
    %125 = vector.load %arg9[%c0_120, %c0_121, %c0_122] : memref<1x256x128xf32, #tpu.memory_space<vmem>>, vector<1x256x128xf32>
    %126 = vector.shape_cast %125 : vector<1x256x128xf32> to vector<256x128xf32>
    %127 = vector.shape_cast %124 : vector<256x128xf32> to vector<1x256x128xf32>
    tpu.vector_store %arg9[%c0_120, %c0_121, %c0_122], %127 {strides = array<i32>} : memref<1x256x128xf32, #tpu.memory_space<vmem>>, vector<1x256x128xf32>,
    %c2_123 = arith.constant 2 : index
    %c2_124 = arith.constant 2 : index
    %c0_125 = arith.constant 0 : index
    %128 = vector.load %arg10[%c2_123, %c2_124, %c0_125] : memref<18x24x128xf32, #tpu.memory_space<vmem>>, vector<16x16x128xf32>
    %129 = vector.shape_cast %128 : vector<16x16x128xf32> to vector<256x128xf32>
    %c0_126 = arith.constant 0 : index
    %c0_127 = arith.constant 0 : index
    %c0_128 = arith.constant 0 : index
    %130 = vector.load %arg9[%c0_126, %c0_127, %c0_128] : memref<1x256x128xf32, #tpu.memory_space<vmem>>, vector<1x256x128xf32>
    %131 = vector.shape_cast %130 : vector<1x256x128xf32> to vector<256x128xf32>
    %132 = arith.truncf %129 : vector<256x128xf32> to vector<256x128xbf16>
    %c8 = arith.constant 8 : index
    %c0_129 = arith.constant 0 : index
    %c0_130 = arith.constant 0 : index
    %133 = vector.load %arg4[%c8, %c0_129, %c0_130] : memref<9x128x128xbf16, #tpu.memory_space<vmem>>, vector<1x128x128xbf16>
    %134 = vector.shape_cast %133 : vector<1x128x128xbf16> to vector<128x128xbf16>
    %cst_131 = arith.constant dense<0.000000e+00> : vector<256x128xf32>
    %135 = tpu.matmul %132, %134, %cst_131 {dimension_numbers = #tpu.dot_dimension_numbers<[1], [0], [0], [1], [0, 0, 1, 1], [], []>} : vector<256x128xbf16>, vector<128x128xbf16>, vector<256x128xf32> -> vector<256x128xf32>
    %136 = arith.addf %131, %135 : vector<256x128xf32>
    %c0_132 = arith.constant 0 : index
    %c0_133 = arith.constant 0 : index
    %c0_134 = arith.constant 0 : index
    %137 = vector.load %arg9[%c0_132, %c0_133, %c0_134] : memref<1x256x128xf32, #tpu.memory_space<vmem>>, vector<1x256x128xf32>
    %138 = vector.shape_cast %137 : vector<1x256x128xf32> to vector<256x128xf32>
    %139 = vector.shape_cast %136 : vector<256x128xf32> to vector<1x256x128xf32>
    tpu.vector_store %arg9[%c0_132, %c0_133, %c0_134], %139 {strides = array<i32>} : memref<1x256x128xf32, #tpu.memory_space<vmem>>, vector<1x256x128xf32>,
    return
  }
  func.func @transform_0(%arg0: i32) -> (i32, i32, i32) {
    %c0_i32 = arith.constant 0 : i32
    %c0_i32_0 = arith.constant 0 : i32
    %c0_i32_1 = arith.constant 0 : i32
    return %arg0, %c0_i32, %c0_i32_0 : i32, i32, i32
  }
  func.func @transform_1(%arg0: i32) -> (i32, i32) {
    %c0_i32 = arith.constant 0 : i32
    %c0_i32_0 = arith.constant 0 : i32
    %c0_i32_1 = arith.constant 0 : i32
    return %c0_i32, %c0_i32_0 : i32, i32
  }
  func.func @transform_2(%arg0: i32) -> (i32, i32) {
    %c0_i32 = arith.constant 0 : i32
    %c0_i32_0 = arith.constant 0 : i32
    %c0_i32_1 = arith.constant 0 : i32
    return %c0_i32, %c0_i32_0 : i32, i32
  }
  func.func @transform_3(%arg0: i32) -> (i32, i32, i32) {
    %c0_i32 = arith.constant 0 : i32
    %c0_i32_0 = arith.constant 0 : i32
    %c0_i32_1 = arith.constant 0 : i32
    %c0_i32_2 = arith.constant 0 : i32
    return %c0_i32, %c0_i32_0, %c0_i32_1 : i32, i32, i32
  }
  func.func @transform_4(%arg0: i32) -> (i32, i32) {
    %c0_i32 = arith.constant 0 : i32
    %c0_i32_0 = arith.constant 0 : i32
    %c0_i32_1 = arith.constant 0 : i32
    return %c0_i32, %c0_i32_0 : i32, i32
  }
  func.func @transform_5(%arg0: i32) -> (i32, i32) {
    %c0_i32 = arith.constant 0 : i32
    %c0_i32_0 = arith.constant 0 : i32
    %c0_i32_1 = arith.constant 0 : i32
    return %c0_i32, %c0_i32_0 : i32, i32
  }
  func.func @transform_6(%arg0: i32) -> (i32, i32) {
    %c0_i32 = arith.constant 0 : i32
    %c0_i32_0 = arith.constant 0 : i32
    %c0_i32_1 = arith.constant 0 : i32
    return %c0_i32, %c0_i32_0 : i32, i32
  }
  func.func @transform_7(%arg0: i32) -> (i32, i32) {
    %c0_i32 = arith.constant 0 : i32
    %c0_i32_0 = arith.constant 0 : i32
    %c0_i32_1 = arith.constant 0 : i32
    return %c0_i32, %c0_i32_0 : i32, i32
  }
  func.func @transform_8(%arg0: i32) -> (i32, i32, i32) {
    %c0_i32 = arith.constant 0 : i32
    %c0_i32_0 = arith.constant 0 : i32
    %c0_i32_1 = arith.constant 0 : i32
    return %arg0, %c0_i32, %c0_i32_0 : i32, i32, i32
  }
}

</mosaic_0001>

<llo_original>
// kernel: nn_forward.1
$region0: #{nn_forward.1}
  #allocation0 [shape = 'u32[]', space=smem, size = 0x4, offset = 0x4, fixed_abs, tag = 'smem constant byte address 0x4 - core index']
  #allocation1 [shape = 'u32[144,128]{1,0:T(1,128)}', space=vmem, size = 0x12000, scoped, tag = 'internal scratch']
  #allocation2 [shape = 'f32[18,24,128]{2,1,0:T(8,128)}', space=vmem, size = 0x36000, scoped, tag = 'scratch operand']
  %s0 = inlined_call_operand.vmem [shape: bf16[2,256,128], index: 0, kind: input, shape index: {}]
  %s1 = inlined_call_operand.vmem [shape: bf16[128,128], index: 1, kind: input, shape index: {}]
  %s2 = inlined_call_operand.vmem [shape: bf16[128,128], index: 2, kind: input, shape index: {}]
  %s3 = inlined_call_operand.vmem [shape: bf16[9,128,128], index: 3, kind: input, shape index: {}]
  %s4 = inlined_call_operand.vmem [shape: f32[1,128], index: 4, kind: input, shape index: {}]
  %s5 = inlined_call_operand.vmem [shape: f32[1,128], index: 5, kind: input, shape index: {}]
  %s6 = inlined_call_operand.vmem [shape: f32[1,128], index: 6, kind: input, shape index: {}]
  %s7 = inlined_call_operand.vmem [shape: f32[1,128], index: 7, kind: input, shape index: {}]
  %s8 = inlined_call_operand.vmem [shape: f32[2,256,128], index: 8, kind: output, shape index: {}]
  %s9 = sld [smem:[#allocation0]]
  $region65: #{nn_forward.1} parent=0
    _
  %s11 = ssub.s32 1, %s9
  %s12 = scalar_select 0, %s11, %s9
  loop: start=0, step=1, limit=4
  $region2: #{nn_forward.1} parent=0 // loop_pre_header
    _
  $region3: #{nn_forward.1} parent=0 // loop_header
    %s14 = sphi 0, %s18
    %p15 = scmp.ge.s32.totalorder %s14, 4
    %s24 = sphi 0, %s26
    %s27 = sphi 0, %s24
    %s28 = sphi 0, %s27
    %s44 = sphi 0, %s28
    %s48 = sphi 0, %s48
    %s50 = sphi 0, %s48
    %s51 = sphi 0, %s50
    %s65 = sphi 0, %s51
    %s69 = sphi 0, %s69
    %s71 = sphi 0, %s69
    %s72 = sphi 0, %s71
    %s86 = sphi 0, %s72
    %s90 = sphi 0, %s90
    %s92 = sphi 0, %s90
    %s93 = sphi 0, %s92
    %s107 = sphi 0, %s93
    %s111 = sphi 0, %s111
    %s113 = sphi 0, %s111
    %s114 = sphi 0, %s113
    %s128 = sphi 0, %s114
    %s132 = sphi 0, %s132
    %s134 = sphi 0, %s132
    %s135 = sphi 0, %s134
    %s149 = sphi 0, %s135
    %s153 = sphi 0, %s153
    %s155 = sphi 0, %s153
    %s156 = sphi 0, %s155
    %s170 = sphi 0, %s156
    %s174 = sphi 0, %s174
    %s176 = sphi 0, %s174
    %s177 = sphi 0, %s176
    %s191 = sphi 0, %s177
    %s197 = sphi 0, %s199
    %s200 = sphi 0, %s197
    %s201 = sphi 0, %s200
    %s217 = sphi 0, %s201
  $region4: #{nn_forward.1} parent=0 // loop_header_branch
    %17 = sbr.rel (%p15) target = $region8
  $region5: #{nn_forward.1} parent=0 // loop_body
    %s19 = ssub.s32 %s14, 1
    %s20 = ssub.s32 %s14, 2
    %s21 = sadd.s32 %s14, 1
    %s22 = ssub.s32 %s14, %s21
    %p23 = scmp.eq.s32.totalorder %s22, 0
    %s25 = sadd.s32 %s24, 1
    %s26 = scalar_select %p23, %s24, %s25
    %p29 = pneg %p23
    %p30 = scmp.eq.s32.totalorder %s14, 1
    %p31 = por %p29, %p30
    %p32 = scmp.ne.s32.totalorder %s24, %s27
    %p33 = scmp.eq.s32.totalorder %s14, 0
    %p34 = por %p32, %p33
    %p35 = scmp.ne.s32.totalorder %s24, %s27
    %p36 = scmp.eq.s32.totalorder %s19, 1
    %p37 = por %p35, %p36
    %p38 = scmp.ne.s32.totalorder %s27, %s28
    %p39 = scmp.eq.s32.totalorder %s19, 0
    %p40 = por %p38, %p39
    %p41 = scmp.ne.s32.totalorder %s27, %s28
    %p42 = scmp.eq.s32.totalorder %s20, 1
    %p43 = por %p41, %p42
    %p45 = scmp.ne.s32.totalorder %s28, %s44
    %p46 = scmp.eq.s32.totalorder %s20, 0
    %p47 = por %p45, %p46
    %s49 = sadd.s32 %s48, 1
    %p52 = scmp.eq.s32.totalorder %s14, 1
    %p53 = scmp.ne.s32.totalorder %s48, %s50
    %p54 = scmp.eq.s32.totalorder %s14, 0
    %p55 = por %p53, %p54
    %p56 = scmp.ne.s32.totalorder %s48, %s50
    %p57 = scmp.eq.s32.totalorder %s19, 1
    %p58 = por %p56, %p57
    %p59 = scmp.ne.s32.totalorder %s50, %s51
    %p60 = scmp.eq.s32.totalorder %s19, 0
    %p61 = por %p59, %p60
    %p62 = scmp.ne.s32.totalorder %s50, %s51
    %p63 = scmp.eq.s32.totalorder %s20, 1
    %p64 = por %p62, %p63
    %p66 = scmp.ne.s32.totalorder %s51, %s65
    %p67 = scmp.eq.s32.totalorder %s20, 0
    %p68 = por %p66, %p67
    %s70 = sadd.s32 %s69, 1
    %p73 = scmp.eq.s32.totalorder %s14, 1
    %p74 = scmp.ne.s32.totalorder %s69, %s71
    %p75 = scmp.eq.s32.totalorder %s14, 0
    %p76 = por %p74, %p75
    %p77 = scmp.ne.s32.totalorder %s69, %s71
    %p78 = scmp.eq.s32.totalorder %s19, 1
    %p79 = por %p77, %p78
    %p80 = scmp.ne.s32.totalorder %s71, %s72
    %p81 = scmp.eq.s32.totalorder %s19, 0
    %p82 = por %p80, %p81
    %p83 = scmp.ne.s32.totalorder %s71, %s72
    %p84 = scmp.eq.s32.totalorder %s20, 1
    %p85 = por %p83, %p84
    %p87 = scmp.ne.s32.totalorder %s72, %s86
    %p88 = scmp.eq.s32.totalorder %s20, 0
    %p89 = por %p87, %p88
    %s91 = sadd.s32 %s90, 1
    %p94 = scmp.eq.s32.totalorder %s14, 1
    %p95 = scmp.ne.s32.totalorder %s90, %s92
    %p96 = scmp.eq.s32.totalorder %s14, 0
    %p97 = por %p95, %p96
    %p98 = scmp.ne.s32.totalorder %s90, %s92
    %p99 = scmp.eq.s32.totalorder %s19, 1
    %p100 = por %p98, %p99
    %p101 = scmp.ne.s32.totalorder %s92, %s93
    %p102 = scmp.eq.s32.totalorder %s19, 0
    %p103 = por %p101, %p102
    %p104 = scmp.ne.s32.totalorder %s92, %s93
    %p105 = scmp.eq.s32.totalorder %s20, 1
    %p106 = por %p104, %p105
    %p108 = scmp.ne.s32.totalorder %s93, %s107
    %p109 = scmp.eq.s32.totalorder %s20, 0
    %p110 = por %p108, %p109
    %s112 = sadd.s32 %s111, 1
    %p115 = scmp.eq.s32.totalorder %s14, 1
    %p116 = scmp.ne.s32.totalorder %s111, %s113
    %p117 = scmp.eq.s32.totalorder %s14, 0
    %p118 = por %p116, %p117
    %p119 = scmp.ne.s32.totalorder %s111, %s113
    %p120 = scmp.eq.s32.totalorder %s19, 1
    %p121 = por %p119, %p120
    %p122 = scmp.ne.s32.totalorder %s113, %s114
    %p123 = scmp.eq.s32.totalorder %s19, 0
    %p124 = por %p122, %p123
    %p125 = scmp.ne.s32.totalorder %s113, %s114
    %p126 = scmp.eq.s32.totalorder %s20, 1
    %p127 = por %p125, %p126
    %p129 = scmp.ne.s32.totalorder %s114, %s128
    %p130 = scmp.eq.s32.totalorder %s20, 0
    %p131 = por %p129, %p130
    %s133 = sadd.s32 %s132, 1
    %p136 = scmp.eq.s32.totalorder %s14, 1
    %p137 = scmp.ne.s32.totalorder %s132, %s134
    %p138 = scmp.eq.s32.totalorder %s14, 0
    %p139 = por %p137, %p138
    %p140 = scmp.ne.s32.totalorder %s132, %s134
    %p141 = scmp.eq.s32.totalorder %s19, 1
    %p142 = por %p140, %p141
    %p143 = scmp.ne.s32.totalorder %s134, %s135
    %p144 = scmp.eq.s32.totalorder %s19, 0
    %p145 = por %p143, %p144
    %p146 = scmp.ne.s32.totalorder %s134, %s135
    %p147 = scmp.eq.s32.totalorder %s20, 1
    %p148 = por %p146, %p147
    %p150 = scmp.ne.s32.totalorder %s135, %s149
    %p151 = scmp.eq.s32.totalorder %s20, 0
    %p152 = por %p150, %p151
    %s154 = sadd.s32 %s153, 1
    %p157 = scmp.eq.s32.totalorder %s14, 1
    %p158 = scmp.ne.s32.totalorder %s153, %s155
    %p159 = scmp.eq.s32.totalorder %s14, 0
    %p160 = por %p158, %p159
    %p161 = scmp.ne.s32.totalorder %s153, %s155
    %p162 = scmp.eq.s32.totalorder %s19, 1
    %p163 = por %p161, %p162
    %p164 = scmp.ne.s32.totalorder %s155, %s156
    %p165 = scmp.eq.s32.totalorder %s19, 0
    %p166 = por %p164, %p165
    %p167 = scmp.ne.s32.totalorder %s155, %s156
    %p168 = scmp.eq.s32.totalorder %s20, 1
    %p169 = por %p167, %p168
    %p171 = scmp.ne.s32.totalorder %s156, %s170
    %p172 = scmp.eq.s32.totalorder %s20, 0
    %p173 = por %p171, %p172
    %s175 = sadd.s32 %s174, 1
    %p178 = scmp.eq.s32.totalorder %s14, 1
    %p179 = scmp.ne.s32.totalorder %s174, %s176
    %p180 = scmp.eq.s32.totalorder %s14, 0
    %p181 = por %p179, %p180
    %p182 = scmp.ne.s32.totalorder %s174, %s176
    %p183 = scmp.eq.s32.totalorder %s19, 1
    %p184 = por %p182, %p183
    %p185 = scmp.ne.s32.totalorder %s176, %s177
    %p186 = scmp.eq.s32.totalorder %s19, 0
    %p187 = por %p185, %p186
    %p188 = scmp.ne.s32.totalorder %s176, %s177
    %p189 = scmp.eq.s32.totalorder %s20, 1
    %p190 = por %p188, %p189
    %p192 = scmp.ne.s32.totalorder %s177, %s191
    %p193 = scmp.eq.s32.totalorder %s20, 0
    %p194 = por %p192, %p193
    %s195 = ssub.s32 %s14, %s21
    %p196 = scmp.eq.s32.totalorder %s195, 0
    %s198 = sadd.s32 %s197, 1
    %s199 = scalar_select %p196, %s197, %s198
    %p202 = pneg %p196
    %p203 = scmp.eq.s32.totalorder %s14, 1
    %p204 = por %p202, %p203
    %p205 = scmp.ne.s32.totalorder %s197, %s200
    %p206 = scmp.eq.s32.totalorder %s14, 0
    %p207 = por %p205, %p206
    %p208 = scmp.ne.s32.totalorder %s197, %s200
    %p209 = scmp.eq.s32.totalorder %s19, 1
    %p210 = por %p208, %p209
    %p211 = scmp.ne.s32.totalorder %s200, %s201
    %p212 = scmp.eq.s32.totalorder %s19, 0
    %p213 = por %p211, %p212
    %p214 = scmp.ne.s32.totalorder %s200, %s201
    %p215 = scmp.eq.s32.totalorder %s20, 1
    %p216 = por %p214, %p215
    %p218 = scmp.ne.s32.totalorder %s201, %s217
    %p219 = scmp.eq.s32.totalorder %s20, 0
    %p220 = por %p218, %p219
    %p221 = scmp.le.s32.totalorder 1, %s14
    %p222 = scmp.lt.s32.totalorder %s14, 3
    %p223 = pnand %p221, %p222
    %p224 = pneg %p223
    // Predicated region
    $region9: #{nn_forward.1} parent=5 // pred_check
      _
    $region10: #{nn_forward.1} parent=5 // pred_check_branch
      %226 = sbr.rel (%p223) target = $region12
    $region11: #{nn_forward.1} parent=5 // pred_region
      %s227 = ssub.s32 %s14, 1
      // Predicated region
      $region13: #{nn_forward.1} parent=11 // pred_check
        %p228 = pneg %p61
      $region14: #{nn_forward.1} parent=11 // pred_check_branch
        %230 = sbr.rel (%p228) target = $region16
      $region15: #{nn_forward.1} parent=11 // pred_region
        _
      $region16: #{nn_forward.1} parent=11 // pred_fallthru
        _
      // Predicated region
      $region17: #{nn_forward.1} parent=11 // pred_check
        %p231 = pneg %p82
      $region18: #{nn_forward.1} parent=11 // pred_check_branch
        %233 = sbr.rel (%p231) target = $region20
      $region19: #{nn_forward.1} parent=11 // pred_region
        _
      $region20: #{nn_forward.1} parent=11 // pred_fallthru
        _
      // Predicated region
      $region21: #{nn_forward.1} parent=11 // pred_check
        %p234 = pneg %p103
      $region22: #{nn_forward.1} parent=11 // pred_check_branch
        %236 = sbr.rel (%p234) target = $region24
      $region23: #{nn_forward.1} parent=11 // pred_region
        _
      $region24: #{nn_forward.1} parent=11 // pred_fallthru
        _
      // Predicated region
      $region25: #{nn_forward.1} parent=11 // pred_check
        %p237 = pneg %p124
      $region26: #{nn_forward.1} parent=11 // pred_check_branch
        %239 = sbr.rel (%p237) target = $region28
      $region27: #{nn_forward.1} parent=11 // pred_region
        _
      $region28: #{nn_forward.1} parent=11 // pred_fallthru
        _
      // Predicated region
      $region29: #{nn_forward.1} parent=11 // pred_check
        %p240 = pneg %p145
      $region30: #{nn_forward.1} parent=11 // pred_check_branch
        %242 = sbr.rel (%p240) target = $region32
      $region31: #{nn_forward.1} parent=11 // pred_region
        _
      $region32: #{nn_forward.1} parent=11 // pred_fallthru
        _
      // Predicated region
      $region33: #{nn_forward.1} parent=11 // pred_check
        %p243 = pneg %p166
      $region34: #{nn_forward.1} parent=11 // pred_check_branch
        %245 = sbr.rel (%p243) target = $region36
      $region35: #{nn_forward.1} parent=11 // pred_region
        _
      $region36: #{nn_forward.1} parent=11 // pred_fallthru
        _
      // Predicated region
      $region37: #{nn_forward.1} parent=11 // pred_check
        %p246 = pneg %p187
      $region38: #{nn_forward.1} parent=11 // pred_check_branch
        %248 = sbr.rel (%p246) target = $region40
      $region39: #{nn_forward.1} parent=11 // pred_region
        _
      $region40: #{nn_forward.1} parent=11 // pred_fallthru
        _
    $region12: #{nn_forward.1} parent=5 // pred_fallthru
      _
    %p249 = scmp.lt.s32.totalorder %s14, 2
    // Predicated region
    $region41: #{nn_forward.1} parent=5 // pred_check
      %p250 = pneg %p249
    $region42: #{nn_forward.1} parent=5 // pred_check_branch
      %252 = sbr.rel (%p250) target = $region44
    $region43: #{nn_forward.1} parent=5 // pred_region
      // Predicated region
      $region45: #{nn_forward.1} parent=43 // pred_check
        %p253 = pneg %p34
      $region46: #{nn_forward.1} parent=43 // pred_check_branch
        %255 = sbr.rel (%p253) target = $region48
      $region47: #{nn_forward.1} parent=43 // pred_region
        %p256 = scmp.lt.s32.totalorder %s14, 1
        %s257 = scalar_select %p256, %s14, 1
        %s258 = smul.addr %s257, 32
        %s259 = smul.addr %s258, 4
        %s260 = scalar_lea.vmem %s0, %s259
      $region48: #{nn_forward.1} parent=43 // pred_fallthru
        _
    $region44: #{nn_forward.1} parent=5 // pred_fallthru
      _
    %p261 = scmp.le.s32.totalorder 1, %s14
    %p262 = scmp.lt.s32.totalorder %s14, 3
    %p263 = pnand %p261, %p262
    %p264 = pneg %p263
    // Predicated region
    $region49: #{nn_forward.1} parent=5 // pred_check
      _
    $region50: #{nn_forward.1} parent=5 // pred_check_branch
      %266 = sbr.rel (%p263) target = $region52
    $region51: #{nn_forward.1} parent=5 // pred_region
      %s267 = ssub.s32 %s14, 1
      %p268 = scmp.lt.s32.totalorder %s19, 1
      %s269 = scalar_select %p268, %s19, 1
      %s270 = smul.addr %s269, 32
      %s271 = smul.addr %s270, 4
      %s272 = scalar_lea.vmem %s0, %s271
      %p273 = pneg %p40
      %p274 = pneg %p37
      %p275 = pneg %p61
      %p276 = pneg %p58
      %p277 = pneg %p82
      %p278 = pneg %p79
      %p279 = pneg %p103
      %p280 = pneg %p100
      %p281 = pneg %p124
      %p282 = pneg %p121
      %p283 = pneg %p145
      %p284 = pneg %p142
      %p285 = pneg %p166
      %p286 = pneg %p163
      %p287 = pneg %p187
      %p288 = pneg %p184
      %p289 = pneg %p213
      %p290 = pneg %p210
      %p291 = scmp.lt.s32.totalorder %s19, 1
      %s292 = scalar_select %p291, %s19, 1
      %s293 = smul.addr %s292, 32
      %s294 = smul.addr %s293, 8
      %s295 = scalar_lea.vmem %s8, %s294
      %p296 = scmp.lt.s32.totalorder %s19, 1
      %s297 = scalar_select %p296, %s19, 1
      %s298 = smul.addr %s297, 32
      %s299 = smul.addr %s298, 4
      %s300 = scalar_lea.vmem %s0, %s299
      %p301 = scmp.lt.s32.totalorder %s19, 1
      %s302 = scalar_select %p301, %s19, 1
      %s303 = smul.addr %s302, 32
      %s304 = smul.addr %s303, 8
      %s305 = scalar_lea.vmem %s8, %s304
      %v307 = vld [vmem:[%s300] sm:$0xf]
      %v308 = vld [vmem:[%s300 + $0x4] sm:$0xf]
      %v309 = vld [vmem:[%s300 + $0x8] sm:$0xf]
      %v310 = vld [vmem:[%s300 + $0xc] sm:$0xf]
      %v311 = vld [vmem:[%s300 + $0x10] sm:$0xf]
      %v312 = vld [vmem:[%s300 + $0x14] sm:$0xf]
      %v313 = vld [vmem:[%s300 + $0x18] sm:$0xf]
      %v314 = vld [vmem:[%s300 + $0x1c] sm:$0xf]
      %v315 = vld [vmem:[%s300 + $0x20] sm:$0xf]
      %v316 = vld [vmem:[%s300 + $0x24] sm:$0xf]
      %v317 = vld [vmem:[%s300 + $0x28] sm:$0xf]
      %v318 = vld [vmem:[%s300 + $0x2c] sm:$0xf]
      %v319 = vld [vmem:[%s300 + $0x30] sm:$0xf]
      %v320 = vld [vmem:[%s300 + $0x34] sm:$0xf]
      %v321 = vld [vmem:[%s300 + $0x38] sm:$0xf]
      %v322 = vld [vmem:[%s300 + $0x3c] sm:$0xf]
      %v323 = vld [vmem:[%s300 + $0x40] sm:$0xf]
      %v324 = vld [vmem:[%s300 + $0x44] sm:$0xf]
      %v325 = vld [vmem:[%s300 + $0x48] sm:$0xf]
      %v326 = vld [vmem:[%s300 + $0x4c] sm:$0xf]
      %v327 = vld [vmem:[%s300 + $0x50] sm:$0xf]
      %v328 = vld [vmem:[%s300 + $0x54] sm:$0xf]
      %v329 = vld [vmem:[%s300 + $0x58] sm:$0xf]
      %v330 = vld [vmem:[%s300 + $0x5c] sm:$0xf]
      %v331 = vld [vmem:[%s300 + $0x60] sm:$0xf]
      %v332 = vld [vmem:[%s300 + $0x64] sm:$0xf]
      %v333 = vld [vmem:[%s300 + $0x68] sm:$0xf]
      %v334 = vld [vmem:[%s300 + $0x6c] sm:$0xf]
      %v335 = vld [vmem:[%s300 + $0x70] sm:$0xf]
      %v336 = vld [vmem:[%s300 + $0x74] sm:$0xf]
      %v337 = vld [vmem:[%s300 + $0x78] sm:$0xf]
      %v338 = vld [vmem:[%s300 + $0x7c] sm:$0xf]
      %v339 = vld [vmem:[%s1] sm:$0xf]
      %v340 = vld [vmem:[%s1 + $0x4] sm:$0xf]
      %v341 = vld [vmem:[%s1 + $0x8] sm:$0xf]
      %v342 = vld [vmem:[%s1 + $0xc] sm:$0xf]
      %v343 = vld [vmem:[%s1 + $0x10] sm:$0xf]
      %v344 = vld [vmem:[%s1 + $0x14] sm:$0xf]
      %v345 = vld [vmem:[%s1 + $0x18] sm:$0xf]
      %v346 = vld [vmem:[%s1 + $0x1c] sm:$0xf]
      %v347 = vld [vmem:[%s1 + $0x20] sm:$0xf]
      %v348 = vld [vmem:[%s1 + $0x24] sm:$0xf]
      %v349 = vld [vmem:[%s1 + $0x28] sm:$0xf]
      %v350 = vld [vmem:[%s1 + $0x2c] sm:$0xf]
      %v351 = vld [vmem:[%s1 + $0x30] sm:$0xf]
      %v352 = vld [vmem:[%s1 + $0x34] sm:$0xf]
      %v353 = vld [vmem:[%s1 + $0x38] sm:$0xf]
      %v354 = vld [vmem:[%s1 + $0x3c] sm:$0xf]
      %v355 = vld [vmem:[%s4] sm:$0x1]
      %v357 = vlaneseq
      %v358 = vshrl.u32 %v357, 7
      %v359 = vsub.s32 0, %v358
      %v360 = vrot.slane %v355, %v359
      %v394 = vunpack.c.l.b16 %v307
      %v395 = vunpack.c.l.b16 %v308
      %v396 = vunpack.c.l.b16 %v309
      %v397 = vunpack.c.l.b16 %v310
      %v398 = vunpack.c.l.b16 %v311
      %v399 = vunpack.c.l.b16 %v312
      %v400 = vunpack.c.l.b16 %v313
      %v401 = vunpack.c.l.b16 %v314
      %v402 = vunpack.c.l.b16 %v315
      %v403 = vunpack.c.l.b16 %v316
      %v404 = vunpack.c.l.b16 %v317
      %v405 = vunpack.c.l.b16 %v318
      %v406 = vunpack.c.l.b16 %v319
      %v407 = vunpack.c.l.b16 %v320
      %v408 = vunpack.c.l.b16 %v321
      %v409 = vunpack.c.l.b16 %v322
      %v410 = vunpack.c.l.b16 %v323
      %v411 = vunpack.c.l.b16 %v324
      %v412 = vunpack.c.l.b16 %v325
      %v413 = vunpack.c.l.b16 %v326
      %v414 = vunpack.c.l.b16 %v327
      %v415 = vunpack.c.l.b16 %v328
      %v416 = vunpack.c.l.b16 %v329
      %v417 = vunpack.c.l.b16 %v330
      %v418 = vunpack.c.l.b16 %v331
      %v419 = vunpack.c.l.b16 %v332
      %v420 = vunpack.c.l.b16 %v333
      %v421 = vunpack.c.l.b16 %v334
      %v422 = vunpack.c.l.b16 %v335
      %v423 = vunpack.c.l.b16 %v336
      %v424 = vunpack.c.l.b16 %v337
      %v425 = vunpack.c.l.b16 %v338
      %v426 = vpack.c.b16 %v395, %v394
      %v427 = vpack.c.b16 %v397, %v396
      %v428 = vpack.c.b16 %v399, %v398
      %v429 = vpack.c.b16 %v401, %v400
      %v430 = vpack.c.b16 %v403, %v402
      %v431 = vpack.c.b16 %v405, %v404
      %v432 = vpack.c.b16 %v407, %v406
      %v433 = vpack.c.b16 %v409, %v408
      %v434 = vpack.c.b16 %v411, %v410
      %v435 = vpack.c.b16 %v413, %v412
      %v436 = vpack.c.b16 %v415, %v414
      %v437 = vpack.c.b16 %v417, %v416
      %v438 = vpack.c.b16 %v419, %v418
      %v439 = vpack.c.b16 %v421, %v420
      %v440 = vpack.c.b16 %v423, %v422
      %v441 = vpack.c.b16 %v425, %v424
      %v474 = vunpack.c.l.b16 %v339
      %v475 = vunpack.c.l.b16 %v340
      %v476 = vunpack.c.l.b16 %v341
      %v477 = vunpack.c.l.b16 %v342
      %v478 = vunpack.c.l.b16 %v343
      %v479 = vunpack.c.l.b16 %v344
      %v480 = vunpack.c.l.b16 %v345
      %v481 = vunpack.c.l.b16 %v346
      %v482 = vunpack.c.l.b16 %v347
      %v483 = vunpack.c.l.b16 %v348
      %v484 = vunpack.c.l.b16 %v349
      %v485 = vunpack.c.l.b16 %v350
      %v486 = vunpack.c.l.b16 %v351
      %v487 = vunpack.c.l.b16 %v352
      %v488 = vunpack.c.l.b16 %v353
      %v489 = vunpack.c.l.b16 %v354
      %v490 = vpack.c.b16 %v475, %v474
      %v491 = vpack.c.b16 %v477, %v476
      %v492 = vpack.c.b16 %v479, %v478
      %v493 = vpack.c.b16 %v481, %v480
      %v494 = vpack.c.b16 %v483, %v482
      %v495 = vpack.c.b16 %v485, %v484
      %v496 = vpack.c.b16 %v487, %v486
      %v497 = vpack.c.b16 %v489, %v488
      %506 = vmatprep.subr.bf16.mxu0 0
      %507 = vmatpush1.bf16.msra.mxu0 %v490
      %508 = vmatprep.subr.bf16.mxu0 0
      %509 = vmatpush1.bf16.msra.mxu0 %v491
      %510 = vmatprep.subr.bf16.mxu0 0
      %511 = vmatpush1.bf16.msra.mxu0 %v492
      %512 = vmatprep.subr.bf16.mxu0 0
      %513 = vmatpush1.bf16.msra.mxu0 %v493
      %514 = vmatprep.subr.bf16.mxu0 0
      %515 = vmatpush1.bf16.msra.mxu0 %v494
      %516 = vmatprep.subr.bf16.mxu0 0
      %517 = vmatpush1.bf16.msra.mxu0 %v495
      %518 = vmatprep.subr.bf16.mxu0 0
      %519 = vmatpush1.bf16.msra.mxu0 %v496
      %520 = vmatprep.subr.bf16.mxu0 0
      %521 = vmatpush1.bf16.msra.mxu0 %v497
      %522 = vmatprep.subr.bf16.mxu0 0
      %523 = vmatpush1.bf16.msra.mxu0 0
      %524 = vmatprep.subr.bf16.mxu0 0
      %525 = vmatpush1.bf16.msra.mxu0 0
      %526 = vmatprep.subr.bf16.mxu0 0
      %527 = vmatpush1.bf16.msra.mxu0 0
      %528 = vmatprep.subr.bf16.mxu0 0
      %529 = vmatpush1.bf16.msra.mxu0 0
      %530 = vmatprep.subr.bf16.mxu0 0
      %531 = vmatpush1.bf16.msra.mxu0 0
      %532 = vmatprep.subr.bf16.mxu0 0
      %533 = vmatpush1.bf16.msra.mxu0 0
      %534 = vmatprep.subr.bf16.mxu0 0
      %535 = vmatpush1.bf16.msra.mxu0 0
      %536 = vmatprep.subr.bf16.mxu0 0
      %537 = vmatpush1.bf16.msra.mxu0 0
      %538 = vmatprep.mubr.bf16.mxu0 0
      %539 = vmatmul.mubr.bf16.gmra.mrb[0].mxu0 %v426
      %v540 = vpop.f32.mrb[0].mxu0
      %v541 = vadd.f32 %v360, %v540
      %v542 = vpop.f32.mrb[0].mxu0
      %v543 = vpop.f32.mrb[0].mxu0
      %v544 = vadd.f32 %v360, %v543
      %v545 = vpop.f32.mrb[0].mxu0
      %546 = vmatprep.mubr.bf16.mxu0 0
      %547 = vmatmul.mubr.bf16.gmra.mrb[0].mxu0 %v427
      %v548 = vpop.f32.mrb[0].mxu0
      %v549 = vadd.f32 %v360, %v548
      %v550 = vpop.f32.mrb[0].mxu0
      %v551 = vpop.f32.mrb[0].mxu0
      %v552 = vadd.f32 %v360, %v551
      %v553 = vpop.f32.mrb[0].mxu0
      %554 = vmatprep.mubr.bf16.mxu0 0
      %555 = vmatmul.mubr.bf16.gmra.mrb[0].mxu0 %v428
      %v556 = vpop.f32.mrb[0].mxu0
      %v557 = vadd.f32 %v360, %v556
      %v558 = vpop.f32.mrb[0].mxu0
      %v559 = vpop.f32.mrb[0].mxu0
      %v560 = vadd.f32 %v360, %v559
      %v561 = vpop.f32.mrb[0].mxu0
      %562 = vmatprep.mubr.bf16.mxu0 0
      %563 = vmatmul.mubr.bf16.gmra.mrb[0].mxu0 %v429
      %v564 = vpop.f32.mrb[0].mxu0
      %v565 = vadd.f32 %v360, %v564
      %v566 = vpop.f32.mrb[0].mxu0
      %v567 = vpop.f32.mrb[0].mxu0
      %v568 = vadd.f32 %v360, %v567
      %v569 = vpop.f32.mrb[0].mxu0
      %570 = vmatprep.mubr.bf16.mxu0 0
      %571 = vmatmul.mubr.bf16.gmra.mrb[0].mxu0 %v430
      %v572 = vpop.f32.mrb[0].mxu0
      %v573 = vadd.f32 %v360, %v572
      %v574 = vpop.f32.mrb[0].mxu0
      %v575 = vpop.f32.mrb[0].mxu0
      %v576 = vadd.f32 %v360, %v575
      %v577 = vpop.f32.mrb[0].mxu0
      %578 = vmatprep.mubr.bf16.mxu0 0
      %579 = vmatmul.mubr.bf16.gmra.mrb[0].mxu0 %v431
      %v580 = vpop.f32.mrb[0].mxu0
      %v581 = vadd.f32 %v360, %v580
      %v582 = vpop.f32.mrb[0].mxu0
      %v583 = vpop.f32.mrb[0].mxu0
      %v584 = vadd.f32 %v360, %v583
      %v585 = vpop.f32.mrb[0].mxu0
      %586 = vmatprep.mubr.bf16.mxu0 0
      %587 = vmatmul.mubr.bf16.gmra.mrb[0].mxu0 %v432
      %v588 = vpop.f32.mrb[0].mxu0
      %v589 = vadd.f32 %v360, %v588
      %v590 = vpop.f32.mrb[0].mxu0
      %v591 = vpop.f32.mrb[0].mxu0
      %v592 = vadd.f32 %v360, %v591
      %v593 = vpop.f32.mrb[0].mxu0
      %594 = vmatprep.mubr.bf16.mxu0 0
      %595 = vmatmul.mubr.bf16.gmra.mrb[0].mxu0 %v433
      %v596 = vpop.f32.mrb[0].mxu0
      %v597 = vadd.f32 %v360, %v596
      %v598 = vpop.f32.mrb[0].mxu0
      %v599 = vpop.f32.mrb[0].mxu0
      %v600 = vadd.f32 %v360, %v599
      %v601 = vpop.f32.mrb[0].mxu0
      %602 = vmatprep.mubr.bf16.mxu0 0
      %603 = vmatmul.mubr.bf16.gmra.mrb[0].mxu0 %v434
      %v604 = vpop.f32.mrb[0].mxu0
      %v605 = vadd.f32 %v360, %v604
      %v606 = vpop.f32.mrb[0].mxu0
      %v607 = vpop.f32.mrb[0].mxu0
      %v608 = vadd.f32 %v360, %v607
      %v609 = vpop.f32.mrb[0].mxu0
      %610 = vmatprep.mubr.bf16.mxu0 0
      %611 = vmatmul.mubr.bf16.gmra.mrb[0].mxu0 %v435
      %v612 = vpop.f32.mrb[0].mxu0
      %v613 = vadd.f32 %v360, %v612
      %v614 = vpop.f32.mrb[0].mxu0
      %v615 = vpop.f32.mrb[0].mxu0
      %v616 = vadd.f32 %v360, %v615
      %v617 = vpop.f32.mrb[0].mxu0
      %618 = vmatprep.mubr.bf16.mxu0 0
      %619 = vmatmul.mubr.bf16.gmra.mrb[0].mxu0 %v436
      %v620 = vpop.f32.mrb[0].mxu0
      %v621 = vadd.f32 %v360, %v620
      %v622 = vpop.f32.mrb[0].mxu0
      %v623 = vpop.f32.mrb[0].mxu0
      %v624 = vadd.f32 %v360, %v623
      %v625 = vpop.f32.mrb[0].mxu0
      %626 = vmatprep.mubr.bf16.mxu0 0
      %627 = vmatmul.mubr.bf16.gmra.mrb[0].mxu0 %v437
      %v628 = vpop.f32.mrb[0].mxu0
      %v629 = vadd.f32 %v360, %v628
      %v630 = vpop.f32.mrb[0].mxu0
      %v631 = vpop.f32.mrb[0].mxu0
      %v632 = vadd.f32 %v360, %v631
      %v633 = vpop.f32.mrb[0].mxu0
      %634 = vmatprep.mubr.bf16.mxu0 0
      %635 = vmatmul.mubr.bf16.gmra.mrb[0].mxu0 %v438
      %v636 = vpop.f32.mrb[0].mxu0
      %v637 = vadd.f32 %v360, %v636
      %v638 = vpop.f32.mrb[0].mxu0
      %v639 = vpop.f32.mrb[0].mxu0
      %v640 = vadd.f32 %v360, %v639
      %v641 = vpop.f32.mrb[0].mxu0
      %642 = vmatprep.mubr.bf16.mxu0 0
      %643 = vmatmul.mubr.bf16.gmra.mrb[0].mxu0 %v439
      %v644 = vpop.f32.mrb[0].mxu0
      %v645 = vadd.f32 %v360, %v644
      %v646 = vpop.f32.mrb[0].mxu0
      %v647 = vpop.f32.mrb[0].mxu0
      %v648 = vadd.f32 %v360, %v647
      %v649 = vpop.f32.mrb[0].mxu0
      %650 = vmatprep.mubr.bf16.mxu0 0
      %651 = vmatmul.mubr.bf16.gmra.mrb[0].mxu0 %v440
      %v652 = vpop.f32.mrb[0].mxu0
      %v653 = vadd.f32 %v360, %v652
      %v654 = vpop.f32.mrb[0].mxu0
      %v655 = vpop.f32.mrb[0].mxu0
      %v656 = vadd.f32 %v360, %v655
      %v657 = vpop.f32.mrb[0].mxu0
      %658 = vmatprep.mubr.bf16.mxu0 0
      %659 = vmatmul.mubr.bf16.gmra.mrb[0].mxu0 %v441
      %v660 = vpop.f32.mrb[0].mxu0
      %v661 = vadd.f32 %v360, %v660
      %v662 = vpop.f32.mrb[0].mxu0
      %v663 = vpop.f32.mrb[0].mxu0
      %v664 = vadd.f32 %v360, %v663
      %v665 = vpop.f32.mrb[0].mxu0
      %666 = vdwg.mxu0
      %v667 = vmul.f32 %v541, 0.01
      %v668 = vmul.f32 %v544, 0.01
      %v669 = vmul.f32 %v549, 0.01
      %v670 = vmul.f32 %v552, 0.01
      %v671 = vmul.f32 %v557, 0.01
      %v672 = vmul.f32 %v560, 0.01
      %v673 = vmul.f32 %v565, 0.01
      %v674 = vmul.f32 %v568, 0.01
      %v675 = vmul.f32 %v573, 0.01
      %v676 = vmul.f32 %v576, 0.01
      %v677 = vmul.f32 %v581, 0.01
      %v678 = vmul.f32 %v584, 0.01
      %v679 = vmul.f32 %v589, 0.01
      %v680 = vmul.f32 %v592, 0.01
      %v681 = vmul.f32 %v597, 0.01
      %v682 = vmul.f32 %v600, 0.01
      %v683 = vmul.f32 %v605, 0.01
      %v684 = vmul.f32 %v608, 0.01
      %v685 = vmul.f32 %v613, 0.01
      %v686 = vmul.f32 %v616, 0.01
      %v687 = vmul.f32 %v621, 0.01
      %v688 = vmul.f32 %v624, 0.01
      %v689 = vmul.f32 %v629, 0.01
      %v690 = vmul.f32 %v632, 0.01
      %v691 = vmul.f32 %v637, 0.01
      %v692 = vmul.f32 %v640, 0.01
      %v693 = vmul.f32 %v645, 0.01
      %v694 = vmul.f32 %v648, 0.01
      %v695 = vmul.f32 %v653, 0.01
      %v696 = vmul.f32 %v656, 0.01
      %v697 = vmul.f32 %v661, 0.01
      %v698 = vmul.f32 %v664, 0.01
      %v699 = vmax.f32 %v541, %v667
      %v700 = vmax.f32 %v544, %v668
      %v701 = vmax.f32 %v549, %v669
      %v702 = vmax.f32 %v552, %v670
      %v703 = vmax.f32 %v557, %v671
      %v704 = vmax.f32 %v560, %v672
      %v705 = vmax.f32 %v565, %v673
      %v706 = vmax.f32 %v568, %v674
      %v707 = vmax.f32 %v573, %v675
      %v708 = vmax.f32 %v576, %v676
      %v709 = vmax.f32 %v581, %v677
      %v710 = vmax.f32 %v584, %v678
      %v711 = vmax.f32 %v589, %v679
      %v712 = vmax.f32 %v592, %v680
      %v713 = vmax.f32 %v597, %v681
      %v714 = vmax.f32 %v600, %v682
      %v715 = vmax.f32 %v605, %v683
      %v716 = vmax.f32 %v608, %v684
      %v717 = vmax.f32 %v613, %v685
      %v718 = vmax.f32 %v616, %v686
      %v719 = vmax.f32 %v621, %v687
      %v720 = vmax.f32 %v624, %v688
      %v721 = vmax.f32 %v629, %v689
      %v722 = vmax.f32 %v632, %v690
      %v723 = vmax.f32 %v637, %v691
      %v724 = vmax.f32 %v640, %v692
      %v725 = vmax.f32 %v645, %v693
      %v726 = vmax.f32 %v648, %v694
      %v727 = vmax.f32 %v653, %v695
      %v728 = vmax.f32 %v656, %v696
      %v729 = vmax.f32 %v661, %v697
      %v730 = vmax.f32 %v664, %v698
      %v731 = vpack.c.bf16 %v700, %v699
      %v732 = vpack.c.bf16 %v702, %v701
      %v733 = vpack.c.bf16 %v704, %v703
      %v734 = vpack.c.bf16 %v706, %v705
      %v735 = vpack.c.bf16 %v708, %v707
      %v736 = vpack.c.bf16 %v710, %v709
      %v737 = vpack.c.bf16 %v712, %v711
      %v738 = vpack.c.bf16 %v714, %v713
      %v739 = vpack.c.bf16 %v716, %v715
      %v740 = vpack.c.bf16 %v718, %v717
      %v741 = vpack.c.bf16 %v720, %v719
      %v742 = vpack.c.bf16 %v722, %v721
      %v743 = vpack.c.bf16 %v724, %v723
      %v744 = vpack.c.bf16 %v726, %v725
      %v745 = vpack.c.bf16 %v728, %v727
      %v746 = vpack.c.bf16 %v730, %v729
      %v747 = vld [vmem:[%s2] sm:$0xf]
      %v748 = vld [vmem:[%s2 + $0x4] sm:$0xf]
      %v749 = vld [vmem:[%s2 + $0x8] sm:$0xf]
      %v750 = vld [vmem:[%s2 + $0xc] sm:$0xf]
      %v751 = vld [vmem:[%s2 + $0x10] sm:$0xf]
      %v752 = vld [vmem:[%s2 + $0x14] sm:$0xf]
      %v753 = vld [vmem:[%s2 + $0x18] sm:$0xf]
      %v754 = vld [vmem:[%s2 + $0x1c] sm:$0xf]
      %v755 = vld [vmem:[%s2 + $0x20] sm:$0xf]
      %v756 = vld [vmem:[%s2 + $0x24] sm:$0xf]
      %v757 = vld [vmem:[%s2 + $0x28] sm:$0xf]
      %v758 = vld [vmem:[%s2 + $0x2c] sm:$0xf]
      %v759 = vld [vmem:[%s2 + $0x30] sm:$0xf]
      %v760 = vld [vmem:[%s2 + $0x34] sm:$0xf]
      %v761 = vld [vmem:[%s2 + $0x38] sm:$0xf]
      %v762 = vld [vmem:[%s2 + $0x3c] sm:$0xf]
      %v763 = vld [vmem:[%s5] sm:$0x1]
      %v765 = vlaneseq
      %v766 = vshrl.u32 %v765, 7
      %v767 = vsub.s32 0, %v766
      %v768 = vrot.slane %v763, %v767
      %v786 = vunpack.c.l.b16 %v747
      %v787 = vunpack.c.l.b16 %v748
      %v788 = vunpack.c.l.b16 %v749
      %v789 = vunpack.c.l.b16 %v750
      %v790 = vunpack.c.l.b16 %v751
      %v791 = vunpack.c.l.b16 %v752
      %v792 = vunpack.c.l.b16 %v753
      %v793 = vunpack.c.l.b16 %v754
      %v794 = vunpack.c.l.b16 %v755
      %v795 = vunpack.c.l.b16 %v756
      %v796 = vunpack.c.l.b16 %v757
      %v797 = vunpack.c.l.b16 %v758
      %v798 = vunpack.c.l.b16 %v759
      %v799 = vunpack.c.l.b16 %v760
      %v800 = vunpack.c.l.b16 %v761
      %v801 = vunpack.c.l.b16 %v762
      %v802 = vpack.c.b16 %v787, %v786
      %v803 = vpack.c.b16 %v789, %v788
      %v804 = vpack.c.b16 %v791, %v790
      %v805 = vpack.c.b16 %v793, %v792
      %v806 = vpack.c.b16 %v795, %v794
      %v807 = vpack.c.b16 %v797, %v796
      %v808 = vpack.c.b16 %v799, %v798
      %v809 = vpack.c.b16 %v801, %v800
      %818 = vmatprep.subr.bf16.mxu0 0
      %819 = vmatpush1.bf16.msra.mxu0 %v802
      %820 = vmatprep.subr.bf16.mxu0 0
      %821 = vmatpush1.bf16.msra.mxu0 %v803
      %822 = vmatprep.subr.bf16.mxu0 0
      %823 = vmatpush1.bf16.msra.mxu0 %v804
      %824 = vmatprep.subr.bf16.mxu0 0
      %825 = vmatpush1.bf16.msra.mxu0 %v805
      %826 = vmatprep.subr.bf16.mxu0 0
      %827 = vmatpush1.bf16.msra.mxu0 %v806
      %828 = vmatprep.subr.bf16.mxu0 0
      %829 = vmatpush1.bf16.msra.mxu0 %v807
      %830 = vmatprep.subr.bf16.mxu0 0
      %831 = vmatpush1.bf16.msra.mxu0 %v808
      %832 = vmatprep.subr.bf16.mxu0 0
      %833 = vmatpush1.bf16.msra.mxu0 %v809
      %834 = vmatprep.subr.bf16.mxu0 0
      %835 = vmatpush1.bf16.msra.mxu0 0
      %836 = vmatprep.subr.bf16.mxu0 0
      %837 = vmatpush1.bf16.msra.mxu0 0
      %838 = vmatprep.subr.bf16.mxu0 0
      %839 = vmatpush1.bf16.msra.mxu0 0
      %840 = vmatprep.subr.bf16.mxu0 0
      %841 = vmatpush1.bf16.msra.mxu0 0
      %842 = vmatprep.subr.bf16.mxu0 0
      %843 = vmatpush1.bf16.msra.mxu0 0
      %844 = vmatprep.subr.bf16.mxu0 0
      %845 = vmatpush1.bf16.msra.mxu0 0
      %846 = vmatprep.subr.bf16.mxu0 0
      %847 = vmatpush1.bf16.msra.mxu0 0
      %848 = vmatprep.subr.bf16.mxu0 0
      %849 = vmatpush1.bf16.msra.mxu0 0
      %850 = vmatprep.mubr.bf16.mxu0 0
      %851 = vmatmul.mubr.bf16.gmra.mrb[0].mxu0 %v731
      %v852 = vpop.f32.mrb[0].mxu0
      %v853 = vadd.f32 %v768, %v852
      %v854 = vpop.f32.mrb[0].mxu0
      %v855 = vpop.f32.mrb[0].mxu0
      %v856 = vadd.f32 %v768, %v855
      %v857 = vpop.f32.mrb[0].mxu0
      %858 = vmatprep.mubr.bf16.mxu0 0
      %859 = vmatmul.mubr.bf16.gmra.mrb[0].mxu0 %v732
      %v860 = vpop.f32.mrb[0].mxu0
      %v861 = vadd.f32 %v768, %v860
      %v862 = vpop.f32.mrb[0].mxu0
      %v863 = vpop.f32.mrb[0].mxu0
      %v864 = vadd.f32 %v768, %v863
      %v865 = vpop.f32.mrb[0].mxu0
      %866 = vmatprep.mubr.bf16.mxu0 0
      %867 = vmatmul.mubr.bf16.gmra.mrb[0].mxu0 %v733
      %v868 = vpop.f32.mrb[0].mxu0
      %v869 = vadd.f32 %v768, %v868
      %v870 = vpop.f32.mrb[0].mxu0
      %v871 = vpop.f32.mrb[0].mxu0
      %v872 = vadd.f32 %v768, %v871
      %v873 = vpop.f32.mrb[0].mxu0
      %874 = vmatprep.mubr.bf16.mxu0 0
      %875 = vmatmul.mubr.bf16.gmra.mrb[0].mxu0 %v734
      %v876 = vpop.f32.mrb[0].mxu0
      %v877 = vadd.f32 %v768, %v876
      %v878 = vpop.f32.mrb[0].mxu0
      %v879 = vpop.f32.mrb[0].mxu0
      %v880 = vadd.f32 %v768, %v879
      %v881 = vpop.f32.mrb[0].mxu0
      %882 = vmatprep.mubr.bf16.mxu0 0
      %883 = vmatmul.mubr.bf16.gmra.mrb[0].mxu0 %v735
      %v884 = vpop.f32.mrb[0].mxu0
      %v885 = vadd.f32 %v768, %v884
      %v886 = vpop.f32.mrb[0].mxu0
      %v887 = vpop.f32.mrb[0].mxu0
      %v888 = vadd.f32 %v768, %v887
      %v889 = vpop.f32.mrb[0].mxu0
      %890 = vmatprep.mubr.bf16.mxu0 0
      %891 = vmatmul.mubr.bf16.gmra.mrb[0].mxu0 %v736
      %v892 = vpop.f32.mrb[0].mxu0
      %v893 = vadd.f32 %v768, %v892
      %v894 = vpop.f32.mrb[0].mxu0
      %v895 = vpop.f32.mrb[0].mxu0
      %v896 = vadd.f32 %v768, %v895
      %v897 = vpop.f32.mrb[0].mxu0
      %898 = vmatprep.mubr.bf16.mxu0 0
      %899 = vmatmul.mubr.bf16.gmra.mrb[0].mxu0 %v737
      %v900 = vpop.f32.mrb[0].mxu0
      %v901 = vadd.f32 %v768, %v900
      %v902 = vpop.f32.mrb[0].mxu0
      %v903 = vpop.f32.mrb[0].mxu0
      %v904 = vadd.f32 %v768, %v903
      %v905 = vpop.f32.mrb[0].mxu0
      %906 = vmatprep.mubr.bf16.mxu0 0
      %907 = vmatmul.mubr.bf16.gmra.mrb[0].mxu0 %v738
      %v908 = vpop.f32.mrb[0].mxu0
      %v909 = vadd.f32 %v768, %v908
      %v910 = vpop.f32.mrb[0].mxu0
      %v911 = vpop.f32.mrb[0].mxu0
      %v912 = vadd.f32 %v768, %v911
      %v913 = vpop.f32.mrb[0].mxu0
      %914 = vmatprep.mubr.bf16.mxu0 0
      %915 = vmatmul.mubr.bf16.gmra.mrb[0].mxu0 %v739
      %v916 = vpop.f32.mrb[0].mxu0
      %v917 = vadd.f32 %v768, %v916
      %v918 = vpop.f32.mrb[0].mxu0
      %v919 = vpop.f32.mrb[0].mxu0
      %v920 = vadd.f32 %v768, %v919
      %v921 = vpop.f32.mrb[0].mxu0
      %922 = vmatprep.mubr.bf16.mxu0 0
      %923 = vmatmul.mubr.bf16.gmra.mrb[0].mxu0 %v740
      %v924 = vpop.f32.mrb[0].mxu0
      %v925 = vadd.f32 %v768, %v924
      %v926 = vpop.f32.mrb[0].mxu0
      %v927 = vpop.f32.mrb[0].mxu0
      %v928 = vadd.f32 %v768, %v927
      %v929 = vpop.f32.mrb[0].mxu0
      %930 = vmatprep.mubr.bf16.mxu0 0
      %931 = vmatmul.mubr.bf16.gmra.mrb[0].mxu0 %v741
      %v932 = vpop.f32.mrb[0].mxu0
      %v933 = vadd.f32 %v768, %v932
      %v934 = vpop.f32.mrb[0].mxu0
      %v935 = vpop.f32.mrb[0].mxu0
      %v936 = vadd.f32 %v768, %v935
      %v937 = vpop.f32.mrb[0].mxu0
      %938 = vmatprep.mubr.bf16.mxu0 0
      %939 = vmatmul.mubr.bf16.gmra.mrb[0].mxu0 %v742
      %v940 = vpop.f32.mrb[0].mxu0
      %v941 = vadd.f32 %v768, %v940
      %v942 = vpop.f32.mrb[0].mxu0
      %v943 = vpop.f32.mrb[0].mxu0
      %v944 = vadd.f32 %v768, %v943
      %v945 = vpop.f32.mrb[0].mxu0
      %946 = vmatprep.mubr.bf16.mxu0 0
      %947 = vmatmul.mubr.bf16.gmra.mrb[0].mxu0 %v743
      %v948 = vpop.f32.mrb[0].mxu0
      %v949 = vadd.f32 %v768, %v948
      %v950 = vpop.f32.mrb[0].mxu0
      %v951 = vpop.f32.mrb[0].mxu0
      %v952 = vadd.f32 %v768, %v951
      %v953 = vpop.f32.mrb[0].mxu0
      %954 = vmatprep.mubr.bf16.mxu0 0
      %955 = vmatmul.mubr.bf16.gmra.mrb[0].mxu0 %v744
      %v956 = vpop.f32.mrb[0].mxu0
      %v957 = vadd.f32 %v768, %v956
      %v958 = vpop.f32.mrb[0].mxu0
      %v959 = vpop.f32.mrb[0].mxu0
      %v960 = vadd.f32 %v768, %v959
      %v961 = vpop.f32.mrb[0].mxu0
      %962 = vmatprep.mubr.bf16.mxu0 0
      %963 = vmatmul.mubr.bf16.gmra.mrb[0].mxu0 %v745
      %v964 = vpop.f32.mrb[0].mxu0
      %v965 = vadd.f32 %v768, %v964
      %v966 = vpop.f32.mrb[0].mxu0
      %v967 = vpop.f32.mrb[0].mxu0
      %v968 = vadd.f32 %v768, %v967
      %v969 = vpop.f32.mrb[0].mxu0
      %970 = vmatprep.mubr.bf16.mxu0 0
      %971 = vmatmul.mubr.bf16.gmra.mrb[0].mxu0 %v746
      %v972 = vpop.f32.mrb[0].mxu0
      %v973 = vadd.f32 %v768, %v972
      %v974 = vpop.f32.mrb[0].mxu0
      %v975 = vpop.f32.mrb[0].mxu0
      %v976 = vadd.f32 %v768, %v975
      %v977 = vpop.f32.mrb[0].mxu0
      %978 = vdwg.mxu0
      %v979 = vmul.f32 %v853, 0.01
      %v980 = vmul.f32 %v856, 0.01
      %v981 = vmul.f32 %v861, 0.01
      %v982 = vmul.f32 %v864, 0.01
      %v983 = vmul.f32 %v869, 0.01
      %v984 = vmul.f32 %v872, 0.01
      %v985 = vmul.f32 %v877, 0.01
      %v986 = vmul.f32 %v880, 0.01
      %v987 = vmul.f32 %v885, 0.01
      %v988 = vmul.f32 %v888, 0.01
      %v989 = vmul.f32 %v893, 0.01
      %v990 = vmul.f32 %v896, 0.01
      %v991 = vmul.f32 %v901, 0.01
      %v992 = vmul.f32 %v904, 0.01
      %v993 = vmul.f32 %v909, 0.01
      %v994 = vmul.f32 %v912, 0.01
      %v995 = vmul.f32 %v917, 0.01
      %v996 = vmul.f32 %v920, 0.01
      %v997 = vmul.f32 %v925, 0.01
      %v998 = vmul.f32 %v928, 0.01
      %v999 = vmul.f32 %v933, 0.01
      %v1000 = vmul.f32 %v936, 0.01
      %v1001 = vmul.f32 %v941, 0.01
      %v1002 = vmul.f32 %v944, 0.01
      %v1003 = vmul.f32 %v949, 0.01
      %v1004 = vmul.f32 %v952, 0.01
      %v1005 = vmul.f32 %v957, 0.01
      %v1006 = vmul.f32 %v960, 0.01
      %v1007 = vmul.f32 %v965, 0.01
      %v1008 = vmul.f32 %v968, 0.01
      %v1009 = vmul.f32 %v973, 0.01
      %v1010 = vmul.f32 %v976, 0.01
      %v1011 = vmax.f32 %v853, %v979
      %v1012 = vmax.f32 %v856, %v980
      %v1013 = vmax.f32 %v861, %v981
      %v1014 = vmax.f32 %v864, %v982
      %v1015 = vmax.f32 %v869, %v983
      %v1016 = vmax.f32 %v872, %v984
      %v1017 = vmax.f32 %v877, %v985
      %v1018 = vmax.f32 %v880, %v986
      %v1019 = vmax.f32 %v885, %v987
      %v1020 = vmax.f32 %v888, %v988
      %v1021 = vmax.f32 %v893, %v989
      %v1022 = vmax.f32 %v896, %v990
      %v1023 = vmax.f32 %v901, %v991
      %v1024 = vmax.f32 %v904, %v992
      %v1025 = vmax.f32 %v909, %v993
      %v1026 = vmax.f32 %v912, %v994
      %v1027 = vmax.f32 %v917, %v995
      %v1028 = vmax.f32 %v920, %v996
      %v1029 = vmax.f32 %v925, %v997
      %v1030 = vmax.f32 %v928, %v998
      %v1031 = vmax.f32 %v933, %v999
      %v1032 = vmax.f32 %v936, %v1000
      %v1033 = vmax.f32 %v941, %v1001
      %v1034 = vmax.f32 %v944, %v1002
      %v1035 = vmax.f32 %v949, %v1003
      %v1036 = vmax.f32 %v952, %v1004
      %v1037 = vmax.f32 %v957, %v1005
      %v1038 = vmax.f32 %v960, %v1006
      %v1039 = vmax.f32 %v965, %v1007
      %v1040 = vmax.f32 %v968, %v1008
      %v1041 = vmax.f32 %v973, %v1009
      %v1042 = vmax.f32 %v976, %v1010
      %v1043 = vld [vmem:[%s6] sm:$0x1]
      %v1045 = vlaneseq
      %v1046 = vshrl.u32 %v1045, 7
      %v1047 = vsub.s32 0, %v1046
      %v1048 = vrot.slane %v1043, %v1047
      %1050 = vst [vmem:[#allocation2] sm:$0xff] %v1048
      %1051 = vst [vmem:[#allocation2 + $0x8] sm:$0xff] %v1048
      %1052 = vst [vmem:[#allocation2 + $0x10] sm:$0xff] %v1048
      %1053 = vst [vmem:[#allocation2 + $0x18] sm:$0xff] %v1048
      %1054 = vst [vmem:[#allocation2 + $0x20] sm:$0xff] %v1048
      %1055 = vst [vmem:[#allocation2 + $0x28] sm:$0xff] %v1048
      %1056 = vst [vmem:[#allocation2 + $0x30] sm:$0xff] %v1048
      %1057 = vst [vmem:[#allocation2 + $0x38] sm:$0xff] %v1048
      %1058 = vst [vmem:[#allocation2 + $0x40] sm:$0xff] %v1048
      %1059 = vst [vmem:[#allocation2 + $0x48] sm:$0xff] %v1048
      %1060 = vst [vmem:[#allocation2 + $0x50] sm:$0xff] %v1048
      %1061 = vst [vmem:[#allocation2 + $0x58] sm:$0xff] %v1048
      %1062 = vst [vmem:[#allocation2 + $0x60] sm:$0xff] %v1048
      %1063 = vst [vmem:[#allocation2 + $0x68] sm:$0xff] %v1048
      %1064 = vst [vmem:[#allocation2 + $0x70] sm:$0xff] %v1048
      %1065 = vst [vmem:[#allocation2 + $0x78] sm:$0xff] %v1048
      %1066 = vst [vmem:[#allocation2 + $0x80] sm:$0xff] %v1048
      %1067 = vst [vmem:[#allocation2 + $0x88] sm:$0xff] %v1048
      %1068 = vst [vmem:[#allocation2 + $0x90] sm:$0xff] %v1048
      %1069 = vst [vmem:[#allocation2 + $0x98] sm:$0xff] %v1048
      %1070 = vst [vmem:[#allocation2 + $0xa0] sm:$0xff] %v1048
      %1071 = vst [vmem:[#allocation2 + $0xa8] sm:$0xff] %v1048
      %1072 = vst [vmem:[#allocation2 + $0xb0] sm:$0xff] %v1048
      %1073 = vst [vmem:[#allocation2 + $0xb8] sm:$0xff] %v1048
      %1074 = vst [vmem:[#allocation2 + $0xc0] sm:$0xff] %v1048
      %1075 = vst [vmem:[#allocation2 + $0xc8] sm:$0xff] %v1048
      %1076 = vst [vmem:[#allocation2 + $0xd0] sm:$0xff] %v1048
      %1077 = vst [vmem:[#allocation2 + $0xd8] sm:$0xff] %v1048
      %1078 = vst [vmem:[#allocation2 + $0xe0] sm:$0xff] %v1048
      %1079 = vst [vmem:[#allocation2 + $0xe8] sm:$0xff] %v1048
      %1080 = vst [vmem:[#allocation2 + $0xf0] sm:$0xff] %v1048
      %1081 = vst [vmem:[#allocation2 + $0xf8] sm:$0xff] %v1048
      %1082 = vst [vmem:[#allocation2 + $0x100] sm:$0xff] %v1048
      %1083 = vst [vmem:[#allocation2 + $0x108] sm:$0xff] %v1048
      %1084 = vst [vmem:[#allocation2 + $0x110] sm:$0xff] %v1048
      %1085 = vst [vmem:[#allocation2 + $0x118] sm:$0xff] %v1048
      %1086 = vst [vmem:[#allocation2 + $0x120] sm:$0xff] %v1048
      %1087 = vst [vmem:[#allocation2 + $0x128] sm:$0xff] %v1048
      %1088 = vst [vmem:[#allocation2 + $0x130] sm:$0xff] %v1048
      %1089 = vst [vmem:[#allocation2 + $0x138] sm:$0xff] %v1048
      %1090 = vst [vmem:[#allocation2 + $0x140] sm:$0xff] %v1048
      %1091 = vst [vmem:[#allocation2 + $0x148] sm:$0xff] %v1048
      %1092 = vst [vmem:[#allocation2 + $0x150] sm:$0xff] %v1048
      %1093 = vst [vmem:[#allocation2 + $0x158] sm:$0xff] %v1048
      %1094 = vst [vmem:[#allocation2 + $0x160] sm:$0xff] %v1048
      %1095 = vst [vmem:[#allocation2 + $0x168] sm:$0xff] %v1048
      %1096 = vst [vmem:[#allocation2 + $0x170] sm:$0xff] %v1048
      %1097 = vst [vmem:[#allocation2 + $0x178] sm:$0xff] %v1048
      %1098 = vst [vmem:[#allocation2 + $0x180] sm:$0xff] %v1048
      %1099 = vst [vmem:[#allocation2 + $0x188] sm:$0xff] %v1048
      %1100 = vst [vmem:[#allocation2 + $0x190] sm:$0xff] %v1048
      %1101 = vst [vmem:[#allocation2 + $0x198] sm:$0xff] %v1048
      %1102 = vst [vmem:[#allocation2 + $0x1a0] sm:$0xff] %v1048
      %1103 = vst [vmem:[#allocation2 + $0x1a8] sm:$0xff] %v1048
      %s1104 = scalar_lea.vmem [#allocation2], 24
      %1105 = vst [vmem:[%s1104 + $0x1] sm:$0xff] %v1011
      %1106 = vst [vmem:[%s1104 + $0x9] sm:$0xff] %v1012
      %1107 = vst [vmem:[%s1104 + $0x19] sm:$0xff] %v1013
      %1108 = vst [vmem:[%s1104 + $0x21] sm:$0xff] %v1014
      %1109 = vst [vmem:[%s1104 + $0x31] sm:$0xff] %v1015
      %1110 = vst [vmem:[%s1104 + $0x39] sm:$0xff] %v1016
      %1111 = vst [vmem:[%s1104 + $0x49] sm:$0xff] %v1017
      %1112 = vst [vmem:[%s1104 + $0x51] sm:$0xff] %v1018
      %1113 = vst [vmem:[%s1104 + $0x61] sm:$0xff] %v1019
      %1114 = vst [vmem:[%s1104 + $0x69] sm:$0xff] %v1020
      %1115 = vst [vmem:[%s1104 + $0x79] sm:$0xff] %v1021
      %1116 = vst [vmem:[%s1104 + $0x81] sm:$0xff] %v1022
      %1117 = vst [vmem:[%s1104 + $0x91] sm:$0xff] %v1023
      %1118 = vst [vmem:[%s1104 + $0x99] sm:$0xff] %v1024
      %1119 = vst [vmem:[%s1104 + $0xa9] sm:$0xff] %v1025
      %1120 = vst [vmem:[%s1104 + $0xb1] sm:$0xff] %v1026
      %1121 = vst [vmem:[%s1104 + $0xc1] sm:$0xff] %v1027
      %1122 = vst [vmem:[%s1104 + $0xc9] sm:$0xff] %v1028
      %1123 = vst [vmem:[%s1104 + $0xd9] sm:$0xff] %v1029
      %1124 = vst [vmem:[%s1104 + $0xe1] sm:$0xff] %v1030
      %1125 = vst [vmem:[%s1104 + $0xf1] sm:$0xff] %v1031
      %1126 = vst [vmem:[%s1104 + $0xf9] sm:$0xff] %v1032
      %1127 = vst [vmem:[%s1104 + $0x109] sm:$0xff] %v1033
      %1128 = vst [vmem:[%s1104 + $0x111] sm:$0xff] %v1034
      %1129 = vst [vmem:[%s1104 + $0x121] sm:$0xff] %v1035
      %1130 = vst [vmem:[%s1104 + $0x129] sm:$0xff] %v1036
      %1131 = vst [vmem:[%s1104 + $0x139] sm:$0xff] %v1037
      %1132 = vst [vmem:[%s1104 + $0x141] sm:$0xff] %v1038
      %1133 = vst [vmem:[%s1104 + $0x151] sm:$0xff] %v1039
      %1134 = vst [vmem:[%s1104 + $0x159] sm:$0xff] %v1040
      %1135 = vst [vmem:[%s1104 + $0x169] sm:$0xff] %v1041
      %1136 = vst [vmem:[%s1104 + $0x171] sm:$0xff] %v1042
      %v1137 = vld [vmem:[%s7] sm:$0x1]
      %v1139 = vlaneseq
      %v1140 = vshrl.u32 %v1139, 7
      %v1141 = vsub.s32 0, %v1140
      %v1142 = vrot.slane %v1137, %v1141
      %1144 = vst [vmem:[%s305] sm:$0xff] %v1142
      %1145 = vst [vmem:[%s305 + $0x8] sm:$0xff] %v1142
      %1146 = vst [vmem:[%s305 + $0x10] sm:$0xff] %v1142
      %1147 = vst [vmem:[%s305 + $0x18] sm:$0xff] %v1142
      %1148 = vst [vmem:[%s305 + $0x20] sm:$0xff] %v1142
      %1149 = vst [vmem:[%s305 + $0x28] sm:$0xff] %v1142
      %1150 = vst [vmem:[%s305 + $0x30] sm:$0xff] %v1142
      %1151 = vst [vmem:[%s305 + $0x38] sm:$0xff] %v1142
      %1152 = vst [vmem:[%s305 + $0x40] sm:$0xff] %v1142
      %1153 = vst [vmem:[%s305 + $0x48] sm:$0xff] %v1142
      %1154 = vst [vmem:[%s305 + $0x50] sm:$0xff] %v1142
      %1155 = vst [vmem:[%s305 + $0x58] sm:$0xff] %v1142
      %1156 = vst [vmem:[%s305 + $0x60] sm:$0xff] %v1142
      %1157 = vst [vmem:[%s305 + $0x68] sm:$0xff] %v1142
      %1158 = vst [vmem:[%s305 + $0x70] sm:$0xff] %v1142
      %1159 = vst [vmem:[%s305 + $0x78] sm:$0xff] %v1142
      %1160 = vst [vmem:[%s305 + $0x80] sm:$0xff] %v1142
      %1161 = vst [vmem:[%s305 + $0x88] sm:$0xff] %v1142
      %1162 = vst [vmem:[%s305 + $0x90] sm:$0xff] %v1142
      %1163 = vst [vmem:[%s305 + $0x98] sm:$0xff] %v1142
      %1164 = vst [vmem:[%s305 + $0xa0] sm:$0xff] %v1142
      %1165 = vst [vmem:[%s305 + $0xa8] sm:$0xff] %v1142
      %1166 = vst [vmem:[%s305 + $0xb0] sm:$0xff] %v1142
      %1167 = vst [vmem:[%s305 + $0xb8] sm:$0xff] %v1142
      %1168 = vst [vmem:[%s305 + $0xc0] sm:$0xff] %v1142
      %1169 = vst [vmem:[%s305 + $0xc8] sm:$0xff] %v1142
      %1170 = vst [vmem:[%s305 + $0xd0] sm:$0xff] %v1142
      %1171 = vst [vmem:[%s305 + $0xd8] sm:$0xff] %v1142
      %1172 = vst [vmem:[%s305 + $0xe0] sm:$0xff] %v1142
      %1173 = vst [vmem:[%s305 + $0xe8] sm:$0xff] %v1142
      %1174 = vst [vmem:[%s305 + $0xf0] sm:$0xff] %v1142
      %1175 = vst [vmem:[%s305 + $0xf8] sm:$0xff] %v1142
      %v1176 = vld [vmem:[#allocation2] sm:$0xff]
      %v1177 = vld [vmem:[#allocation2 + $0x8] sm:$0xff]
      %v1178 = vld [vmem:[#allocation2 + $0x18] sm:$0xff]
      %v1179 = vld [vmem:[#allocation2 + $0x20] sm:$0xff]
      %v1180 = vld [vmem:[#allocation2 + $0x30] sm:$0xff]
      %v1181 = vld [vmem:[#allocation2 + $0x38] sm:$0xff]
      %v1182 = vld [vmem:[#allocation2 + $0x48] sm:$0xff]
      %v1183 = vld [vmem:[#allocation2 + $0x50] sm:$0xff]
      %v1184 = vld [vmem:[#allocation2 + $0x60] sm:$0xff]
      %v1185 = vld [vmem:[#allocation2 + $0x68] sm:$0xff]
      %v1186 = vld [vmem:[#allocation2 + $0x78] sm:$0xff]
      %v1187 = vld [vmem:[#allocation2 + $0x80] sm:$0xff]
      %v1188 = vld [vmem:[#allocation2 + $0x90] sm:$0xff]
      %v1189 = vld [vmem:[#allocation2 + $0x98] sm:$0xff]
      %v1190 = vld [vmem:[#allocation2 + $0xa8] sm:$0xff]
      %v1191 = vld [vmem:[#allocation2 + $0xb0] sm:$0xff]
      %v1192 = vld [vmem:[#allocation2 + $0xc0] sm:$0xff]
      %v1193 = vld [vmem:[#allocation2 + $0xc8] sm:$0xff]
      %v1194 = vld [vmem:[#allocation2 + $0xd8] sm:$0xff]
      %v1195 = vld [vmem:[#allocation2 + $0xe0] sm:$0xff]
      %v1196 = vld [vmem:[#allocation2 + $0xf0] sm:$0xff]
      %v1197 = vld [vmem:[#allocation2 + $0xf8] sm:$0xff]
      %v1198 = vld [vmem:[#allocation2 + $0x108] sm:$0xff]
      %v1199 = vld [vmem:[#allocation2 + $0x110] sm:$0xff]
      %v1200 = vld [vmem:[#allocation2 + $0x120] sm:$0xff]
      %v1201 = vld [vmem:[#allocation2 + $0x128] sm:$0xff]
      %v1202 = vld [vmem:[#allocation2 + $0x138] sm:$0xff]
      %v1203 = vld [vmem:[#allocation2 + $0x140] sm:$0xff]
      %v1204 = vld [vmem:[#allocation2 + $0x150] sm:$0xff]
      %v1205 = vld [vmem:[#allocation2 + $0x158] sm:$0xff]
      %v1206 = vld [vmem:[#allocation2 + $0x168] sm:$0xff]
      %v1207 = vld [vmem:[#allocation2 + $0x170] sm:$0xff]
      %v1208 = vld [vmem:[%s305] sm:$0xff]
      %v1209 = vld [vmem:[%s305 + $0x8] sm:$0xff]
      %v1210 = vld [vmem:[%s305 + $0x10] sm:$0xff]
      %v1211 = vld [vmem:[%s305 + $0x18] sm:$0xff]
      %v1212 = vld [vmem:[%s305 + $0x20] sm:$0xff]
      %v1213 = vld [vmem:[%s305 + $0x28] sm:$0xff]
      %v1214 = vld [vmem:[%s305 + $0x30] sm:$0xff]
      %v1215 = vld [vmem:[%s305 + $0x38] sm:$0xff]
      %v1216 = vld [vmem:[%s305 + $0x40] sm:$0xff]
      %v1217 = vld [vmem:[%s305 + $0x48] sm:$0xff]
      %v1218 = vld [vmem:[%s305 + $0x50] sm:$0xff]
      %v1219 = vld [vmem:[%s305 + $0x58] sm:$0xff]
      %v1220 = vld [vmem:[%s305 + $0x60] sm:$0xff]
      %v1221 = vld [vmem:[%s305 + $0x68] sm:$0xff]
      %v1222 = vld [vmem:[%s305 + $0x70] sm:$0xff]
      %v1223 = vld [vmem:[%s305 + $0x78] sm:$0xff]
      %v1224 = vld [vmem:[%s305 + $0x80] sm:$0xff]
      %v1225 = vld [vmem:[%s305 + $0x88] sm:$0xff]
      %v1226 = vld [vmem:[%s305 + $0x90] sm:$0xff]
      %v1227 = vld [vmem:[%s305 + $0x98] sm:$0xff]
      %v1228 = vld [vmem:[%s305 + $0xa0] sm:$0xff]
      %v1229 = vld [vmem:[%s305 + $0xa8] sm:$0xff]
      %v1230 = vld [vmem:[%s305 + $0xb0] sm:$0xff]
      %v1231 = vld [vmem:[%s305 + $0xb8] sm:$0xff]
      %v1232 = vld [vmem:[%s305 + $0xc0] sm:$0xff]
      %v1233 = vld [vmem:[%s305 + $0xc8] sm:$0xff]
      %v1234 = vld [vmem:[%s305 + $0xd0] sm:$0xff]
      %v1235 = vld [vmem:[%s305 + $0xd8] sm:$0xff]
      %v1236 = vld [vmem:[%s305 + $0xe0] sm:$0xff]
      %v1237 = vld [vmem:[%s305 + $0xe8] sm:$0xff]
      %v1238 = vld [vmem:[%s305 + $0xf0] sm:$0xff]
      %v1239 = vld [vmem:[%s305 + $0xf8] sm:$0xff]
      %v1240 = vpack.c.bf16 %v1177, %v1176
      %v1241 = vpack.c.bf16 %v1179, %v1178
      %v1242 = vpack.c.bf16 %v1181, %v1180
      %v1243 = vpack.c.bf16 %v1183, %v1182
      %v1244 = vpack.c.bf16 %v1185, %v1184
      %v1245 = vpack.c.bf16 %v1187, %v1186
      %v1246 = vpack.c.bf16 %v1189, %v1188
      %v1247 = vpack.c.bf16 %v1191, %v1190
      %v1248 = vpack.c.bf16 %v1193, %v1192
      %v1249 = vpack.c.bf16 %v1195, %v1194
      %v1250 = vpack.c.bf16 %v1197, %v1196
      %v1251 = vpack.c.bf16 %v1199, %v1198
      %v1252 = vpack.c.bf16 %v1201, %v1200
      %v1253 = vpack.c.bf16 %v1203, %v1202
      %v1254 = vpack.c.bf16 %v1205, %v1204
      %v1255 = vpack.c.bf16 %v1207, %v1206
      %v1256 = vld [vmem:[%s3] sm:$0xf]
      %v1257 = vld [vmem:[%s3 + $0x4] sm:$0xf]
      %v1258 = vld [vmem:[%s3 + $0x8] sm:$0xf]
      %v1259 = vld [vmem:[%s3 + $0xc] sm:$0xf]
      %v1260 = vld [vmem:[%s3 + $0x10] sm:$0xf]
      %v1261 = vld [vmem:[%s3 + $0x14] sm:$0xf]
      %v1262 = vld [vmem:[%s3 + $0x18] sm:$0xf]
      %v1263 = vld [vmem:[%s3 + $0x1c] sm:$0xf]
      %v1264 = vld [vmem:[%s3 + $0x20] sm:$0xf]
      %v1265 = vld [vmem:[%s3 + $0x24] sm:$0xf]
      %v1266 = vld [vmem:[%s3 + $0x28] sm:$0xf]
      %v1267 = vld [vmem:[%s3 + $0x2c] sm:$0xf]
      %v1268 = vld [vmem:[%s3 + $0x30] sm:$0xf]
      %v1269 = vld [vmem:[%s3 + $0x34] sm:$0xf]
      %v1270 = vld [vmem:[%s3 + $0x38] sm:$0xf]
      %v1271 = vld [vmem:[%s3 + $0x3c] sm:$0xf]
      %v1288 = vunpack.c.l.b16 %v1256
      %v1289 = vunpack.c.l.b16 %v1257
      %v1290 = vunpack.c.l.b16 %v1258
      %v1291 = vunpack.c.l.b16 %v1259
      %v1292 = vunpack.c.l.b16 %v1260
      %v1293 = vunpack.c.l.b16 %v1261
      %v1294 = vunpack.c.l.b16 %v1262
      %v1295 = vunpack.c.l.b16 %v1263
      %v1296 = vunpack.c.l.b16 %v1264
      %v1297 = vunpack.c.l.b16 %v1265
      %v1298 = vunpack.c.l.b16 %v1266
      %v1299 = vunpack.c.l.b16 %v1267
      %v1300 = vunpack.c.l.b16 %v1268
      %v1301 = vunpack.c.l.b16 %v1269
      %v1302 = vunpack.c.l.b16 %v1270
      %v1303 = vunpack.c.l.b16 %v1271
      %v1304 = vpack.c.b16 %v1289, %v1288
      %v1305 = vpack.c.b16 %v1291, %v1290
      %v1306 = vpack.c.b16 %v1293, %v1292
      %v1307 = vpack.c.b16 %v1295, %v1294
      %v1308 = vpack.c.b16 %v1297, %v1296
      %v1309 = vpack.c.b16 %v1299, %v1298
      %v1310 = vpack.c.b16 %v1301, %v1300
      %v1311 = vpack.c.b16 %v1303, %v1302
      %1320 = vmatprep.subr.bf16.mxu0 0
      %1321 = vmatpush1.bf16.msra.mxu0 %v1304
      %1322 = vmatprep.subr.bf16.mxu0 0
      %1323 = vmatpush1.bf16.msra.mxu0 %v1305
      %1324 = vmatprep.subr.bf16.mxu0 0
      %1325 = vmatpush1.bf16.msra.mxu0 %v1306
      %1326 = vmatprep.subr.bf16.mxu0 0
      %1327 = vmatpush1.bf16.msra.mxu0 %v1307
      %1328 = vmatprep.subr.bf16.mxu0 0
      %1329 = vmatpush1.bf16.msra.mxu0 %v1308
      %1330 = vmatprep.subr.bf16.mxu0 0
      %1331 = vmatpush1.bf16.msra.mxu0 %v1309
      %1332 = vmatprep.subr.bf16.mxu0 0
      %1333 = vmatpush1.bf16.msra.mxu0 %v1310
      %1334 = vmatprep.subr.bf16.mxu0 0
      %1335 = vmatpush1.bf16.msra.mxu0 %v1311
      %1336 = vmatprep.subr.bf16.mxu0 0
      %1337 = vmatpush1.bf16.msra.mxu0 0
      %1338 = vmatprep.subr.bf16.mxu0 0
      %1339 = vmatpush1.bf16.msra.mxu0 0
      %1340 = vmatprep.subr.bf16.mxu0 0
      %1341 = vmatpush1.bf16.msra.mxu0 0
      %1342 = vmatprep.subr.bf16.mxu0 0
      %1343 = vmatpush1.bf16.msra.mxu0 0
      %1344 = vmatprep.subr.bf16.mxu0 0
      %1345 = vmatpush1.bf16.msra.mxu0 0
      %1346 = vmatprep.subr.bf16.mxu0 0
      %1347 = vmatpush1.bf16.msra.mxu0 0
      %1348 = vmatprep.subr.bf16.mxu0 0
      %1349 = vmatpush1.bf16.msra.mxu0 0
      %1350 = vmatprep.subr.bf16.mxu0 0
      %1351 = vmatpush1.bf16.msra.mxu0 0
      %1352 = vmatprep.mubr.bf16.mxu0 0
      %1353 = vmatmul.mubr.bf16.gmra.mrb[0].mxu0 %v1240
      %v1354 = vpop.f32.mrb[0].mxu0
      %v1355 = vadd.f32 0.0, %v1354
      %v1356 = vpop.f32.mrb[0].mxu0
      %v1357 = vpop.f32.mrb[0].mxu0
      %v1358 = vadd.f32 0.0, %v1357
      %v1359 = vpop.f32.mrb[0].mxu0
      %1360 = vmatprep.mubr.bf16.mxu0 0
      %1361 = vmatmul.mubr.bf16.gmra.mrb[0].mxu0 %v1241
      %v1362 = vpop.f32.mrb[0].mxu0
      %v1363 = vadd.f32 0.0, %v1362
      %v1364 = vpop.f32.mrb[0].mxu0
      %v1365 = vpop.f32.mrb[0].mxu0
      %v1366 = vadd.f32 0.0, %v1365
      %v1367 = vpop.f32.mrb[0].mxu0
      %1368 = vmatprep.mubr.bf16.mxu0 0
      %1369 = vmatmul.mubr.bf16.gmra.mrb[0].mxu0 %v1242
      %v1370 = vpop.f32.mrb[0].mxu0
      %v1371 = vadd.f32 0.0, %v1370
      %v1372 = vpop.f32.mrb[0].mxu0
      %v1373 = vpop.f32.mrb[0].mxu0
      %v1374 = vadd.f32 0.0, %v1373
      %v1375 = vpop.f32.mrb[0].mxu0
      %1376 = vmatprep.mubr.bf16.mxu0 0
      %1377 = vmatmul.mubr.bf16.gmra.mrb[0].mxu0 %v1243
      %v1378 = vpop.f32.mrb[0].mxu0
      %v1379 = vadd.f32 0.0, %v1378
      %v1380 = vpop.f32.mrb[0].mxu0
      %v1381 = vpop.f32.mrb[0].mxu0
      %v1382 = vadd.f32 0.0, %v1381
      %v1383 = vpop.f32.mrb[0].mxu0
      %1384 = vmatprep.mubr.bf16.mxu0 0
      %1385 = vmatmul.mubr.bf16.gmra.mrb[0].mxu0 %v1244
      %v1386 = vpop.f32.mrb[0].mxu0
      %v1387 = vadd.f32 0.0, %v1386
      %v1388 = vpop.f32.mrb[0].mxu0
      %v1389 = vpop.f32.mrb[0].mxu0
      %v1390 = vadd.f32 0.0, %v1389
      %v1391 = vpop.f32.mrb[0].mxu0
      %1392 = vmatprep.mubr.bf16.mxu0 0
      %1393 = vmatmul.mubr.bf16.gmra.mrb[0].mxu0 %v1245
      %v1394 = vpop.f32.mrb[0].mxu0
      %v1395 = vadd.f32 0.0, %v1394
      %v1396 = vpop.f32.mrb[0].mxu0
      %v1397 = vpop.f32.mrb[0].mxu0
      %v1398 = vadd.f32 0.0, %v1397
      %v1399 = vpop.f32.mrb[0].mxu0
      %1400 = vmatprep.mubr.bf16.mxu0 0
      %1401 = vmatmul.mubr.bf16.gmra.mrb[0].mxu0 %v1246
      %v1402 = vpop.f32.mrb[0].mxu0
      %v1403 = vadd.f32 0.0, %v1402
      %v1404 = vpop.f32.mrb[0].mxu0
      %v1405 = vpop.f32.mrb[0].mxu0
      %v1406 = vadd.f32 0.0, %v1405
      %v1407 = vpop.f32.mrb[0].mxu0
      %1408 = vmatprep.mubr.bf16.mxu0 0
      %1409 = vmatmul.mubr.bf16.gmra.mrb[0].mxu0 %v1247
      %v1410 = vpop.f32.mrb[0].mxu0
      %v1411 = vadd.f32 0.0, %v1410
      %v1412 = vpop.f32.mrb[0].mxu0
      %v1413 = vpop.f32.mrb[0].mxu0
      %v1414 = vadd.f32 0.0, %v1413
      %v1415 = vpop.f32.mrb[0].mxu0
      %1416 = vmatprep.mubr.bf16.mxu0 0
      %1417 = vmatmul.mubr.bf16.gmra.mrb[0].mxu0 %v1248
      %v1418 = vpop.f32.mrb[0].mxu0
      %v1419 = vadd.f32 0.0, %v1418
      %v1420 = vpop.f32.mrb[0].mxu0
      %v1421 = vpop.f32.mrb[0].mxu0
      %v1422 = vadd.f32 0.0, %v1421
      %v1423 = vpop.f32.mrb[0].mxu0
      %1424 = vmatprep.mubr.bf16.mxu0 0
      %1425 = vmatmul.mubr.bf16.gmra.mrb[0].mxu0 %v1249
      %v1426 = vpop.f32.mrb[0].mxu0
      %v1427 = vadd.f32 0.0, %v1426
      %v1428 = vpop.f32.mrb[0].mxu0
      %v1429 = vpop.f32.mrb[0].mxu0
      %v1430 = vadd.f32 0.0, %v1429
      %v1431 = vpop.f32.mrb[0].mxu0
      %1432 = vmatprep.mubr.bf16.mxu0 0
      %1433 = vmatmul.mubr.bf16.gmra.mrb[0].mxu0 %v1250
      %v1434 = vpop.f32.mrb[0].mxu0
      %v1435 = vadd.f32 0.0, %v1434
      %v1436 = vpop.f32.mrb[0].mxu0
      %v1437 = vpop.f32.mrb[0].mxu0
      %v1438 = vadd.f32 0.0, %v1437
      %v1439 = vpop.f32.mrb[0].mxu0
      %1440 = vmatprep.mubr.bf16.mxu0 0
      %1441 = vmatmul.mubr.bf16.gmra.mrb[0].mxu0 %v1251
      %v1442 = vpop.f32.mrb[0].mxu0
      %v1443 = vadd.f32 0.0, %v1442
      %v1444 = vpop.f32.mrb[0].mxu0
      %v1445 = vpop.f32.mrb[0].mxu0
      %v1446 = vadd.f32 0.0, %v1445
      %v1447 = vpop.f32.mrb[0].mxu0
      %1448 = vmatprep.mubr.bf16.mxu0 0
      %1449 = vmatmul.mubr.bf16.gmra.mrb[0].mxu0 %v1252
      %v1450 = vpop.f32.mrb[0].mxu0
      %v1451 = vadd.f32 0.0, %v1450
      %v1452 = vpop.f32.mrb[0].mxu0
      %v1453 = vpop.f32.mrb[0].mxu0
      %v1454 = vadd.f32 0.0, %v1453
      %v1455 = vpop.f32.mrb[0].mxu0
      %1456 = vmatprep.mubr.bf16.mxu0 0
      %1457 = vmatmul.mubr.bf16.gmra.mrb[0].mxu0 %v1253
      %v1458 = vpop.f32.mrb[0].mxu0
      %v1459 = vadd.f32 0.0, %v1458
      %v1460 = vpop.f32.mrb[0].mxu0
      %v1461 = vpop.f32.mrb[0].mxu0
      %v1462 = vadd.f32 0.0, %v1461
      %v1463 = vpop.f32.mrb[0].mxu0
      %1464 = vmatprep.mubr.bf16.mxu0 0
      %1465 = vmatmul.mubr.bf16.gmra.mrb[0].mxu0 %v1254
      %v1466 = vpop.f32.mrb[0].mxu0
      %v1467 = vadd.f32 0.0, %v1466
      %v1468 = vpop.f32.mrb[0].mxu0
      %v1469 = vpop.f32.mrb[0].mxu0
      %v1470 = vadd.f32 0.0, %v1469
      %v1471 = vpop.f32.mrb[0].mxu0
      %1472 = vmatprep.mubr.bf16.mxu0 0
      %1473 = vmatmul.mubr.bf16.gmra.mrb[0].mxu0 %v1255
      %v1474 = vpop.f32.mrb[0].mxu0
      %v1475 = vadd.f32 0.0, %v1474
      %v1476 = vpop.f32.mrb[0].mxu0
      %v1477 = vpop.f32.mrb[0].mxu0
      %v1478 = vadd.f32 0.0, %v1477
      %v1479 = vpop.f32.mrb[0].mxu0
      %1480 = vdwg.mxu0
      %v1481 = vadd.f32 %v1208, %v1355
      %v1482 = vadd.f32 %v1209, %v1358
      %v1483 = vadd.f32 %v1210, %v1363
      %v1484 = vadd.f32 %v1211, %v1366
      %v1485 = vadd.f32 %v1212, %v1371
      %v1486 = vadd.f32 %v1213, %v1374
      %v1487 = vadd.f32 %v1214, %v1379
      %v1488 = vadd.f32 %v1215, %v1382
      %v1489 = vadd.f32 %v1216, %v1387
      %v1490 = vadd.f32 %v1217, %v1390
      %v1491 = vadd.f32 %v1218, %v1395
      %v1492 = vadd.f32 %v1219, %v1398
      %v1493 = vadd.f32 %v1220, %v1403
      %v1494 = vadd.f32 %v1221, %v1406
      %v1495 = vadd.f32 %v1222, %v1411
      %v1496 = vadd.f32 %v1223, %v1414
      %v1497 = vadd.f32 %v1224, %v1419
      %v1498 = vadd.f32 %v1225, %v1422
      %v1499 = vadd.f32 %v1226, %v1427
      %v1500 = vadd.f32 %v1227, %v1430
      %v1501 = vadd.f32 %v1228, %v1435
      %v1502 = vadd.f32 %v1229, %v1438
      %v1503 = vadd.f32 %v1230, %v1443
      %v1504 = vadd.f32 %v1231, %v1446
      %v1505 = vadd.f32 %v1232, %v1451
      %v1506 = vadd.f32 %v1233, %v1454
      %v1507 = vadd.f32 %v1234, %v1459
      %v1508 = vadd.f32 %v1235, %v1462
      %v1509 = vadd.f32 %v1236, %v1467
      %v1510 = vadd.f32 %v1237, %v1470
      %v1511 = vadd.f32 %v1238, %v1475
      %v1512 = vadd.f32 %v1239, %v1478
      %1513 = vst [vmem:[%s305] sm:$0xff] %v1481
      %1514 = vst [vmem:[%s305 + $0x8] sm:$0xff] %v1482
      %1515 = vst [vmem:[%s305 + $0x10] sm:$0xff] %v1483
      %1516 = vst [vmem:[%s305 + $0x18] sm:$0xff] %v1484
      %1517 = vst [vmem:[%s305 + $0x20] sm:$0xff] %v1485
      %1518 = vst [vmem:[%s305 + $0x28] sm:$0xff] %v1486
      %1519 = vst [vmem:[%s305 + $0x30] sm:$0xff] %v1487
      %1520 = vst [vmem:[%s305 + $0x38] sm:$0xff] %v1488
      %1521 = vst [vmem:[%s305 + $0x40] sm:$0xff] %v1489
      %1522 = vst [vmem:[%s305 + $0x48] sm:$0xff] %v1490
      %1523 = vst [vmem:[%s305 + $0x50] sm:$0xff] %v1491
      %1524 = vst [vmem:[%s305 + $0x58] sm:$0xff] %v1492
      %1525 = vst [vmem:[%s305 + $0x60] sm:$0xff] %v1493
      %1526 = vst [vmem:[%s305 + $0x68] sm:$0xff] %v1494
      %1527 = vst [vmem:[%s305 + $0x70] sm:$0xff] %v1495
      %1528 = vst [vmem:[%s305 + $0x78] sm:$0xff] %v1496
      %1529 = vst [vmem:[%s305 + $0x80] sm:$0xff] %v1497
      %1530 = vst [vmem:[%s305 + $0x88] sm:$0xff] %v1498
      %1531 = vst [vmem:[%s305 + $0x90] sm:$0xff] %v1499
      %1532 = vst [vmem:[%s305 + $0x98] sm:$0xff] %v1500
      %1533 = vst [vmem:[%s305 + $0xa0] sm:$0xff] %v1501
      %1534 = vst [vmem:[%s305 + $0xa8] sm:$0xff] %v1502
      %1535 = vst [vmem:[%s305 + $0xb0] sm:$0xff] %v1503
      %1536 = vst [vmem:[%s305 + $0xb8] sm:$0xff] %v1504
      %1537 = vst [vmem:[%s305 + $0xc0] sm:$0xff] %v1505
      %1538 = vst [vmem:[%s305 + $0xc8] sm:$0xff] %v1506
      %1539 = vst [vmem:[%s305 + $0xd0] sm:$0xff] %v1507
      %1540 = vst [vmem:[%s305 + $0xd8] sm:$0xff] %v1508
      %1541 = vst [vmem:[%s305 + $0xe0] sm:$0xff] %v1509
      %1542 = vst [vmem:[%s305 + $0xe8] sm:$0xff] %v1510
      %1543 = vst [vmem:[%s305 + $0xf0] sm:$0xff] %v1511
      %1544 = vst [vmem:[%s305 + $0xf8] sm:$0xff] %v1512
      %v1545 = vld [vmem:[#allocation2 + $0x1] sm:$0xff]
      %v1546 = vld [vmem:[#allocation2 + $0x9] sm:$0xff]
      %v1547 = vld [vmem:[#allocation2 + $0x19] sm:$0xff]
      %v1548 = vld [vmem:[#allocation2 + $0x21] sm:$0xff]
      %v1549 = vld [vmem:[#allocation2 + $0x31] sm:$0xff]
      %v1550 = vld [vmem:[#allocation2 + $0x39] sm:$0xff]
      %v1551 = vld [vmem:[#allocation2 + $0x49] sm:$0xff]
      %v1552 = vld [vmem:[#allocation2 + $0x51] sm:$0xff]
      %v1553 = vld [vmem:[#allocation2 + $0x61] sm:$0xff]
      %v1554 = vld [vmem:[#allocation2 + $0x69] sm:$0xff]
      %v1555 = vld [vmem:[#allocation2 + $0x79] sm:$0xff]
      %v1556 = vld [vmem:[#allocation2 + $0x81] sm:$0xff]
      %v1557 = vld [vmem:[#allocation2 + $0x91] sm:$0xff]
      %v1558 = vld [vmem:[#allocation2 + $0x99] sm:$0xff]
      %v1559 = vld [vmem:[#allocation2 + $0xa9] sm:$0xff]
      %v1560 = vld [vmem:[#allocation2 + $0xb1] sm:$0xff]
      %v1561 = vld [vmem:[#allocation2 + $0xc1] sm:$0xff]
      %v1562 = vld [vmem:[#allocation2 + $0xc9] sm:$0xff]
      %v1563 = vld [vmem:[#allocation2 + $0xd9] sm:$0xff]
      %v1564 = vld [vmem:[#allocation2 + $0xe1] sm:$0xff]
      %v1565 = vld [vmem:[#allocation2 + $0xf1] sm:$0xff]
      %v1566 = vld [vmem:[#allocation2 + $0xf9] sm:$0xff]
      %v1567 = vld [vmem:[#allocation2 + $0x109] sm:$0xff]
      %v1568 = vld [vmem:[#allocation2 + $0x111] sm:$0xff]
      %v1569 = vld [vmem:[#allocation2 + $0x121] sm:$0xff]
      %v1570 = vld [vmem:[#allocation2 + $0x129] sm:$0xff]
      %v1571 = vld [vmem:[#allocation2 + $0x139] sm:$0xff]
      %v1572 = vld [vmem:[#allocation2 + $0x141] sm:$0xff]
      %v1573 = vld [vmem:[#allocation2 + $0x151] sm:$0xff]
      %v1574 = vld [vmem:[#allocation2 + $0x159] sm:$0xff]
      %v1575 = vld [vmem:[#allocation2 + $0x169] sm:$0xff]
      %v1576 = vld [vmem:[#allocation2 + $0x171] sm:$0xff]
      %v1577 = vld [vmem:[%s305] sm:$0xff]
      %v1578 = vld [vmem:[%s305 + $0x8] sm:$0xff]
      %v1579 = vld [vmem:[%s305 + $0x10] sm:$0xff]
      %v1580 = vld [vmem:[%s305 + $0x18] sm:$0xff]
      %v1581 = vld [vmem:[%s305 + $0x20] sm:$0xff]
      %v1582 = vld [vmem:[%s305 + $0x28] sm:$0xff]
      %v1583 = vld [vmem:[%s305 + $0x30] sm:$0xff]
      %v1584 = vld [vmem:[%s305 + $0x38] sm:$0xff]
      %v1585 = vld [vmem:[%s305 + $0x40] sm:$0xff]
      %v1586 = vld [vmem:[%s305 + $0x48] sm:$0xff]
      %v1587 = vld [vmem:[%s305 + $0x50] sm:$0xff]
      %v1588 = vld [vmem:[%s305 + $0x58] sm:$0xff]
      %v1589 = vld [vmem:[%s305 + $0x60] sm:$0xff]
      %v1590 = vld [vmem:[%s305 + $0x68] sm:$0xff]
      %v1591 = vld [vmem:[%s305 + $0x70] sm:$0xff]
      %v1592 = vld [vmem:[%s305 + $0x78] sm:$0xff]
      %v1593 = vld [vmem:[%s305 + $0x80] sm:$0xff]
      %v1594 = vld [vmem:[%s305 + $0x88] sm:$0xff]
      %v1595 = vld [vmem:[%s305 + $0x90] sm:$0xff]
      %v1596 = vld [vmem:[%s305 + $0x98] sm:$0xff]
      %v1597 = vld [vmem:[%s305 + $0xa0] sm:$0xff]
      %v1598 = vld [vmem:[%s305 + $0xa8] sm:$0xff]
      %v1599 = vld [vmem:[%s305 + $0xb0] sm:$0xff]
      %v1600 = vld [vmem:[%s305 + $0xb8] sm:$0xff]
      %v1601 = vld [vmem:[%s305 + $0xc0] sm:$0xff]
      %v1602 = vld [vmem:[%s305 + $0xc8] sm:$0xff]
      %v1603 = vld [vmem:[%s305 + $0xd0] sm:$0xff]
      %v1604 = vld [vmem:[%s305 + $0xd8] sm:$0xff]
      %v1605 = vld [vmem:[%s305 + $0xe0] sm:$0xff]
      %v1606 = vld [vmem:[%s305 + $0xe8] sm:$0xff]
      %v1607 = vld [vmem:[%s305 + $0xf0] sm:$0xff]
      %v1608 = vld [vmem:[%s305 + $0xf8] sm:$0xff]
      %v1609 = vpack.c.bf16 %v1546, %v1545
      %v1610 = vpack.c.bf16 %v1548, %v1547
      %v1611 = vpack.c.bf16 %v1550, %v1549
      %v1612 = vpack.c.bf16 %v1552, %v1551
      %v1613 = vpack.c.bf16 %v1554, %v1553
      %v1614 = vpack.c.bf16 %v1556, %v1555
      %v1615 = vpack.c.bf16 %v1558, %v1557
      %v1616 = vpack.c.bf16 %v1560, %v1559
      %v1617 = vpack.c.bf16 %v1562, %v1561
      %v1618 = vpack.c.bf16 %v1564, %v1563
      %v1619 = vpack.c.bf16 %v1566, %v1565
      %v1620 = vpack.c.bf16 %v1568, %v1567
      %v1621 = vpack.c.bf16 %v1570, %v1569
      %v1622 = vpack.c.bf16 %v1572, %v1571
      %v1623 = vpack.c.bf16 %v1574, %v1573
      %v1624 = vpack.c.bf16 %v1576, %v1575
      %s1625 = scalar_lea.vmem %s3, 64
      %v1626 = vld [vmem:[%s1625] sm:$0xf]
      %v1627 = vld [vmem:[%s1625 + $0x4] sm:$0xf]
      %v1628 = vld [vmem:[%s1625 + $0x8] sm:$0xf]
      %v1629 = vld [vmem:[%s1625 + $0xc] sm:$0xf]
      %v1630 = vld [vmem:[%s1625 + $0x10] sm:$0xf]
      %v1631 = vld [vmem:[%s1625 + $0x14] sm:$0xf]
      %v1632 = vld [vmem:[%s1625 + $0x18] sm:$0xf]
      %v1633 = vld [vmem:[%s1625 + $0x1c] sm:$0xf]
      %v1634 = vld [vmem:[%s1625 + $0x20] sm:$0xf]
      %v1635 = vld [vmem:[%s1625 + $0x24] sm:$0xf]
      %v1636 = vld [vmem:[%s1625 + $0x28] sm:$0xf]
      %v1637 = vld [vmem:[%s1625 + $0x2c] sm:$0xf]
      %v1638 = vld [vmem:[%s1625 + $0x30] sm:$0xf]
      %v1639 = vld [vmem:[%s1625 + $0x34] sm:$0xf]
      %v1640 = vld [vmem:[%s1625 + $0x38] sm:$0xf]
      %v1641 = vld [vmem:[%s1625 + $0x3c] sm:$0xf]
      %v1658 = vunpack.c.l.b16 %v1626
      %v1659 = vunpack.c.l.b16 %v1627
      %v1660 = vunpack.c.l.b16 %v1628
      %v1661 = vunpack.c.l.b16 %v1629
      %v1662 = vunpack.c.l.b16 %v1630
      %v1663 = vunpack.c.l.b16 %v1631
      %v1664 = vunpack.c.l.b16 %v1632
      %v1665 = vunpack.c.l.b16 %v1633
      %v1666 = vunpack.c.l.b16 %v1634
      %v1667 = vunpack.c.l.b16 %v1635
      %v1668 = vunpack.c.l.b16 %v1636
      %v1669 = vunpack.c.l.b16 %v1637
      %v1670 = vunpack.c.l.b16 %v1638
      %v1671 = vunpack.c.l.b16 %v1639
      %v1672 = vunpack.c.l.b16 %v1640
      %v1673 = vunpack.c.l.b16 %v1641
      %v1674 = vpack.c.b16 %v1659, %v1658
      %v1675 = vpack.c.b16 %v1661, %v1660
      %v1676 = vpack.c.b16 %v1663, %v1662
      %v1677 = vpack.c.b16 %v1665, %v1664
      %v1678 = vpack.c.b16 %v1667, %v1666
      %v1679 = vpack.c.b16 %v1669, %v1668
      %v1680 = vpack.c.b16 %v1671, %v1670
      %v1681 = vpack.c.b16 %v1673, %v1672
      %1690 = vmatprep.subr.bf16.mxu0 0
      %1691 = vmatpush1.bf16.msra.mxu0 %v1674
      %1692 = vmatprep.subr.bf16.mxu0 0
      %1693 = vmatpush1.bf16.msra.mxu0 %v1675
      %1694 = vmatprep.subr.bf16.mxu0 0
      %1695 = vmatpush1.bf16.msra.mxu0 %v1676
      %1696 = vmatprep.subr.bf16.mxu0 0
      %1697 = vmatpush1.bf16.msra.mxu0 %v1677
      %1698 = vmatprep.subr.bf16.mxu0 0
      %1699 = vmatpush1.bf16.msra.mxu0 %v1678
      %1700 = vmatprep.subr.bf16.mxu0 0
      %1701 = vmatpush1.bf16.msra.mxu0 %v1679
      %1702 = vmatprep.subr.bf16.mxu0 0
      %1703 = vmatpush1.bf16.msra.mxu0 %v1680
      %1704 = vmatprep.subr.bf16.mxu0 0
      %1705 = vmatpush1.bf16.msra.mxu0 %v1681
      %1706 = vmatprep.subr.bf16.mxu0 0
      %1707 = vmatpush1.bf16.msra.mxu0 0
      %1708 = vmatprep.subr.bf16.mxu0 0
      %1709 = vmatpush1.bf16.msra.mxu0 0
      %1710 = vmatprep.subr.bf16.mxu0 0
      %1711 = vmatpush1.bf16.msra.mxu0 0
      %1712 = vmatprep.subr.bf16.mxu0 0
      %1713 = vmatpush1.bf16.msra.mxu0 0
      %1714 = vmatprep.subr.bf16.mxu0 0
      %1715 = vmatpush1.bf16.msra.mxu0 0
      %1716 = vmatprep.subr.bf16.mxu0 0
      %1717 = vmatpush1.bf16.msra.mxu0 0
      %1718 = vmatprep.subr.bf16.mxu0 0
      %1719 = vmatpush1.bf16.msra.mxu0 0
      %1720 = vmatprep.subr.bf16.mxu0 0
      %1721 = vmatpush1.bf16.msra.mxu0 0
      %1722 = vmatprep.mubr.bf16.mxu0 0
      %1723 = vmatmul.mubr.bf16.gmra.mrb[0].mxu0 %v1609
      %v1724 = vpop.f32.mrb[0].mxu0
      %v1725 = vadd.f32 0.0, %v1724
      %v1726 = vpop.f32.mrb[0].mxu0
      %v1727 = vpop.f32.mrb[0].mxu0
      %v1728 = vadd.f32 0.0, %v1727
      %v1729 = vpop.f32.mrb[0].mxu0
      %1730 = vmatprep.mubr.bf16.mxu0 0
      %1731 = vmatmul.mubr.bf16.gmra.mrb[0].mxu0 %v1610
      %v1732 = vpop.f32.mrb[0].mxu0
      %v1733 = vadd.f32 0.0, %v1732
      %v1734 = vpop.f32.mrb[0].mxu0
      %v1735 = vpop.f32.mrb[0].mxu0
      %v1736 = vadd.f32 0.0, %v1735
      %v1737 = vpop.f32.mrb[0].mxu0
      %1738 = vmatprep.mubr.bf16.mxu0 0
      %1739 = vmatmul.mubr.bf16.gmra.mrb[0].mxu0 %v1611
      %v1740 = vpop.f32.mrb[0].mxu0
      %v1741 = vadd.f32 0.0, %v1740
      %v1742 = vpop.f32.mrb[0].mxu0
      %v1743 = vpop.f32.mrb[0].mxu0
      %v1744 = vadd.f32 0.0, %v1743
      %v1745 = vpop.f32.mrb[0].mxu0
      %1746 = vmatprep.mubr.bf16.mxu0 0
      %1747 = vmatmul.mubr.bf16.gmra.mrb[0].mxu0 %v1612
      %v1748 = vpop.f32.mrb[0].mxu0
      %v1749 = vadd.f32 0.0, %v1748
      %v1750 = vpop.f32.mrb[0].mxu0
      %v1751 = vpop.f32.mrb[0].mxu0
      %v1752 = vadd.f32 0.0, %v1751
      %v1753 = vpop.f32.mrb[0].mxu0
      %1754 = vmatprep.mubr.bf16.mxu0 0
      %1755 = vmatmul.mubr.bf16.gmra.mrb[0].mxu0 %v1613
      %v1756 = vpop.f32.mrb[0].mxu0
      %v1757 = vadd.f32 0.0, %v1756
      %v1758 = vpop.f32.mrb[0].mxu0
      %v1759 = vpop.f32.mrb[0].mxu0
      %v1760 = vadd.f32 0.0, %v1759
      %v1761 = vpop.f32.mrb[0].mxu0
      %1762 = vmatprep.mubr.bf16.mxu0 0
      %1763 = vmatmul.mubr.bf16.gmra.mrb[0].mxu0 %v1614
      %v1764 = vpop.f32.mrb[0].mxu0
      %v1765 = vadd.f32 0.0, %v1764
      %v1766 = vpop.f32.mrb[0].mxu0
      %v1767 = vpop.f32.mrb[0].mxu0
      %v1768 = vadd.f32 0.0, %v1767
      %v1769 = vpop.f32.mrb[0].mxu0
      %1770 = vmatprep.mubr.bf16.mxu0 0
      %1771 = vmatmul.mubr.bf16.gmra.mrb[0].mxu0 %v1615
      %v1772 = vpop.f32.mrb[0].mxu0
      %v1773 = vadd.f32 0.0, %v1772
      %v1774 = vpop.f32.mrb[0].mxu0
      %v1775 = vpop.f32.mrb[0].mxu0
      %v1776 = vadd.f32 0.0, %v1775
      %v1777 = vpop.f32.mrb[0].mxu0
      %1778 = vmatprep.mubr.bf16.mxu0 0
      %1779 = vmatmul.mubr.bf16.gmra.mrb[0].mxu0 %v1616
      %v1780 = vpop.f32.mrb[0].mxu0
      %v1781 = vadd.f32 0.0, %v1780
      %v1782 = vpop.f32.mrb[0].mxu0
      %v1783 = vpop.f32.mrb[0].mxu0
      %v1784 = vadd.f32 0.0, %v1783
      %v1785 = vpop.f32.mrb[0].mxu0
      %1786 = vmatprep.mubr.bf16.mxu0 0
      %1787 = vmatmul.mubr.bf16.gmra.mrb[0].mxu0 %v1617
      %v1788 = vpop.f32.mrb[0].mxu0
      %v1789 = vadd.f32 0.0, %v1788
      %v1790 = vpop.f32.mrb[0].mxu0
      %v1791 = vpop.f32.mrb[0].mxu0
      %v1792 = vadd.f32 0.0, %v1791
      %v1793 = vpop.f32.mrb[0].mxu0
      %1794 = vmatprep.mubr.bf16.mxu0 0
      %1795 = vmatmul.mubr.bf16.gmra.mrb[0].mxu0 %v1618
      %v1796 = vpop.f32.mrb[0].mxu0
      %v1797 = vadd.f32 0.0, %v1796
      %v1798 = vpop.f32.mrb[0].mxu0
      %v1799 = vpop.f32.mrb[0].mxu0
      %v1800 = vadd.f32 0.0, %v1799
      %v1801 = vpop.f32.mrb[0].mxu0
      %1802 = vmatprep.mubr.bf16.mxu0 0
      %1803 = vmatmul.mubr.bf16.gmra.mrb[0].mxu0 %v1619
      %v1804 = vpop.f32.mrb[0].mxu0
      %v1805 = vadd.f32 0.0, %v1804
      %v1806 = vpop.f32.mrb[0].mxu0
      %v1807 = vpop.f32.mrb[0].mxu0
      %v1808 = vadd.f32 0.0, %v1807
      %v1809 = vpop.f32.mrb[0].mxu0
      %1810 = vmatprep.mubr.bf16.mxu0 0
      %1811 = vmatmul.mubr.bf16.gmra.mrb[0].mxu0 %v1620
      %v1812 = vpop.f32.mrb[0].mxu0
      %v1813 = vadd.f32 0.0, %v1812
      %v1814 = vpop.f32.mrb[0].mxu0
      %v1815 = vpop.f32.mrb[0].mxu0
      %v1816 = vadd.f32 0.0, %v1815
      %v1817 = vpop.f32.mrb[0].mxu0
      %1818 = vmatprep.mubr.bf16.mxu0 0
      %1819 = vmatmul.mubr.bf16.gmra.mrb[0].mxu0 %v1621
      %v1820 = vpop.f32.mrb[0].mxu0
      %v1821 = vadd.f32 0.0, %v1820
      %v1822 = vpop.f32.mrb[0].mxu0
      %v1823 = vpop.f32.mrb[0].mxu0
      %v1824 = vadd.f32 0.0, %v1823
      %v1825 = vpop.f32.mrb[0].mxu0
      %1826 = vmatprep.mubr.bf16.mxu0 0
      %1827 = vmatmul.mubr.bf16.gmra.mrb[0].mxu0 %v1622
      %v1828 = vpop.f32.mrb[0].mxu0
      %v1829 = vadd.f32 0.0, %v1828
      %v1830 = vpop.f32.mrb[0].mxu0
      %v1831 = vpop.f32.mrb[0].mxu0
      %v1832 = vadd.f32 0.0, %v1831
      %v1833 = vpop.f32.mrb[0].mxu0
      %1834 = vmatprep.mubr.bf16.mxu0 0
      %1835 = vmatmul.mubr.bf16.gmra.mrb[0].mxu0 %v1623
      %v1836 = vpop.f32.mrb[0].mxu0
      %v1837 = vadd.f32 0.0, %v1836
      %v1838 = vpop.f32.mrb[0].mxu0
      %v1839 = vpop.f32.mrb[0].mxu0
      %v1840 = vadd.f32 0.0, %v1839
      %v1841 = vpop.f32.mrb[0].mxu0
      %1842 = vmatprep.mubr.bf16.mxu0 0
      %1843 = vmatmul.mubr.bf16.gmra.mrb[0].mxu0 %v1624
      %v1844 = vpop.f32.mrb[0].mxu0
      %v1845 = vadd.f32 0.0, %v1844
      %v1846 = vpop.f32.mrb[0].mxu0
      %v1847 = vpop.f32.mrb[0].mxu0
      %v1848 = vadd.f32 0.0, %v1847
      %v1849 = vpop.f32.mrb[0].mxu0
      %1850 = vdwg.mxu0
      %v1851 = vadd.f32 %v1577, %v1725
      %v1852 = vadd.f32 %v1578, %v1728
      %v1853 = vadd.f32 %v1579, %v1733
      %v1854 = vadd.f32 %v1580, %v1736
      %v1855 = vadd.f32 %v1581, %v1741
      %v1856 = vadd.f32 %v1582, %v1744
      %v1857 = vadd.f32 %v1583, %v1749
      %v1858 = vadd.f32 %v1584, %v1752
      %v1859 = vadd.f32 %v1585, %v1757
      %v1860 = vadd.f32 %v1586, %v1760
      %v1861 = vadd.f32 %v1587, %v1765
      %v1862 = vadd.f32 %v1588, %v1768
      %v1863 = vadd.f32 %v1589, %v1773
      %v1864 = vadd.f32 %v1590, %v1776
      %v1865 = vadd.f32 %v1591, %v1781
      %v1866 = vadd.f32 %v1592, %v1784
      %v1867 = vadd.f32 %v1593, %v1789
      %v1868 = vadd.f32 %v1594, %v1792
      %v1869 = vadd.f32 %v1595, %v1797
      %v1870 = vadd.f32 %v1596, %v1800
      %v1871 = vadd.f32 %v1597, %v1805
      %v1872 = vadd.f32 %v1598, %v1808
      %v1873 = vadd.f32 %v1599, %v1813
      %v1874 = vadd.f32 %v1600, %v1816
      %v1875 = vadd.f32 %v1601, %v1821
      %v1876 = vadd.f32 %v1602, %v1824
      %v1877 = vadd.f32 %v1603, %v1829
      %v1878 = vadd.f32 %v1604, %v1832
      %v1879 = vadd.f32 %v1605, %v1837
      %v1880 = vadd.f32 %v1606, %v1840
      %v1881 = vadd.f32 %v1607, %v1845
      %v1882 = vadd.f32 %v1608, %v1848
      %1883 = vst [vmem:[%s305] sm:$0xff] %v1851
      %1884 = vst [vmem:[%s305 + $0x8] sm:$0xff] %v1852
      %1885 = vst [vmem:[%s305 + $0x10] sm:$0xff] %v1853
      %1886 = vst [vmem:[%s305 + $0x18] sm:$0xff] %v1854
      %1887 = vst [vmem:[%s305 + $0x20] sm:$0xff] %v1855
      %1888 = vst [vmem:[%s305 + $0x28] sm:$0xff] %v1856
      %1889 = vst [vmem:[%s305 + $0x30] sm:$0xff] %v1857
      %1890 = vst [vmem:[%s305 + $0x38] sm:$0xff] %v1858
      %1891 = vst [vmem:[%s305 + $0x40] sm:$0xff] %v1859
      %1892 = vst [vmem:[%s305 + $0x48] sm:$0xff] %v1860
      %1893 = vst [vmem:[%s305 + $0x50] sm:$0xff] %v1861
      %1894 = vst [vmem:[%s305 + $0x58] sm:$0xff] %v1862
      %1895 = vst [vmem:[%s305 + $0x60] sm:$0xff] %v1863
      %1896 = vst [vmem:[%s305 + $0x68] sm:$0xff] %v1864
      %1897 = vst [vmem:[%s305 + $0x70] sm:$0xff] %v1865
      %1898 = vst [vmem:[%s305 + $0x78] sm:$0xff] %v1866
      %1899 = vst [vmem:[%s305 + $0x80] sm:$0xff] %v1867
      %1900 = vst [vmem:[%s305 + $0x88] sm:$0xff] %v1868
      %1901 = vst [vmem:[%s305 + $0x90] sm:$0xff] %v1869
      %1902 = vst [vmem:[%s305 + $0x98] sm:$0xff] %v1870
      %1903 = vst [vmem:[%s305 + $0xa0] sm:$0xff] %v1871
      %1904 = vst [vmem:[%s305 + $0xa8] sm:$0xff] %v1872
      %1905 = vst [vmem:[%s305 + $0xb0] sm:$0xff] %v1873
      %1906 = vst [vmem:[%s305 + $0xb8] sm:$0xff] %v1874
      %1907 = vst [vmem:[%s305 + $0xc0] sm:$0xff] %v1875
      %1908 = vst [vmem:[%s305 + $0xc8] sm:$0xff] %v1876
      %1909 = vst [vmem:[%s305 + $0xd0] sm:$0xff] %v1877
      %1910 = vst [vmem:[%s305 + $0xd8] sm:$0xff] %v1878
      %1911 = vst [vmem:[%s305 + $0xe0] sm:$0xff] %v1879
      %1912 = vst [vmem:[%s305 + $0xe8] sm:$0xff] %v1880
      %1913 = vst [vmem:[%s305 + $0xf0] sm:$0xff] %v1881
      %1914 = vst [vmem:[%s305 + $0xf8] sm:$0xff] %v1882
      %v1915 = vld [vmem:[#allocation2 + $0x2] sm:$0xff]
      %v1916 = vld [vmem:[#allocation2 + $0xa] sm:$0xff]
      %v1917 = vld [vmem:[#allocation2 + $0x1a] sm:$0xff]
      %v1918 = vld [vmem:[#allocation2 + $0x22] sm:$0xff]
      %v1919 = vld [vmem:[#allocation2 + $0x32] sm:$0xff]
      %v1920 = vld [vmem:[#allocation2 + $0x3a] sm:$0xff]
      %v1921 = vld [vmem:[#allocation2 + $0x4a] sm:$0xff]
      %v1922 = vld [vmem:[#allocation2 + $0x52] sm:$0xff]
      %v1923 = vld [vmem:[#allocation2 + $0x62] sm:$0xff]
      %v1924 = vld [vmem:[#allocation2 + $0x6a] sm:$0xff]
      %v1925 = vld [vmem:[#allocation2 + $0x7a] sm:$0xff]
      %v1926 = vld [vmem:[#allocation2 + $0x82] sm:$0xff]
      %v1927 = vld [vmem:[#allocation2 + $0x92] sm:$0xff]
      %v1928 = vld [vmem:[#allocation2 + $0x9a] sm:$0xff]
      %v1929 = vld [vmem:[#allocation2 + $0xaa] sm:$0xff]
      %v1930 = vld [vmem:[#allocation2 + $0xb2] sm:$0xff]
      %v1931 = vld [vmem:[#allocation2 + $0xc2] sm:$0xff]
      %v1932 = vld [vmem:[#allocation2 + $0xca] sm:$0xff]
      %v1933 = vld [vmem:[#allocation2 + $0xda] sm:$0xff]
      %v1934 = vld [vmem:[#allocation2 + $0xe2] sm:$0xff]
      %v1935 = vld [vmem:[#allocation2 + $0xf2] sm:$0xff]
      %v1936 = vld [vmem:[#allocation2 + $0xfa] sm:$0xff]
      %v1937 = vld [vmem:[#allocation2 + $0x10a] sm:$0xff]
      %v1938 = vld [vmem:[#allocation2 + $0x112] sm:$0xff]
      %v1939 = vld [vmem:[#allocation2 + $0x122] sm:$0xff]
      %v1940 = vld [vmem:[#allocation2 + $0x12a] sm:$0xff]
      %v1941 = vld [vmem:[#allocation2 + $0x13a] sm:$0xff]
      %v1942 = vld [vmem:[#allocation2 + $0x142] sm:$0xff]
      %v1943 = vld [vmem:[#allocation2 + $0x152] sm:$0xff]
      %v1944 = vld [vmem:[#allocation2 + $0x15a] sm:$0xff]
      %v1945 = vld [vmem:[#allocation2 + $0x16a] sm:$0xff]
      %v1946 = vld [vmem:[#allocation2 + $0x172] sm:$0xff]
      %v1947 = vld [vmem:[%s305] sm:$0xff]
      %v1948 = vld [vmem:[%s305 + $0x8] sm:$0xff]
      %v1949 = vld [vmem:[%s305 + $0x10] sm:$0xff]
      %v1950 = vld [vmem:[%s305 + $0x18] sm:$0xff]
      %v1951 = vld [vmem:[%s305 + $0x20] sm:$0xff]
      %v1952 = vld [vmem:[%s305 + $0x28] sm:$0xff]
      %v1953 = vld [vmem:[%s305 + $0x30] sm:$0xff]
      %v1954 = vld [vmem:[%s305 + $0x38] sm:$0xff]
      %v1955 = vld [vmem:[%s305 + $0x40] sm:$0xff]
      %v1956 = vld [vmem:[%s305 + $0x48] sm:$0xff]
      %v1957 = vld [vmem:[%s305 + $0x50] sm:$0xff]
      %v1958 = vld [vmem:[%s305 + $0x58] sm:$0xff]
      %v1959 = vld [vmem:[%s305 + $0x60] sm:$0xff]
      %v1960 = vld [vmem:[%s305 + $0x68] sm:$0xff]
      %v1961 = vld [vmem:[%s305 + $0x70] sm:$0xff]
      %v1962 = vld [vmem:[%s305 + $0x78] sm:$0xff]
      %v1963 = vld [vmem:[%s305 + $0x80] sm:$0xff]
      %v1964 = vld [vmem:[%s305 + $0x88] sm:$0xff]
      %v1965 = vld [vmem:[%s305 + $0x90] sm:$0xff]
      %v1966 = vld [vmem:[%s305 + $0x98] sm:$0xff]
      %v1967 = vld [vmem:[%s305 + $0xa0] sm:$0xff]
      %v1968 = vld [vmem:[%s305 + $0xa8] sm:$0xff]
      %v1969 = vld [vmem:[%s305 + $0xb0] sm:$0xff]
      %v1970 = vld [vmem:[%s305 + $0xb8] sm:$0xff]
      %v1971 = vld [vmem:[%s305 + $0xc0] sm:$0xff]
      %v1972 = vld [vmem:[%s305 + $0xc8] sm:$0xff]
      %v1973 = vld [vmem:[%s305 + $0xd0] sm:$0xff]
      %v1974 = vld [vmem:[%s305 + $0xd8] sm:$0xff]
      %v1975 = vld [vmem:[%s305 + $0xe0] sm:$0xff]
      %v1976 = vld [vmem:[%s305 + $0xe8] sm:$0xff]
      %v1977 = vld [vmem:[%s305 + $0xf0] sm:$0xff]
      %v1978 = vld [vmem:[%s305 + $0xf8] sm:$0xff]
      %v1979 = vpack.c.bf16 %v1916, %v1915
      %v1980 = vpack.c.bf16 %v1918, %v1917
      %v1981 = vpack.c.bf16 %v1920, %v1919
      %v1982 = vpack.c.bf16 %v1922, %v1921
      %v1983 = vpack.c.bf16 %v1924, %v1923
      %v1984 = vpack.c.bf16 %v1926, %v1925
      %v1985 = vpack.c.bf16 %v1928, %v1927
      %v1986 = vpack.c.bf16 %v1930, %v1929
      %v1987 = vpack.c.bf16 %v1932, %v1931
      %v1988 = vpack.c.bf16 %v1934, %v1933
      %v1989 = vpack.c.bf16 %v1936, %v1935
      %v1990 = vpack.c.bf16 %v1938, %v1937
      %v1991 = vpack.c.bf16 %v1940, %v1939
      %v1992 = vpack.c.bf16 %v1942, %v1941
      %v1993 = vpack.c.bf16 %v1944, %v1943
      %v1994 = vpack.c.bf16 %v1946, %v1945
      %s1995 = scalar_lea.vmem %s3, 128
      %v1996 = vld [vmem:[%s1995] sm:$0xf]
      %v1997 = vld [vmem:[%s1995 + $0x4] sm:$0xf]
      %v1998 = vld [vmem:[%s1995 + $0x8] sm:$0xf]
      %v1999 = vld [vmem:[%s1995 + $0xc] sm:$0xf]
      %v2000 = vld [vmem:[%s1995 + $0x10] sm:$0xf]
      %v2001 = vld [vmem:[%s1995 + $0x14] sm:$0xf]
      %v2002 = vld [vmem:[%s1995 + $0x18] sm:$0xf]
      %v2003 = vld [vmem:[%s1995 + $0x1c] sm:$0xf]
      %v2004 = vld [vmem:[%s1995 + $0x20] sm:$0xf]
      %v2005 = vld [vmem:[%s1995 + $0x24] sm:$0xf]
      %v2006 = vld [vmem:[%s1995 + $0x28] sm:$0xf]
      %v2007 = vld [vmem:[%s1995 + $0x2c] sm:$0xf]
      %v2008 = vld [vmem:[%s1995 + $0x30] sm:$0xf]
      %v2009 = vld [vmem:[%s1995 + $0x34] sm:$0xf]
      %v2010 = vld [vmem:[%s1995 + $0x38] sm:$0xf]
      %v2011 = vld [vmem:[%s1995 + $0x3c] sm:$0xf]
      %v2028 = vunpack.c.l.b16 %v1996
      %v2029 = vunpack.c.l.b16 %v1997
      %v2030 = vunpack.c.l.b16 %v1998
      %v2031 = vunpack.c.l.b16 %v1999
      %v2032 = vunpack.c.l.b16 %v2000
      %v2033 = vunpack.c.l.b16 %v2001
      %v2034 = vunpack.c.l.b16 %v2002
      %v2035 = vunpack.c.l.b16 %v2003
      %v2036 = vunpack.c.l.b16 %v2004
      %v2037 = vunpack.c.l.b16 %v2005
      %v2038 = vunpack.c.l.b16 %v2006
      %v2039 = vunpack.c.l.b16 %v2007
      %v2040 = vunpack.c.l.b16 %v2008
      %v2041 = vunpack.c.l.b16 %v2009
      %v2042 = vunpack.c.l.b16 %v2010
      %v2043 = vunpack.c.l.b16 %v2011
      %v2044 = vpack.c.b16 %v2029, %v2028
      %v2045 = vpack.c.b16 %v2031, %v2030
      %v2046 = vpack.c.b16 %v2033, %v2032
      %v2047 = vpack.c.b16 %v2035, %v2034
      %v2048 = vpack.c.b16 %v2037, %v2036
      %v2049 = vpack.c.b16 %v2039, %v2038
      %v2050 = vpack.c.b16 %v2041, %v2040
      %v2051 = vpack.c.b16 %v2043, %v2042
      %2060 = vmatprep.subr.bf16.mxu0 0
      %2061 = vmatpush1.bf16.msra.mxu0 %v2044
      %2062 = vmatprep.subr.bf16.mxu0 0
      %2063 = vmatpush1.bf16.msra.mxu0 %v2045
      %2064 = vmatprep.subr.bf16.mxu0 0
      %2065 = vmatpush1.bf16.msra.mxu0 %v2046
      %2066 = vmatprep.subr.bf16.mxu0 0
      %2067 = vmatpush1.bf16.msra.mxu0 %v2047
      %2068 = vmatprep.subr.bf16.mxu0 0
      %2069 = vmatpush1.bf16.msra.mxu0 %v2048
      %2070 = vmatprep.subr.bf16.mxu0 0
      %2071 = vmatpush1.bf16.msra.mxu0 %v2049
      %2072 = vmatprep.subr.bf16.mxu0 0
      %2073 = vmatpush1.bf16.msra.mxu0 %v2050
      %2074 = vmatprep.subr.bf16.mxu0 0
      %2075 = vmatpush1.bf16.msra.mxu0 %v2051
      %2076 = vmatprep.subr.bf16.mxu0 0
      %2077 = vmatpush1.bf16.msra.mxu0 0
      %2078 = vmatprep.subr.bf16.mxu0 0
      %2079 = vmatpush1.bf16.msra.mxu0 0
      %2080 = vmatprep.subr.bf16.mxu0 0
      %2081 = vmatpush1.bf16.msra.mxu0 0
      %2082 = vmatprep.subr.bf16.mxu0 0
      %2083 = vmatpush1.bf16.msra.mxu0 0
      %2084 = vmatprep.subr.bf16.mxu0 0
      %2085 = vmatpush1.bf16.msra.mxu0 0
      %2086 = vmatprep.subr.bf16.mxu0 0
      %2087 = vmatpush1.bf16.msra.mxu0 0
      %2088 = vmatprep.subr.bf16.mxu0 0
      %2089 = vmatpush1.bf16.msra.mxu0 0
      %2090 = vmatprep.subr.bf16.mxu0 0
      %2091 = vmatpush1.bf16.msra.mxu0 0
      %2092 = vmatprep.mubr.bf16.mxu0 0
      %2093 = vmatmul.mubr.bf16.gmra.mrb[0].mxu0 %v1979
      %v2094 = vpop.f32.mrb[0].mxu0
      %v2095 = vadd.f32 0.0, %v2094
      %v2096 = vpop.f32.mrb[0].mxu0
      %v2097 = vpop.f32.mrb[0].mxu0
      %v2098 = vadd.f32 0.0, %v2097
      %v2099 = vpop.f32.mrb[0].mxu0
      %2100 = vmatprep.mubr.bf16.mxu0 0
      %2101 = vmatmul.mubr.bf16.gmra.mrb[0].mxu0 %v1980
      %v2102 = vpop.f32.mrb[0].mxu0
      %v2103 = vadd.f32 0.0, %v2102
      %v2104 = vpop.f32.mrb[0].mxu0
      %v2105 = vpop.f32.mrb[0].mxu0
      %v2106 = vadd.f32 0.0, %v2105
      %v2107 = vpop.f32.mrb[0].mxu0
      %2108 = vmatprep.mubr.bf16.mxu0 0
      %2109 = vmatmul.mubr.bf16.gmra.mrb[0].mxu0 %v1981
      %v2110 = vpop.f32.mrb[0].mxu0
      %v2111 = vadd.f32 0.0, %v2110
      %v2112 = vpop.f32.mrb[0].mxu0
      %v2113 = vpop.f32.mrb[0].mxu0
      %v2114 = vadd.f32 0.0, %v2113
      %v2115 = vpop.f32.mrb[0].mxu0
      %2116 = vmatprep.mubr.bf16.mxu0 0
      %2117 = vmatmul.mubr.bf16.gmra.mrb[0].mxu0 %v1982
      %v2118 = vpop.f32.mrb[0].mxu0
      %v2119 = vadd.f32 0.0, %v2118
      %v2120 = vpop.f32.mrb[0].mxu0
      %v2121 = vpop.f32.mrb[0].mxu0
      %v2122 = vadd.f32 0.0, %v2121
      %v2123 = vpop.f32.mrb[0].mxu0
      %2124 = vmatprep.mubr.bf16.mxu0 0
      %2125 = vmatmul.mubr.bf16.gmra.mrb[0].mxu0 %v1983
      %v2126 = vpop.f32.mrb[0].mxu0
      %v2127 = vadd.f32 0.0, %v2126
      %v2128 = vpop.f32.mrb[0].mxu0
      %v2129 = vpop.f32.mrb[0].mxu0
      %v2130 = vadd.f32 0.0, %v2129
      %v2131 = vpop.f32.mrb[0].mxu0
      %2132 = vmatprep.mubr.bf16.mxu0 0
      %2133 = vmatmul.mubr.bf16.gmra.mrb[0].mxu0 %v1984
      %v2134 = vpop.f32.mrb[0].mxu0
      %v2135 = vadd.f32 0.0, %v2134
      %v2136 = vpop.f32.mrb[0].mxu0
      %v2137 = vpop.f32.mrb[0].mxu0
      %v2138 = vadd.f32 0.0, %v2137
      %v2139 = vpop.f32.mrb[0].mxu0
      %2140 = vmatprep.mubr.bf16.mxu0 0
      %2141 = vmatmul.mubr.bf16.gmra.mrb[0].mxu0 %v1985
      %v2142 = vpop.f32.mrb[0].mxu0
      %v2143 = vadd.f32 0.0, %v2142
      %v2144 = vpop.f32.mrb[0].mxu0
      %v2145 = vpop.f32.mrb[0].mxu0
      %v2146 = vadd.f32 0.0, %v2145
      %v2147 = vpop.f32.mrb[0].mxu0
      %2148 = vmatprep.mubr.bf16.mxu0 0
      %2149 = vmatmul.mubr.bf16.gmra.mrb[0].mxu0 %v1986
      %v2150 = vpop.f32.mrb[0].mxu0
      %v2151 = vadd.f32 0.0, %v2150
      %v2152 = vpop.f32.mrb[0].mxu0
      %v2153 = vpop.f32.mrb[0].mxu0
      %v2154 = vadd.f32 0.0, %v2153
      %v2155 = vpop.f32.mrb[0].mxu0
      %2156 = vmatprep.mubr.bf16.mxu0 0
      %2157 = vmatmul.mubr.bf16.gmra.mrb[0].mxu0 %v1987
      %v2158 = vpop.f32.mrb[0].mxu0
      %v2159 = vadd.f32 0.0, %v2158
      %v2160 = vpop.f32.mrb[0].mxu0
      %v2161 = vpop.f32.mrb[0].mxu0
      %v2162 = vadd.f32 0.0, %v2161
      %v2163 = vpop.f32.mrb[0].mxu0
      %2164 = vmatprep.mubr.bf16.mxu0 0
      %2165 = vmatmul.mubr.bf16.gmra.mrb[0].mxu0 %v1988
      %v2166 = vpop.f32.mrb[0].mxu0
      %v2167 = vadd.f32 0.0, %v2166
      %v2168 = vpop.f32.mrb[0].mxu0
      %v2169 = vpop.f32.mrb[0].mxu0
      %v2170 = vadd.f32 0.0, %v2169
      %v2171 = vpop.f32.mrb[0].mxu0
      %2172 = vmatprep.mubr.bf16.mxu0 0
      %2173 = vmatmul.mubr.bf16.gmra.mrb[0].mxu0 %v1989
      %v2174 = vpop.f32.mrb[0].mxu0
      %v2175 = vadd.f32 0.0, %v2174
      %v2176 = vpop.f32.mrb[0].mxu0
      %v2177 = vpop.f32.mrb[0].mxu0
      %v2178 = vadd.f32 0.0, %v2177
      %v2179 = vpop.f32.mrb[0].mxu0
      %2180 = vmatprep.mubr.bf16.mxu0 0
      %2181 = vmatmul.mubr.bf16.gmra.mrb[0].mxu0 %v1990
      %v2182 = vpop.f32.mrb[0].mxu0
      %v2183 = vadd.f32 0.0, %v2182
      %v2184 = vpop.f32.mrb[0].mxu0
      %v2185 = vpop.f32.mrb[0].mxu0
      %v2186 = vadd.f32 0.0, %v2185
      %v2187 = vpop.f32.mrb[0].mxu0
      %2188 = vmatprep.mubr.bf16.mxu0 0
      %2189 = vmatmul.mubr.bf16.gmra.mrb[0].mxu0 %v1991
      %v2190 = vpop.f32.mrb[0].mxu0
      %v2191 = vadd.f32 0.0, %v2190
      %v2192 = vpop.f32.mrb[0].mxu0
      %v2193 = vpop.f32.mrb[0].mxu0
      %v2194 = vadd.f32 0.0, %v2193
      %v2195 = vpop.f32.mrb[0].mxu0
      %2196 = vmatprep.mubr.bf16.mxu0 0
      %2197 = vmatmul.mubr.bf16.gmra.mrb[0].mxu0 %v1992
      %v2198 = vpop.f32.mrb[0].mxu0
      %v2199 = vadd.f32 0.0, %v2198
      %v2200 = vpop.f32.mrb[0].mxu0
      %v2201 = vpop.f32.mrb[0].mxu0
      %v2202 = vadd.f32 0.0, %v2201
      %v2203 = vpop.f32.mrb[0].mxu0
      %2204 = vmatprep.mubr.bf16.mxu0 0
      %2205 = vmatmul.mubr.bf16.gmra.mrb[0].mxu0 %v1993
      %v2206 = vpop.f32.mrb[0].mxu0
      %v2207 = vadd.f32 0.0, %v2206
      %v2208 = vpop.f32.mrb[0].mxu0
      %v2209 = vpop.f32.mrb[0].mxu0
      %v2210 = vadd.f32 0.0, %v2209
      %v2211 = vpop.f32.mrb[0].mxu0
      %2212 = vmatprep.mubr.bf16.mxu0 0
      %2213 = vmatmul.mubr.bf16.gmra.mrb[0].mxu0 %v1994
      %v2214 = vpop.f32.mrb[0].mxu0
      %v2215 = vadd.f32 0.0, %v2214
      %v2216 = vpop.f32.mrb[0].mxu0
      %v2217 = vpop.f32.mrb[0].mxu0
      %v2218 = vadd.f32 0.0, %v2217
      %v2219 = vpop.f32.mrb[0].mxu0
      %2220 = vdwg.mxu0
      %v2221 = vadd.f32 %v1947, %v2095
      %v2222 = vadd.f32 %v1948, %v2098
      %v2223 = vadd.f32 %v1949, %v2103
      %v2224 = vadd.f32 %v1950, %v2106
      %v2225 = vadd.f32 %v1951, %v2111
      %v2226 = vadd.f32 %v1952, %v2114
      %v2227 = vadd.f32 %v1953, %v2119
      %v2228 = vadd.f32 %v1954, %v2122
      %v2229 = vadd.f32 %v1955, %v2127
      %v2230 = vadd.f32 %v1956, %v2130
      %v2231 = vadd.f32 %v1957, %v2135
      %v2232 = vadd.f32 %v1958, %v2138
      %v2233 = vadd.f32 %v1959, %v2143
      %v2234 = vadd.f32 %v1960, %v2146
      %v2235 = vadd.f32 %v1961, %v2151
      %v2236 = vadd.f32 %v1962, %v2154
      %v2237 = vadd.f32 %v1963, %v2159
      %v2238 = vadd.f32 %v1964, %v2162
      %v2239 = vadd.f32 %v1965, %v2167
      %v2240 = vadd.f32 %v1966, %v2170
      %v2241 = vadd.f32 %v1967, %v2175
      %v2242 = vadd.f32 %v1968, %v2178
      %v2243 = vadd.f32 %v1969, %v2183
      %v2244 = vadd.f32 %v1970, %v2186
      %v2245 = vadd.f32 %v1971, %v2191
      %v2246 = vadd.f32 %v1972, %v2194
      %v2247 = vadd.f32 %v1973, %v2199
      %v2248 = vadd.f32 %v1974, %v2202
      %v2249 = vadd.f32 %v1975, %v2207
      %v2250 = vadd.f32 %v1976, %v2210
      %v2251 = vadd.f32 %v1977, %v2215
      %v2252 = vadd.f32 %v1978, %v2218
      %2253 = vst [vmem:[%s305] sm:$0xff] %v2221
      %2254 = vst [vmem:[%s305 + $0x8] sm:$0xff] %v2222
      %2255 = vst [vmem:[%s305 + $0x10] sm:$0xff] %v2223
      %2256 = vst [vmem:[%s305 + $0x18] sm:$0xff] %v2224
      %2257 = vst [vmem:[%s305 + $0x20] sm:$0xff] %v2225
      %2258 = vst [vmem:[%s305 + $0x28] sm:$0xff] %v2226
      %2259 = vst [vmem:[%s305 + $0x30] sm:$0xff] %v2227
      %2260 = vst [vmem:[%s305 + $0x38] sm:$0xff] %v2228
      %2261 = vst [vmem:[%s305 + $0x40] sm:$0xff] %v2229
      %2262 = vst [vmem:[%s305 + $0x48] sm:$0xff] %v2230
      %2263 = vst [vmem:[%s305 + $0x50] sm:$0xff] %v2231
      %2264 = vst [vmem:[%s305 + $0x58] sm:$0xff] %v2232
      %2265 = vst [vmem:[%s305 + $0x60] sm:$0xff] %v2233
      %2266 = vst [vmem:[%s305 + $0x68] sm:$0xff] %v2234
      %2267 = vst [vmem:[%s305 + $0x70] sm:$0xff] %v2235
      %2268 = vst [vmem:[%s305 + $0x78] sm:$0xff] %v2236
      %2269 = vst [vmem:[%s305 + $0x80] sm:$0xff] %v2237
      %2270 = vst [vmem:[%s305 + $0x88] sm:$0xff] %v2238
      %2271 = vst [vmem:[%s305 + $0x90] sm:$0xff] %v2239
      %2272 = vst [vmem:[%s305 + $0x98] sm:$0xff] %v2240
      %2273 = vst [vmem:[%s305 + $0xa0] sm:$0xff] %v2241
      %2274 = vst [vmem:[%s305 + $0xa8] sm:$0xff] %v2242
      %2275 = vst [vmem:[%s305 + $0xb0] sm:$0xff] %v2243
      %2276 = vst [vmem:[%s305 + $0xb8] sm:$0xff] %v2244
      %2277 = vst [vmem:[%s305 + $0xc0] sm:$0xff] %v2245
      %2278 = vst [vmem:[%s305 + $0xc8] sm:$0xff] %v2246
      %2279 = vst [vmem:[%s305 + $0xd0] sm:$0xff] %v2247
      %2280 = vst [vmem:[%s305 + $0xd8] sm:$0xff] %v2248
      %2281 = vst [vmem:[%s305 + $0xe0] sm:$0xff] %v2249
      %2282 = vst [vmem:[%s305 + $0xe8] sm:$0xff] %v2250
      %2283 = vst [vmem:[%s305 + $0xf0] sm:$0xff] %v2251
      %2284 = vst [vmem:[%s305 + $0xf8] sm:$0xff] %v2252
      %v2285 = vld [vmem:[%s1104] sm:$0xff]
      %v2286 = vld [vmem:[%s1104 + $0x8] sm:$0xff]
      %v2287 = vld [vmem:[%s1104 + $0x18] sm:$0xff]
      %v2288 = vld [vmem:[%s1104 + $0x20] sm:$0xff]
      %v2289 = vld [vmem:[%s1104 + $0x30] sm:$0xff]
      %v2290 = vld [vmem:[%s1104 + $0x38] sm:$0xff]
      %v2291 = vld [vmem:[%s1104 + $0x48] sm:$0xff]
      %v2292 = vld [vmem:[%s1104 + $0x50] sm:$0xff]
      %v2293 = vld [vmem:[%s1104 + $0x60] sm:$0xff]
      %v2294 = vld [vmem:[%s1104 + $0x68] sm:$0xff]
      %v2295 = vld [vmem:[%s1104 + $0x78] sm:$0xff]
      %v2296 = vld [vmem:[%s1104 + $0x80] sm:$0xff]
      %v2297 = vld [vmem:[%s1104 + $0x90] sm:$0xff]
      %v2298 = vld [vmem:[%s1104 + $0x98] sm:$0xff]
      %v2299 = vld [vmem:[%s1104 + $0xa8] sm:$0xff]
      %v2300 = vld [vmem:[%s1104 + $0xb0] sm:$0xff]
      %v2301 = vld [vmem:[%s1104 + $0xc0] sm:$0xff]
      %v2302 = vld [vmem:[%s1104 + $0xc8] sm:$0xff]
      %v2303 = vld [vmem:[%s1104 + $0xd8] sm:$0xff]
      %v2304 = vld [vmem:[%s1104 + $0xe0] sm:$0xff]
      %v2305 = vld [vmem:[%s1104 + $0xf0] sm:$0xff]
      %v2306 = vld [vmem:[%s1104 + $0xf8] sm:$0xff]
      %v2307 = vld [vmem:[%s1104 + $0x108] sm:$0xff]
      %v2308 = vld [vmem:[%s1104 + $0x110] sm:$0xff]
      %v2309 = vld [vmem:[%s1104 + $0x120] sm:$0xff]
      %v2310 = vld [vmem:[%s1104 + $0x128] sm:$0xff]
      %v2311 = vld [vmem:[%s1104 + $0x138] sm:$0xff]
      %v2312 = vld [vmem:[%s1104 + $0x140] sm:$0xff]
      %v2313 = vld [vmem:[%s1104 + $0x150] sm:$0xff]
      %v2314 = vld [vmem:[%s1104 + $0x158] sm:$0xff]
      %v2315 = vld [vmem:[%s1104 + $0x168] sm:$0xff]
      %v2316 = vld [vmem:[%s1104 + $0x170] sm:$0xff]
      %v2317 = vld [vmem:[%s305] sm:$0xff]
      %v2318 = vld [vmem:[%s305 + $0x8] sm:$0xff]
      %v2319 = vld [vmem:[%s305 + $0x10] sm:$0xff]
      %v2320 = vld [vmem:[%s305 + $0x18] sm:$0xff]
      %v2321 = vld [vmem:[%s305 + $0x20] sm:$0xff]
      %v2322 = vld [vmem:[%s305 + $0x28] sm:$0xff]
      %v2323 = vld [vmem:[%s305 + $0x30] sm:$0xff]
      %v2324 = vld [vmem:[%s305 + $0x38] sm:$0xff]
      %v2325 = vld [vmem:[%s305 + $0x40] sm:$0xff]
      %v2326 = vld [vmem:[%s305 + $0x48] sm:$0xff]
      %v2327 = vld [vmem:[%s305 + $0x50] sm:$0xff]
      %v2328 = vld [vmem:[%s305 + $0x58] sm:$0xff]
      %v2329 = vld [vmem:[%s305 + $0x60] sm:$0xff]
      %v2330 = vld [vmem:[%s305 + $0x68] sm:$0xff]
      %v2331 = vld [vmem:[%s305 + $0x70] sm:$0xff]
      %v2332 = vld [vmem:[%s305 + $0x78] sm:$0xff]
      %v2333 = vld [vmem:[%s305 + $0x80] sm:$0xff]
      %v2334 = vld [vmem:[%s305 + $0x88] sm:$0xff]
      %v2335 = vld [vmem:[%s305 + $0x90] sm:$0xff]
      %v2336 = vld [vmem:[%s305 + $0x98] sm:$0xff]
      %v2337 = vld [vmem:[%s305 + $0xa0] sm:$0xff]
      %v2338 = vld [vmem:[%s305 + $0xa8] sm:$0xff]
      %v2339 = vld [vmem:[%s305 + $0xb0] sm:$0xff]
      %v2340 = vld [vmem:[%s305 + $0xb8] sm:$0xff]
      %v2341 = vld [vmem:[%s305 + $0xc0] sm:$0xff]
      %v2342 = vld [vmem:[%s305 + $0xc8] sm:$0xff]
      %v2343 = vld [vmem:[%s305 + $0xd0] sm:$0xff]
      %v2344 = vld [vmem:[%s305 + $0xd8] sm:$0xff]
      %v2345 = vld [vmem:[%s305 + $0xe0] sm:$0xff]
      %v2346 = vld [vmem:[%s305 + $0xe8] sm:$0xff]
      %v2347 = vld [vmem:[%s305 + $0xf0] sm:$0xff]
      %v2348 = vld [vmem:[%s305 + $0xf8] sm:$0xff]
      %v2349 = vpack.c.bf16 %v2286, %v2285
      %v2350 = vpack.c.bf16 %v2288, %v2287
      %v2351 = vpack.c.bf16 %v2290, %v2289
      %v2352 = vpack.c.bf16 %v2292, %v2291
      %v2353 = vpack.c.bf16 %v2294, %v2293
      %v2354 = vpack.c.bf16 %v2296, %v2295
      %v2355 = vpack.c.bf16 %v2298, %v2297
      %v2356 = vpack.c.bf16 %v2300, %v2299
      %v2357 = vpack.c.bf16 %v2302, %v2301
      %v2358 = vpack.c.bf16 %v2304, %v2303
      %v2359 = vpack.c.bf16 %v2306, %v2305
      %v2360 = vpack.c.bf16 %v2308, %v2307
      %v2361 = vpack.c.bf16 %v2310, %v2309
      %v2362 = vpack.c.bf16 %v2312, %v2311
      %v2363 = vpack.c.bf16 %v2314, %v2313
      %v2364 = vpack.c.bf16 %v2316, %v2315
      %s2365 = scalar_lea.vmem %s3, 192
      %v2366 = vld [vmem:[%s2365] sm:$0xf]
      %v2367 = vld [vmem:[%s2365 + $0x4] sm:$0xf]
      %v2368 = vld [vmem:[%s2365 + $0x8] sm:$0xf]
      %v2369 = vld [vmem:[%s2365 + $0xc] sm:$0xf]
      %v2370 = vld [vmem:[%s2365 + $0x10] sm:$0xf]
      %v2371 = vld [vmem:[%s2365 + $0x14] sm:$0xf]
      %v2372 = vld [vmem:[%s2365 + $0x18] sm:$0xf]
      %v2373 = vld [vmem:[%s2365 + $0x1c] sm:$0xf]
      %v2374 = vld [vmem:[%s2365 + $0x20] sm:$0xf]
      %v2375 = vld [vmem:[%s2365 + $0x24] sm:$0xf]
      %v2376 = vld [vmem:[%s2365 + $0x28] sm:$0xf]
      %v2377 = vld [vmem:[%s2365 + $0x2c] sm:$0xf]
      %v2378 = vld [vmem:[%s2365 + $0x30] sm:$0xf]
      %v2379 = vld [vmem:[%s2365 + $0x34] sm:$0xf]
      %v2380 = vld [vmem:[%s2365 + $0x38] sm:$0xf]
      %v2381 = vld [vmem:[%s2365 + $0x3c] sm:$0xf]
      %v2398 = vunpack.c.l.b16 %v2366
      %v2399 = vunpack.c.l.b16 %v2367
      %v2400 = vunpack.c.l.b16 %v2368
      %v2401 = vunpack.c.l.b16 %v2369
      %v2402 = vunpack.c.l.b16 %v2370
      %v2403 = vunpack.c.l.b16 %v2371
      %v2404 = vunpack.c.l.b16 %v2372
      %v2405 = vunpack.c.l.b16 %v2373
      %v2406 = vunpack.c.l.b16 %v2374
      %v2407 = vunpack.c.l.b16 %v2375
      %v2408 = vunpack.c.l.b16 %v2376
      %v2409 = vunpack.c.l.b16 %v2377
      %v2410 = vunpack.c.l.b16 %v2378
      %v2411 = vunpack.c.l.b16 %v2379
      %v2412 = vunpack.c.l.b16 %v2380
      %v2413 = vunpack.c.l.b16 %v2381
      %v2414 = vpack.c.b16 %v2399, %v2398
      %v2415 = vpack.c.b16 %v2401, %v2400
      %v2416 = vpack.c.b16 %v2403, %v2402
      %v2417 = vpack.c.b16 %v2405, %v2404
      %v2418 = vpack.c.b16 %v2407, %v2406
      %v2419 = vpack.c.b16 %v2409, %v2408
      %v2420 = vpack.c.b16 %v2411, %v2410
      %v2421 = vpack.c.b16 %v2413, %v2412
      %2430 = vmatprep.subr.bf16.mxu0 0
      %2431 = vmatpush1.bf16.msra.mxu0 %v2414
      %2432 = vmatprep.subr.bf16.mxu0 0
      %2433 = vmatpush1.bf16.msra.mxu0 %v2415
      %2434 = vmatprep.subr.bf16.mxu0 0
      %2435 = vmatpush1.bf16.msra.mxu0 %v2416
      %2436 = vmatprep.subr.bf16.mxu0 0
      %2437 = vmatpush1.bf16.msra.mxu0 %v2417
      %2438 = vmatprep.subr.bf16.mxu0 0
      %2439 = vmatpush1.bf16.msra.mxu0 %v2418
      %2440 = vmatprep.subr.bf16.mxu0 0
      %2441 = vmatpush1.bf16.msra.mxu0 %v2419
      %2442 = vmatprep.subr.bf16.mxu0 0
      %2443 = vmatpush1.bf16.msra.mxu0 %v2420
      %2444 = vmatprep.subr.bf16.mxu0 0
      %2445 = vmatpush1.bf16.msra.mxu0 %v2421
      %2446 = vmatprep.subr.bf16.mxu0 0
      %2447 = vmatpush1.bf16.msra.mxu0 0
      %2448 = vmatprep.subr.bf16.mxu0 0
      %2449 = vmatpush1.bf16.msra.mxu0 0
      %2450 = vmatprep.subr.bf16.mxu0 0
      %2451 = vmatpush1.bf16.msra.mxu0 0
      %2452 = vmatprep.subr.bf16.mxu0 0
      %2453 = vmatpush1.bf16.msra.mxu0 0
      %2454 = vmatprep.subr.bf16.mxu0 0
      %2455 = vmatpush1.bf16.msra.mxu0 0
      %2456 = vmatprep.subr.bf16.mxu0 0
      %2457 = vmatpush1.bf16.msra.mxu0 0
      %2458 = vmatprep.subr.bf16.mxu0 0
      %2459 = vmatpush1.bf16.msra.mxu0 0
      %2460 = vmatprep.subr.bf16.mxu0 0
      %2461 = vmatpush1.bf16.msra.mxu0 0
      %2462 = vmatprep.mubr.bf16.mxu0 0
      %2463 = vmatmul.mubr.bf16.gmra.mrb[0].mxu0 %v2349
      %v2464 = vpop.f32.mrb[0].mxu0
      %v2465 = vadd.f32 0.0, %v2464
      %v2466 = vpop.f32.mrb[0].mxu0
      %v2467 = vpop.f32.mrb[0].mxu0
      %v2468 = vadd.f32 0.0, %v2467
      %v2469 = vpop.f32.mrb[0].mxu0
      %2470 = vmatprep.mubr.bf16.mxu0 0
      %2471 = vmatmul.mubr.bf16.gmra.mrb[0].mxu0 %v2350
      %v2472 = vpop.f32.mrb[0].mxu0
      %v2473 = vadd.f32 0.0, %v2472
      %v2474 = vpop.f32.mrb[0].mxu0
      %v2475 = vpop.f32.mrb[0].mxu0
      %v2476 = vadd.f32 0.0, %v2475
      %v2477 = vpop.f32.mrb[0].mxu0
      %2478 = vmatprep.mubr.bf16.mxu0 0
      %2479 = vmatmul.mubr.bf16.gmra.mrb[0].mxu0 %v2351
      %v2480 = vpop.f32.mrb[0].mxu0
      %v2481 = vadd.f32 0.0, %v2480
      %v2482 = vpop.f32.mrb[0].mxu0
      %v2483 = vpop.f32.mrb[0].mxu0
      %v2484 = vadd.f32 0.0, %v2483
      %v2485 = vpop.f32.mrb[0].mxu0
      %2486 = vmatprep.mubr.bf16.mxu0 0
      %2487 = vmatmul.mubr.bf16.gmra.mrb[0].mxu0 %v2352
      %v2488 = vpop.f32.mrb[0].mxu0
      %v2489 = vadd.f32 0.0, %v2488
      %v2490 = vpop.f32.mrb[0].mxu0
      %v2491 = vpop.f32.mrb[0].mxu0
      %v2492 = vadd.f32 0.0, %v2491
      %v2493 = vpop.f32.mrb[0].mxu0
      %2494 = vmatprep.mubr.bf16.mxu0 0
      %2495 = vmatmul.mubr.bf16.gmra.mrb[0].mxu0 %v2353
      %v2496 = vpop.f32.mrb[0].mxu0
      %v2497 = vadd.f32 0.0, %v2496
      %v2498 = vpop.f32.mrb[0].mxu0
      %v2499 = vpop.f32.mrb[0].mxu0
      %v2500 = vadd.f32 0.0, %v2499
      %v2501 = vpop.f32.mrb[0].mxu0
      %2502 = vmatprep.mubr.bf16.mxu0 0
      %2503 = vmatmul.mubr.bf16.gmra.mrb[0].mxu0 %v2354
      %v2504 = vpop.f32.mrb[0].mxu0
      %v2505 = vadd.f32 0.0, %v2504
      %v2506 = vpop.f32.mrb[0].mxu0
      %v2507 = vpop.f32.mrb[0].mxu0
      %v2508 = vadd.f32 0.0, %v2507
      %v2509 = vpop.f32.mrb[0].mxu0
      %2510 = vmatprep.mubr.bf16.mxu0 0
      %2511 = vmatmul.mubr.bf16.gmra.mrb[0].mxu0 %v2355
      %v2512 = vpop.f32.mrb[0].mxu0
      %v2513 = vadd.f32 0.0, %v2512
      %v2514 = vpop.f32.mrb[0].mxu0
      %v2515 = vpop.f32.mrb[0].mxu0
      %v2516 = vadd.f32 0.0, %v2515
      %v2517 = vpop.f32.mrb[0].mxu0
      %2518 = vmatprep.mubr.bf16.mxu0 0
      %2519 = vmatmul.mubr.bf16.gmra.mrb[0].mxu0 %v2356
      %v2520 = vpop.f32.mrb[0].mxu0
      %v2521 = vadd.f32 0.0, %v2520
      %v2522 = vpop.f32.mrb[0].mxu0
      %v2523 = vpop.f32.mrb[0].mxu0
      %v2524 = vadd.f32 0.0, %v2523
      %v2525 = vpop.f32.mrb[0].mxu0
      %2526 = vmatprep.mubr.bf16.mxu0 0
      %2527 = vmatmul.mubr.bf16.gmra.mrb[0].mxu0 %v2357
      %v2528 = vpop.f32.mrb[0].mxu0
      %v2529 = vadd.f32 0.0, %v2528
      %v2530 = vpop.f32.mrb[0].mxu0
      %v2531 = vpop.f32.mrb[0].mxu0
      %v2532 = vadd.f32 0.0, %v2531
      %v2533 = vpop.f32.mrb[0].mxu0
      %2534 = vmatprep.mubr.bf16.mxu0 0
      %2535 = vmatmul.mubr.bf16.gmra.mrb[0].mxu0 %v2358
      %v2536 = vpop.f32.mrb[0].mxu0
      %v2537 = vadd.f32 0.0, %v2536
      %v2538 = vpop.f32.mrb[0].mxu0
      %v2539 = vpop.f32.mrb[0].mxu0
      %v2540 = vadd.f32 0.0, %v2539
      %v2541 = vpop.f32.mrb[0].mxu0
      %2542 = vmatprep.mubr.bf16.mxu0 0
      %2543 = vmatmul.mubr.bf16.gmra.mrb[0].mxu0 %v2359
      %v2544 = vpop.f32.mrb[0].mxu0
      %v2545 = vadd.f32 0.0, %v2544
      %v2546 = vpop.f32.mrb[0].mxu0
      %v2547 = vpop.f32.mrb[0].mxu0
      %v2548 = vadd.f32 0.0, %v2547
      %v2549 = vpop.f32.mrb[0].mxu0
      %2550 = vmatprep.mubr.bf16.mxu0 0
      %2551 = vmatmul.mubr.bf16.gmra.mrb[0].mxu0 %v2360
      %v2552 = vpop.f32.mrb[0].mxu0
      %v2553 = vadd.f32 0.0, %v2552
      %v2554 = vpop.f32.mrb[0].mxu0
      %v2555 = vpop.f32.mrb[0].mxu0
      %v2556 = vadd.f32 0.0, %v2555
      %v2557 = vpop.f32.mrb[0].mxu0
      %2558 = vmatprep.mubr.bf16.mxu0 0
      %2559 = vmatmul.mubr.bf16.gmra.mrb[0].mxu0 %v2361
      %v2560 = vpop.f32.mrb[0].mxu0
      %v2561 = vadd.f32 0.0, %v2560
      %v2562 = vpop.f32.mrb[0].mxu0
      %v2563 = vpop.f32.mrb[0].mxu0
      %v2564 = vadd.f32 0.0, %v2563
      %v2565 = vpop.f32.mrb[0].mxu0
      %2566 = vmatprep.mubr.bf16.mxu0 0
      %2567 = vmatmul.mubr.bf16.gmra.mrb[0].mxu0 %v2362
      %v2568 = vpop.f32.mrb[0].mxu0
      %v2569 = vadd.f32 0.0, %v2568
      %v2570 = vpop.f32.mrb[0].mxu0
      %v2571 = vpop.f32.mrb[0].mxu0
      %v2572 = vadd.f32 0.0, %v2571
      %v2573 = vpop.f32.mrb[0].mxu0
      %2574 = vmatprep.mubr.bf16.mxu0 0
      %2575 = vmatmul.mubr.bf16.gmra.mrb[0].mxu0 %v2363
      %v2576 = vpop.f32.mrb[0].mxu0
      %v2577 = vadd.f32 0.0, %v2576
      %v2578 = vpop.f32.mrb[0].mxu0
      %v2579 = vpop.f32.mrb[0].mxu0
      %v2580 = vadd.f32 0.0, %v2579
      %v2581 = vpop.f32.mrb[0].mxu0
      %2582 = vmatprep.mubr.bf16.mxu0 0
      %2583 = vmatmul.mubr.bf16.gmra.mrb[0].mxu0 %v2364
      %v2584 = vpop.f32.mrb[0].mxu0
      %v2585 = vadd.f32 0.0, %v2584
      %v2586 = vpop.f32.mrb[0].mxu0
      %v2587 = vpop.f32.mrb[0].mxu0
      %v2588 = vadd.f32 0.0, %v2587
      %v2589 = vpop.f32.mrb[0].mxu0
      %2590 = vdwg.mxu0
      %v2591 = vadd.f32 %v2317, %v2465
      %v2592 = vadd.f32 %v2318, %v2468
      %v2593 = vadd.f32 %v2319, %v2473
      %v2594 = vadd.f32 %v2320, %v2476
      %v2595 = vadd.f32 %v2321, %v2481
      %v2596 = vadd.f32 %v2322, %v2484
      %v2597 = vadd.f32 %v2323, %v2489
      %v2598 = vadd.f32 %v2324, %v2492
      %v2599 = vadd.f32 %v2325, %v2497
      %v2600 = vadd.f32 %v2326, %v2500
      %v2601 = vadd.f32 %v2327, %v2505
      %v2602 = vadd.f32 %v2328, %v2508
      %v2603 = vadd.f32 %v2329, %v2513
      %v2604 = vadd.f32 %v2330, %v2516
      %v2605 = vadd.f32 %v2331, %v2521
      %v2606 = vadd.f32 %v2332, %v2524
      %v2607 = vadd.f32 %v2333, %v2529
      %v2608 = vadd.f32 %v2334, %v2532
      %v2609 = vadd.f32 %v2335, %v2537
      %v2610 = vadd.f32 %v2336, %v2540
      %v2611 = vadd.f32 %v2337, %v2545
      %v2612 = vadd.f32 %v2338, %v2548
      %v2613 = vadd.f32 %v2339, %v2553
      %v2614 = vadd.f32 %v2340, %v2556
      %v2615 = vadd.f32 %v2341, %v2561
      %v2616 = vadd.f32 %v2342, %v2564
      %v2617 = vadd.f32 %v2343, %v2569
      %v2618 = vadd.f32 %v2344, %v2572
      %v2619 = vadd.f32 %v2345, %v2577
      %v2620 = vadd.f32 %v2346, %v2580
      %v2621 = vadd.f32 %v2347, %v2585
      %v2622 = vadd.f32 %v2348, %v2588
      %2623 = vst [vmem:[%s305] sm:$0xff] %v2591
      %2624 = vst [vmem:[%s305 + $0x8] sm:$0xff] %v2592
      %2625 = vst [vmem:[%s305 + $0x10] sm:$0xff] %v2593
      %2626 = vst [vmem:[%s305 + $0x18] sm:$0xff] %v2594
      %2627 = vst [vmem:[%s305 + $0x20] sm:$0xff] %v2595
      %2628 = vst [vmem:[%s305 + $0x28] sm:$0xff] %v2596
      %2629 = vst [vmem:[%s305 + $0x30] sm:$0xff] %v2597
      %2630 = vst [vmem:[%s305 + $0x38] sm:$0xff] %v2598
      %2631 = vst [vmem:[%s305 + $0x40] sm:$0xff] %v2599
      %2632 = vst [vmem:[%s305 + $0x48] sm:$0xff] %v2600
      %2633 = vst [vmem:[%s305 + $0x50] sm:$0xff] %v2601
      %2634 = vst [vmem:[%s305 + $0x58] sm:$0xff] %v2602
      %2635 = vst [vmem:[%s305 + $0x60] sm:$0xff] %v2603
      %2636 = vst [vmem:[%s305 + $0x68] sm:$0xff] %v2604
      %2637 = vst [vmem:[%s305 + $0x70] sm:$0xff] %v2605
      %2638 = vst [vmem:[%s305 + $0x78] sm:$0xff] %v2606
      %2639 = vst [vmem:[%s305 + $0x80] sm:$0xff] %v2607
      %2640 = vst [vmem:[%s305 + $0x88] sm:$0xff] %v2608
      %2641 = vst [vmem:[%s305 + $0x90] sm:$0xff] %v2609
      %2642 = vst [vmem:[%s305 + $0x98] sm:$0xff] %v2610
      %2643 = vst [vmem:[%s305 + $0xa0] sm:$0xff] %v2611
      %2644 = vst [vmem:[%s305 + $0xa8] sm:$0xff] %v2612
      %2645 = vst [vmem:[%s305 + $0xb0] sm:$0xff] %v2613
      %2646 = vst [vmem:[%s305 + $0xb8] sm:$0xff] %v2614
      %2647 = vst [vmem:[%s305 + $0xc0] sm:$0xff] %v2615
      %2648 = vst [vmem:[%s305 + $0xc8] sm:$0xff] %v2616
      %2649 = vst [vmem:[%s305 + $0xd0] sm:$0xff] %v2617
      %2650 = vst [vmem:[%s305 + $0xd8] sm:$0xff] %v2618
      %2651 = vst [vmem:[%s305 + $0xe0] sm:$0xff] %v2619
      %2652 = vst [vmem:[%s305 + $0xe8] sm:$0xff] %v2620
      %2653 = vst [vmem:[%s305 + $0xf0] sm:$0xff] %v2621
      %2654 = vst [vmem:[%s305 + $0xf8] sm:$0xff] %v2622
      %v2655 = vld [vmem:[%s1104 + $0x1] sm:$0xff]
      %v2656 = vld [vmem:[%s1104 + $0x9] sm:$0xff]
      %v2657 = vld [vmem:[%s1104 + $0x19] sm:$0xff]
      %v2658 = vld [vmem:[%s1104 + $0x21] sm:$0xff]
      %v2659 = vld [vmem:[%s1104 + $0x31] sm:$0xff]
      %v2660 = vld [vmem:[%s1104 + $0x39] sm:$0xff]
      %v2661 = vld [vmem:[%s1104 + $0x49] sm:$0xff]
      %v2662 = vld [vmem:[%s1104 + $0x51] sm:$0xff]
      %v2663 = vld [vmem:[%s1104 + $0x61] sm:$0xff]
      %v2664 = vld [vmem:[%s1104 + $0x69] sm:$0xff]
      %v2665 = vld [vmem:[%s1104 + $0x79] sm:$0xff]
      %v2666 = vld [vmem:[%s1104 + $0x81] sm:$0xff]
      %v2667 = vld [vmem:[%s1104 + $0x91] sm:$0xff]
      %v2668 = vld [vmem:[%s1104 + $0x99] sm:$0xff]
      %v2669 = vld [vmem:[%s1104 + $0xa9] sm:$0xff]
      %v2670 = vld [vmem:[%s1104 + $0xb1] sm:$0xff]
      %v2671 = vld [vmem:[%s1104 + $0xc1] sm:$0xff]
      %v2672 = vld [vmem:[%s1104 + $0xc9] sm:$0xff]
      %v2673 = vld [vmem:[%s1104 + $0xd9] sm:$0xff]
      %v2674 = vld [vmem:[%s1104 + $0xe1] sm:$0xff]
      %v2675 = vld [vmem:[%s1104 + $0xf1] sm:$0xff]
      %v2676 = vld [vmem:[%s1104 + $0xf9] sm:$0xff]
      %v2677 = vld [vmem:[%s1104 + $0x109] sm:$0xff]
      %v2678 = vld [vmem:[%s1104 + $0x111] sm:$0xff]
      %v2679 = vld [vmem:[%s1104 + $0x121] sm:$0xff]
      %v2680 = vld [vmem:[%s1104 + $0x129] sm:$0xff]
      %v2681 = vld [vmem:[%s1104 + $0x139] sm:$0xff]
      %v2682 = vld [vmem:[%s1104 + $0x141] sm:$0xff]
      %v2683 = vld [vmem:[%s1104 + $0x151] sm:$0xff]
      %v2684 = vld [vmem:[%s1104 + $0x159] sm:$0xff]
      %v2685 = vld [vmem:[%s1104 + $0x169] sm:$0xff]
      %v2686 = vld [vmem:[%s1104 + $0x171] sm:$0xff]
      %v2687 = vld [vmem:[%s305] sm:$0xff]
      %v2688 = vld [vmem:[%s305 + $0x8] sm:$0xff]
      %v2689 = vld [vmem:[%s305 + $0x10] sm:$0xff]
      %v2690 = vld [vmem:[%s305 + $0x18] sm:$0xff]
      %v2691 = vld [vmem:[%s305 + $0x20] sm:$0xff]
      %v2692 = vld [vmem:[%s305 + $0x28] sm:$0xff]
      %v2693 = vld [vmem:[%s305 + $0x30] sm:$0xff]
      %v2694 = vld [vmem:[%s305 + $0x38] sm:$0xff]
      %v2695 = vld [vmem:[%s305 + $0x40] sm:$0xff]
      %v2696 = vld [vmem:[%s305 + $0x48] sm:$0xff]
      %v2697 = vld [vmem:[%s305 + $0x50] sm:$0xff]
      %v2698 = vld [vmem:[%s305 + $0x58] sm:$0xff]
      %v2699 = vld [vmem:[%s305 + $0x60] sm:$0xff]
      %v2700 = vld [vmem:[%s305 + $0x68] sm:$0xff]
      %v2701 = vld [vmem:[%s305 + $0x70] sm:$0xff]
      %v2702 = vld [vmem:[%s305 + $0x78] sm:$0xff]
      %v2703 = vld [vmem:[%s305 + $0x80] sm:$0xff]
      %v2704 = vld [vmem:[%s305 + $0x88] sm:$0xff]
      %v2705 = vld [vmem:[%s305 + $0x90] sm:$0xff]
      %v2706 = vld [vmem:[%s305 + $0x98] sm:$0xff]
      %v2707 = vld [vmem:[%s305 + $0xa0] sm:$0xff]
      %v2708 = vld [vmem:[%s305 + $0xa8] sm:$0xff]
      %v2709 = vld [vmem:[%s305 + $0xb0] sm:$0xff]
      %v2710 = vld [vmem:[%s305 + $0xb8] sm:$0xff]
      %v2711 = vld [vmem:[%s305 + $0xc0] sm:$0xff]
      %v2712 = vld [vmem:[%s305 + $0xc8] sm:$0xff]
      %v2713 = vld [vmem:[%s305 + $0xd0] sm:$0xff]
      %v2714 = vld [vmem:[%s305 + $0xd8] sm:$0xff]
      %v2715 = vld [vmem:[%s305 + $0xe0] sm:$0xff]
      %v2716 = vld [vmem:[%s305 + $0xe8] sm:$0xff]
      %v2717 = vld [vmem:[%s305 + $0xf0] sm:$0xff]
      %v2718 = vld [vmem:[%s305 + $0xf8] sm:$0xff]
      %v2719 = vpack.c.bf16 %v2656, %v2655
      %v2720 = vpack.c.bf16 %v2658, %v2657
      %v2721 = vpack.c.bf16 %v2660, %v2659
      %v2722 = vpack.c.bf16 %v2662, %v2661
      %v2723 = vpack.c.bf16 %v2664, %v2663
      %v2724 = vpack.c.bf16 %v2666, %v2665
      %v2725 = vpack.c.bf16 %v2668, %v2667
      %v2726 = vpack.c.bf16 %v2670, %v2669
      %v2727 = vpack.c.bf16 %v2672, %v2671
      %v2728 = vpack.c.bf16 %v2674, %v2673
      %v2729 = vpack.c.bf16 %v2676, %v2675
      %v2730 = vpack.c.bf16 %v2678, %v2677
      %v2731 = vpack.c.bf16 %v2680, %v2679
      %v2732 = vpack.c.bf16 %v2682, %v2681
      %v2733 = vpack.c.bf16 %v2684, %v2683
      %v2734 = vpack.c.bf16 %v2686, %v2685
      %s2735 = scalar_lea.vmem %s3, 256
      %v2736 = vld [vmem:[%s2735] sm:$0xf]
      %v2737 = vld [vmem:[%s2735 + $0x4] sm:$0xf]
      %v2738 = vld [vmem:[%s2735 + $0x8] sm:$0xf]
      %v2739 = vld [vmem:[%s2735 + $0xc] sm:$0xf]
      %v2740 = vld [vmem:[%s2735 + $0x10] sm:$0xf]
      %v2741 = vld [vmem:[%s2735 + $0x14] sm:$0xf]
      %v2742 = vld [vmem:[%s2735 + $0x18] sm:$0xf]
      %v2743 = vld [vmem:[%s2735 + $0x1c] sm:$0xf]
      %v2744 = vld [vmem:[%s2735 + $0x20] sm:$0xf]
      %v2745 = vld [vmem:[%s2735 + $0x24] sm:$0xf]
      %v2746 = vld [vmem:[%s2735 + $0x28] sm:$0xf]
      %v2747 = vld [vmem:[%s2735 + $0x2c] sm:$0xf]
      %v2748 = vld [vmem:[%s2735 + $0x30] sm:$0xf]
      %v2749 = vld [vmem:[%s2735 + $0x34] sm:$0xf]
      %v2750 = vld [vmem:[%s2735 + $0x38] sm:$0xf]
      %v2751 = vld [vmem:[%s2735 + $0x3c] sm:$0xf]
      %v2768 = vunpack.c.l.b16 %v2736
      %v2769 = vunpack.c.l.b16 %v2737
      %v2770 = vunpack.c.l.b16 %v2738
      %v2771 = vunpack.c.l.b16 %v2739
      %v2772 = vunpack.c.l.b16 %v2740
      %v2773 = vunpack.c.l.b16 %v2741
      %v2774 = vunpack.c.l.b16 %v2742
      %v2775 = vunpack.c.l.b16 %v2743
      %v2776 = vunpack.c.l.b16 %v2744
      %v2777 = vunpack.c.l.b16 %v2745
      %v2778 = vunpack.c.l.b16 %v2746
      %v2779 = vunpack.c.l.b16 %v2747
      %v2780 = vunpack.c.l.b16 %v2748
      %v2781 = vunpack.c.l.b16 %v2749
      %v2782 = vunpack.c.l.b16 %v2750
      %v2783 = vunpack.c.l.b16 %v2751
      %v2784 = vpack.c.b16 %v2769, %v2768
      %v2785 = vpack.c.b16 %v2771, %v2770
      %v2786 = vpack.c.b16 %v2773, %v2772
      %v2787 = vpack.c.b16 %v2775, %v2774
      %v2788 = vpack.c.b16 %v2777, %v2776
      %v2789 = vpack.c.b16 %v2779, %v2778
      %v2790 = vpack.c.b16 %v2781, %v2780
      %v2791 = vpack.c.b16 %v2783, %v2782
      %2800 = vmatprep.subr.bf16.mxu0 0
      %2801 = vmatpush1.bf16.msra.mxu0 %v2784
      %2802 = vmatprep.subr.bf16.mxu0 0
      %2803 = vmatpush1.bf16.msra.mxu0 %v2785
      %2804 = vmatprep.subr.bf16.mxu0 0
      %2805 = vmatpush1.bf16.msra.mxu0 %v2786
      %2806 = vmatprep.subr.bf16.mxu0 0
      %2807 = vmatpush1.bf16.msra.mxu0 %v2787
      %2808 = vmatprep.subr.bf16.mxu0 0
      %2809 = vmatpush1.bf16.msra.mxu0 %v2788
      %2810 = vmatprep.subr.bf16.mxu0 0
      %2811 = vmatpush1.bf16.msra.mxu0 %v2789
      %2812 = vmatprep.subr.bf16.mxu0 0
      %2813 = vmatpush1.bf16.msra.mxu0 %v2790
      %2814 = vmatprep.subr.bf16.mxu0 0
      %2815 = vmatpush1.bf16.msra.mxu0 %v2791
      %2816 = vmatprep.subr.bf16.mxu0 0
      %2817 = vmatpush1.bf16.msra.mxu0 0
      %2818 = vmatprep.subr.bf16.mxu0 0
      %2819 = vmatpush1.bf16.msra.mxu0 0
      %2820 = vmatprep.subr.bf16.mxu0 0
      %2821 = vmatpush1.bf16.msra.mxu0 0
      %2822 = vmatprep.subr.bf16.mxu0 0
      %2823 = vmatpush1.bf16.msra.mxu0 0
      %2824 = vmatprep.subr.bf16.mxu0 0
      %2825 = vmatpush1.bf16.msra.mxu0 0
      %2826 = vmatprep.subr.bf16.mxu0 0
      %2827 = vmatpush1.bf16.msra.mxu0 0
      %2828 = vmatprep.subr.bf16.mxu0 0
      %2829 = vmatpush1.bf16.msra.mxu0 0
      %2830 = vmatprep.subr.bf16.mxu0 0
      %2831 = vmatpush1.bf16.msra.mxu0 0
      %2832 = vmatprep.mubr.bf16.mxu0 0
      %2833 = vmatmul.mubr.bf16.gmra.mrb[0].mxu0 %v2719
      %v2834 = vpop.f32.mrb[0].mxu0
      %v2835 = vadd.f32 0.0, %v2834
      %v2836 = vpop.f32.mrb[0].mxu0
      %v2837 = vpop.f32.mrb[0].mxu0
      %v2838 = vadd.f32 0.0, %v2837
      %v2839 = vpop.f32.mrb[0].mxu0
      %2840 = vmatprep.mubr.bf16.mxu0 0
      %2841 = vmatmul.mubr.bf16.gmra.mrb[0].mxu0 %v2720
      %v2842 = vpop.f32.mrb[0].mxu0
      %v2843 = vadd.f32 0.0, %v2842
      %v2844 = vpop.f32.mrb[0].mxu0
      %v2845 = vpop.f32.mrb[0].mxu0
      %v2846 = vadd.f32 0.0, %v2845
      %v2847 = vpop.f32.mrb[0].mxu0
      %2848 = vmatprep.mubr.bf16.mxu0 0
      %2849 = vmatmul.mubr.bf16.gmra.mrb[0].mxu0 %v2721
      %v2850 = vpop.f32.mrb[0].mxu0
      %v2851 = vadd.f32 0.0, %v2850
      %v2852 = vpop.f32.mrb[0].mxu0
      %v2853 = vpop.f32.mrb[0].mxu0
      %v2854 = vadd.f32 0.0, %v2853
      %v2855 = vpop.f32.mrb[0].mxu0
      %2856 = vmatprep.mubr.bf16.mxu0 0
      %2857 = vmatmul.mubr.bf16.gmra.mrb[0].mxu0 %v2722
      %v2858 = vpop.f32.mrb[0].mxu0
      %v2859 = vadd.f32 0.0, %v2858
      %v2860 = vpop.f32.mrb[0].mxu0
      %v2861 = vpop.f32.mrb[0].mxu0
      %v2862 = vadd.f32 0.0, %v2861
      %v2863 = vpop.f32.mrb[0].mxu0
      %2864 = vmatprep.mubr.bf16.mxu0 0
      %2865 = vmatmul.mubr.bf16.gmra.mrb[0].mxu0 %v2723
      %v2866 = vpop.f32.mrb[0].mxu0
      %v2867 = vadd.f32 0.0, %v2866
      %v2868 = vpop.f32.mrb[0].mxu0
      %v2869 = vpop.f32.mrb[0].mxu0
      %v2870 = vadd.f32 0.0, %v2869
      %v2871 = vpop.f32.mrb[0].mxu0
      %2872 = vmatprep.mubr.bf16.mxu0 0
      %2873 = vmatmul.mubr.bf16.gmra.mrb[0].mxu0 %v2724
      %v2874 = vpop.f32.mrb[0].mxu0
      %v2875 = vadd.f32 0.0, %v2874
      %v2876 = vpop.f32.mrb[0].mxu0
      %v2877 = vpop.f32.mrb[0].mxu0
      %v2878 = vadd.f32 0.0, %v2877
      %v2879 = vpop.f32.mrb[0].mxu0
      %2880 = vmatprep.mubr.bf16.mxu0 0
      %2881 = vmatmul.mubr.bf16.gmra.mrb[0].mxu0 %v2725
      %v2882 = vpop.f32.mrb[0].mxu0
      %v2883 = vadd.f32 0.0, %v2882
      %v2884 = vpop.f32.mrb[0].mxu0
      %v2885 = vpop.f32.mrb[0].mxu0
      %v2886 = vadd.f32 0.0, %v2885
      %v2887 = vpop.f32.mrb[0].mxu0
      %2888 = vmatprep.mubr.bf16.mxu0 0
      %2889 = vmatmul.mubr.bf16.gmra.mrb[0].mxu0 %v2726
      %v2890 = vpop.f32.mrb[0].mxu0
      %v2891 = vadd.f32 0.0, %v2890
      %v2892 = vpop.f32.mrb[0].mxu0
      %v2893 = vpop.f32.mrb[0].mxu0
      %v2894 = vadd.f32 0.0, %v2893
      %v2895 = vpop.f32.mrb[0].mxu0
      %2896 = vmatprep.mubr.bf16.mxu0 0
      %2897 = vmatmul.mubr.bf16.gmra.mrb[0].mxu0 %v2727
      %v2898 = vpop.f32.mrb[0].mxu0
      %v2899 = vadd.f32 0.0, %v2898
      %v2900 = vpop.f32.mrb[0].mxu0
      %v2901 = vpop.f32.mrb[0].mxu0
      %v2902 = vadd.f32 0.0, %v2901
      %v2903 = vpop.f32.mrb[0].mxu0
      %2904 = vmatprep.mubr.bf16.mxu0 0
      %2905 = vmatmul.mubr.bf16.gmra.mrb[0].mxu0 %v2728
      %v2906 = vpop.f32.mrb[0].mxu0
      %v2907 = vadd.f32 0.0, %v2906
      %v2908 = vpop.f32.mrb[0].mxu0
      %v2909 = vpop.f32.mrb[0].mxu0
      %v2910 = vadd.f32 0.0, %v2909
      %v2911 = vpop.f32.mrb[0].mxu0
      %2912 = vmatprep.mubr.bf16.mxu0 0
      %2913 = vmatmul.mubr.bf16.gmra.mrb[0].mxu0 %v2729
      %v2914 = vpop.f32.mrb[0].mxu0
      %v2915 = vadd.f32 0.0, %v2914
      %v2916 = vpop.f32.mrb[0].mxu0
      %v2917 = vpop.f32.mrb[0].mxu0
      %v2918 = vadd.f32 0.0, %v2917
      %v2919 = vpop.f32.mrb[0].mxu0
      %2920 = vmatprep.mubr.bf16.mxu0 0
      %2921 = vmatmul.mubr.bf16.gmra.mrb[0].mxu0 %v2730
      %v2922 = vpop.f32.mrb[0].mxu0
      %v2923 = vadd.f32 0.0, %v2922
      %v2924 = vpop.f32.mrb[0].mxu0
      %v2925 = vpop.f32.mrb[0].mxu0
      %v2926 = vadd.f32 0.0, %v2925
      %v2927 = vpop.f32.mrb[0].mxu0
      %2928 = vmatprep.mubr.bf16.mxu0 0
      %2929 = vmatmul.mubr.bf16.gmra.mrb[0].mxu0 %v2731
      %v2930 = vpop.f32.mrb[0].mxu0
      %v2931 = vadd.f32 0.0, %v2930
      %v2932 = vpop.f32.mrb[0].mxu0
      %v2933 = vpop.f32.mrb[0].mxu0
      %v2934 = vadd.f32 0.0, %v2933
      %v2935 = vpop.f32.mrb[0].mxu0
      %2936 = vmatprep.mubr.bf16.mxu0 0
      %2937 = vmatmul.mubr.bf16.gmra.mrb[0].mxu0 %v2732
      %v2938 = vpop.f32.mrb[0].mxu0
      %v2939 = vadd.f32 0.0, %v2938
      %v2940 = vpop.f32.mrb[0].mxu0
      %v2941 = vpop.f32.mrb[0].mxu0
      %v2942 = vadd.f32 0.0, %v2941
      %v2943 = vpop.f32.mrb[0].mxu0
      %2944 = vmatprep.mubr.bf16.mxu0 0
      %2945 = vmatmul.mubr.bf16.gmra.mrb[0].mxu0 %v2733
      %v2946 = vpop.f32.mrb[0].mxu0
      %v2947 = vadd.f32 0.0, %v2946
      %v2948 = vpop.f32.mrb[0].mxu0
      %v2949 = vpop.f32.mrb[0].mxu0
      %v2950 = vadd.f32 0.0, %v2949
      %v2951 = vpop.f32.mrb[0].mxu0
      %2952 = vmatprep.mubr.bf16.mxu0 0
      %2953 = vmatmul.mubr.bf16.gmra.mrb[0].mxu0 %v2734
      %v2954 = vpop.f32.mrb[0].mxu0
      %v2955 = vadd.f32 0.0, %v2954
      %v2956 = vpop.f32.mrb[0].mxu0
      %v2957 = vpop.f32.mrb[0].mxu0
      %v2958 = vadd.f32 0.0, %v2957
      %v2959 = vpop.f32.mrb[0].mxu0
      %2960 = vdwg.mxu0
      %v2961 = vadd.f32 %v2687, %v2835
      %v2962 = vadd.f32 %v2688, %v2838
      %v2963 = vadd.f32 %v2689, %v2843
      %v2964 = vadd.f32 %v2690, %v2846
      %v2965 = vadd.f32 %v2691, %v2851
      %v2966 = vadd.f32 %v2692, %v2854
      %v2967 = vadd.f32 %v2693, %v2859
      %v2968 = vadd.f32 %v2694, %v2862
      %v2969 = vadd.f32 %v2695, %v2867
      %v2970 = vadd.f32 %v2696, %v2870
      %v2971 = vadd.f32 %v2697, %v2875
      %v2972 = vadd.f32 %v2698, %v2878
      %v2973 = vadd.f32 %v2699, %v2883
      %v2974 = vadd.f32 %v2700, %v2886
      %v2975 = vadd.f32 %v2701, %v2891
      %v2976 = vadd.f32 %v2702, %v2894
      %v2977 = vadd.f32 %v2703, %v2899
      %v2978 = vadd.f32 %v2704, %v2902
      %v2979 = vadd.f32 %v2705, %v2907
      %v2980 = vadd.f32 %v2706, %v2910
      %v2981 = vadd.f32 %v2707, %v2915
      %v2982 = vadd.f32 %v2708, %v2918
      %v2983 = vadd.f32 %v2709, %v2923
      %v2984 = vadd.f32 %v2710, %v2926
      %v2985 = vadd.f32 %v2711, %v2931
      %v2986 = vadd.f32 %v2712, %v2934
      %v2987 = vadd.f32 %v2713, %v2939
      %v2988 = vadd.f32 %v2714, %v2942
      %v2989 = vadd.f32 %v2715, %v2947
      %v2990 = vadd.f32 %v2716, %v2950
      %v2991 = vadd.f32 %v2717, %v2955
      %v2992 = vadd.f32 %v2718, %v2958
      %2993 = vst [vmem:[%s305] sm:$0xff] %v2961
      %2994 = vst [vmem:[%s305 + $0x8] sm:$0xff] %v2962
      %2995 = vst [vmem:[%s305 + $0x10] sm:$0xff] %v2963
      %2996 = vst [vmem:[%s305 + $0x18] sm:$0xff] %v2964
      %2997 = vst [vmem:[%s305 + $0x20] sm:$0xff] %v2965
      %2998 = vst [vmem:[%s305 + $0x28] sm:$0xff] %v2966
      %2999 = vst [vmem:[%s305 + $0x30] sm:$0xff] %v2967
      %3000 = vst [vmem:[%s305 + $0x38] sm:$0xff] %v2968
      %3001 = vst [vmem:[%s305 + $0x40] sm:$0xff] %v2969
      %3002 = vst [vmem:[%s305 + $0x48] sm:$0xff] %v2970
      %3003 = vst [vmem:[%s305 + $0x50] sm:$0xff] %v2971
      %3004 = vst [vmem:[%s305 + $0x58] sm:$0xff] %v2972
      %3005 = vst [vmem:[%s305 + $0x60] sm:$0xff] %v2973
      %3006 = vst [vmem:[%s305 + $0x68] sm:$0xff] %v2974
      %3007 = vst [vmem:[%s305 + $0x70] sm:$0xff] %v2975
      %3008 = vst [vmem:[%s305 + $0x78] sm:$0xff] %v2976
      %3009 = vst [vmem:[%s305 + $0x80] sm:$0xff] %v2977
      %3010 = vst [vmem:[%s305 + $0x88] sm:$0xff] %v2978
      %3011 = vst [vmem:[%s305 + $0x90] sm:$0xff] %v2979
      %3012 = vst [vmem:[%s305 + $0x98] sm:$0xff] %v2980
      %3013 = vst [vmem:[%s305 + $0xa0] sm:$0xff] %v2981
      %3014 = vst [vmem:[%s305 + $0xa8] sm:$0xff] %v2982
      %3015 = vst [vmem:[%s305 + $0xb0] sm:$0xff] %v2983
      %3016 = vst [vmem:[%s305 + $0xb8] sm:$0xff] %v2984
      %3017 = vst [vmem:[%s305 + $0xc0] sm:$0xff] %v2985
      %3018 = vst [vmem:[%s305 + $0xc8] sm:$0xff] %v2986
      %3019 = vst [vmem:[%s305 + $0xd0] sm:$0xff] %v2987
      %3020 = vst [vmem:[%s305 + $0xd8] sm:$0xff] %v2988
      %3021 = vst [vmem:[%s305 + $0xe0] sm:$0xff] %v2989
      %3022 = vst [vmem:[%s305 + $0xe8] sm:$0xff] %v2990
      %3023 = vst [vmem:[%s305 + $0xf0] sm:$0xff] %v2991
      %3024 = vst [vmem:[%s305 + $0xf8] sm:$0xff] %v2992
      %v3025 = vld [vmem:[%s1104 + $0x2] sm:$0xff]
      %v3026 = vld [vmem:[%s1104 + $0xa] sm:$0xff]
      %v3027 = vld [vmem:[%s1104 + $0x1a] sm:$0xff]
      %v3028 = vld [vmem:[%s1104 + $0x22] sm:$0xff]
      %v3029 = vld [vmem:[%s1104 + $0x32] sm:$0xff]
      %v3030 = vld [vmem:[%s1104 + $0x3a] sm:$0xff]
      %v3031 = vld [vmem:[%s1104 + $0x4a] sm:$0xff]
      %v3032 = vld [vmem:[%s1104 + $0x52] sm:$0xff]
      %v3033 = vld [vmem:[%s1104 + $0x62] sm:$0xff]
      %v3034 = vld [vmem:[%s1104 + $0x6a] sm:$0xff]
      %v3035 = vld [vmem:[%s1104 + $0x7a] sm:$0xff]
      %v3036 = vld [vmem:[%s1104 + $0x82] sm:$0xff]
      %v3037 = vld [vmem:[%s1104 + $0x92] sm:$0xff]
      %v3038 = vld [vmem:[%s1104 + $0x9a] sm:$0xff]
      %v3039 = vld [vmem:[%s1104 + $0xaa] sm:$0xff]
      %v3040 = vld [vmem:[%s1104 + $0xb2] sm:$0xff]
      %v3041 = vld [vmem:[%s1104 + $0xc2] sm:$0xff]
      %v3042 = vld [vmem:[%s1104 + $0xca] sm:$0xff]
      %v3043 = vld [vmem:[%s1104 + $0xda] sm:$0xff]
      %v3044 = vld [vmem:[%s1104 + $0xe2] sm:$0xff]
      %v3045 = vld [vmem:[%s1104 + $0xf2] sm:$0xff]
      %v3046 = vld [vmem:[%s1104 + $0xfa] sm:$0xff]
      %v3047 = vld [vmem:[%s1104 + $0x10a] sm:$0xff]
      %v3048 = vld [vmem:[%s1104 + $0x112] sm:$0xff]
      %v3049 = vld [vmem:[%s1104 + $0x122] sm:$0xff]
      %v3050 = vld [vmem:[%s1104 + $0x12a] sm:$0xff]
      %v3051 = vld [vmem:[%s1104 + $0x13a] sm:$0xff]
      %v3052 = vld [vmem:[%s1104 + $0x142] sm:$0xff]
      %v3053 = vld [vmem:[%s1104 + $0x152] sm:$0xff]
      %v3054 = vld [vmem:[%s1104 + $0x15a] sm:$0xff]
      %v3055 = vld [vmem:[%s1104 + $0x16a] sm:$0xff]
      %v3056 = vld [vmem:[%s1104 + $0x172] sm:$0xff]
      %v3057 = vld [vmem:[%s305] sm:$0xff]
      %v3058 = vld [vmem:[%s305 + $0x8] sm:$0xff]
      %v3059 = vld [vmem:[%s305 + $0x10] sm:$0xff]
      %v3060 = vld [vmem:[%s305 + $0x18] sm:$0xff]
      %v3061 = vld [vmem:[%s305 + $0x20] sm:$0xff]
      %v3062 = vld [vmem:[%s305 + $0x28] sm:$0xff]
      %v3063 = vld [vmem:[%s305 + $0x30] sm:$0xff]
      %v3064 = vld [vmem:[%s305 + $0x38] sm:$0xff]
      %v3065 = vld [vmem:[%s305 + $0x40] sm:$0xff]
      %v3066 = vld [vmem:[%s305 + $0x48] sm:$0xff]
      %v3067 = vld [vmem:[%s305 + $0x50] sm:$0xff]
      %v3068 = vld [vmem:[%s305 + $0x58] sm:$0xff]
      %v3069 = vld [vmem:[%s305 + $0x60] sm:$0xff]
      %v3070 = vld [vmem:[%s305 + $0x68] sm:$0xff]
      %v3071 = vld [vmem:[%s305 + $0x70] sm:$0xff]
      %v3072 = vld [vmem:[%s305 + $0x78] sm:$0xff]
      %v3073 = vld [vmem:[%s305 + $0x80] sm:$0xff]
      %v3074 = vld [vmem:[%s305 + $0x88] sm:$0xff]
      %v3075 = vld [vmem:[%s305 + $0x90] sm:$0xff]
      %v3076 = vld [vmem:[%s305 + $0x98] sm:$0xff]
      %v3077 = vld [vmem:[%s305 + $0xa0] sm:$0xff]
      %v3078 = vld [vmem:[%s305 + $0xa8] sm:$0xff]
      %v3079 = vld [vmem:[%s305 + $0xb0] sm:$0xff]
      %v3080 = vld [vmem:[%s305 + $0xb8] sm:$0xff]
      %v3081 = vld [vmem:[%s305 + $0xc0] sm:$0xff]
      %v3082 = vld [vmem:[%s305 + $0xc8] sm:$0xff]
      %v3083 = vld [vmem:[%s305 + $0xd0] sm:$0xff]
      %v3084 = vld [vmem:[%s305 + $0xd8] sm:$0xff]
      %v3085 = vld [vmem:[%s305 + $0xe0] sm:$0xff]
      %v3086 = vld [vmem:[%s305 + $0xe8] sm:$0xff]
      %v3087 = vld [vmem:[%s305 + $0xf0] sm:$0xff]
      %v3088 = vld [vmem:[%s305 + $0xf8] sm:$0xff]
      %v3089 = vpack.c.bf16 %v3026, %v3025
      %v3090 = vpack.c.bf16 %v3028, %v3027
      %v3091 = vpack.c.bf16 %v3030, %v3029
      %v3092 = vpack.c.bf16 %v3032, %v3031
      %v3093 = vpack.c.bf16 %v3034, %v3033
      %v3094 = vpack.c.bf16 %v3036, %v3035
      %v3095 = vpack.c.bf16 %v3038, %v3037
      %v3096 = vpack.c.bf16 %v3040, %v3039
      %v3097 = vpack.c.bf16 %v3042, %v3041
      %v3098 = vpack.c.bf16 %v3044, %v3043
      %v3099 = vpack.c.bf16 %v3046, %v3045
      %v3100 = vpack.c.bf16 %v3048, %v3047
      %v3101 = vpack.c.bf16 %v3050, %v3049
      %v3102 = vpack.c.bf16 %v3052, %v3051
      %v3103 = vpack.c.bf16 %v3054, %v3053
      %v3104 = vpack.c.bf16 %v3056, %v3055
      %s3105 = scalar_lea.vmem %s3, 320
      %v3106 = vld [vmem:[%s3105] sm:$0xf]
      %v3107 = vld [vmem:[%s3105 + $0x4] sm:$0xf]
      %v3108 = vld [vmem:[%s3105 + $0x8] sm:$0xf]
      %v3109 = vld [vmem:[%s3105 + $0xc] sm:$0xf]
      %v3110 = vld [vmem:[%s3105 + $0x10] sm:$0xf]
      %v3111 = vld [vmem:[%s3105 + $0x14] sm:$0xf]
      %v3112 = vld [vmem:[%s3105 + $0x18] sm:$0xf]
      %v3113 = vld [vmem:[%s3105 + $0x1c] sm:$0xf]
      %v3114 = vld [vmem:[%s3105 + $0x20] sm:$0xf]
      %v3115 = vld [vmem:[%s3105 + $0x24] sm:$0xf]
      %v3116 = vld [vmem:[%s3105 + $0x28] sm:$0xf]
      %v3117 = vld [vmem:[%s3105 + $0x2c] sm:$0xf]
      %v3118 = vld [vmem:[%s3105 + $0x30] sm:$0xf]
      %v3119 = vld [vmem:[%s3105 + $0x34] sm:$0xf]
      %v3120 = vld [vmem:[%s3105 + $0x38] sm:$0xf]
      %v3121 = vld [vmem:[%s3105 + $0x3c] sm:$0xf]
      %v3138 = vunpack.c.l.b16 %v3106
      %v3139 = vunpack.c.l.b16 %v3107
      %v3140 = vunpack.c.l.b16 %v3108
      %v3141 = vunpack.c.l.b16 %v3109
      %v3142 = vunpack.c.l.b16 %v3110
      %v3143 = vunpack.c.l.b16 %v3111
      %v3144 = vunpack.c.l.b16 %v3112
      %v3145 = vunpack.c.l.b16 %v3113
      %v3146 = vunpack.c.l.b16 %v3114
      %v3147 = vunpack.c.l.b16 %v3115
      %v3148 = vunpack.c.l.b16 %v3116
      %v3149 = vunpack.c.l.b16 %v3117
      %v3150 = vunpack.c.l.b16 %v3118
      %v3151 = vunpack.c.l.b16 %v3119
      %v3152 = vunpack.c.l.b16 %v3120
      %v3153 = vunpack.c.l.b16 %v3121
      %v3154 = vpack.c.b16 %v3139, %v3138
      %v3155 = vpack.c.b16 %v3141, %v3140
      %v3156 = vpack.c.b16 %v3143, %v3142
      %v3157 = vpack.c.b16 %v3145, %v3144
      %v3158 = vpack.c.b16 %v3147, %v3146
      %v3159 = vpack.c.b16 %v3149, %v3148
      %v3160 = vpack.c.b16 %v3151, %v3150
      %v3161 = vpack.c.b16 %v3153, %v3152
      %3170 = vmatprep.subr.bf16.mxu0 0
      %3171 = vmatpush1.bf16.msra.mxu0 %v3154
      %3172 = vmatprep.subr.bf16.mxu0 0
      %3173 = vmatpush1.bf16.msra.mxu0 %v3155
      %3174 = vmatprep.subr.bf16.mxu0 0
      %3175 = vmatpush1.bf16.msra.mxu0 %v3156
      %3176 = vmatprep.subr.bf16.mxu0 0
      %3177 = vmatpush1.bf16.msra.mxu0 %v3157
      %3178 = vmatprep.subr.bf16.mxu0 0
      %3179 = vmatpush1.bf16.msra.mxu0 %v3158
      %3180 = vmatprep.subr.bf16.mxu0 0
      %3181 = vmatpush1.bf16.msra.mxu0 %v3159
      %3182 = vmatprep.subr.bf16.mxu0 0
      %3183 = vmatpush1.bf16.msra.mxu0 %v3160
      %3184 = vmatprep.subr.bf16.mxu0 0
      %3185 = vmatpush1.bf16.msra.mxu0 %v3161
      %3186 = vmatprep.subr.bf16.mxu0 0
      %3187 = vmatpush1.bf16.msra.mxu0 0
      %3188 = vmatprep.subr.bf16.mxu0 0
      %3189 = vmatpush1.bf16.msra.mxu0 0
      %3190 = vmatprep.subr.bf16.mxu0 0
      %3191 = vmatpush1.bf16.msra.mxu0 0
      %3192 = vmatprep.subr.bf16.mxu0 0
      %3193 = vmatpush1.bf16.msra.mxu0 0
      %3194 = vmatprep.subr.bf16.mxu0 0
      %3195 = vmatpush1.bf16.msra.mxu0 0
      %3196 = vmatprep.subr.bf16.mxu0 0
      %3197 = vmatpush1.bf16.msra.mxu0 0
      %3198 = vmatprep.subr.bf16.mxu0 0
      %3199 = vmatpush1.bf16.msra.mxu0 0
      %3200 = vmatprep.subr.bf16.mxu0 0
      %3201 = vmatpush1.bf16.msra.mxu0 0
      %3202 = vmatprep.mubr.bf16.mxu0 0
      %3203 = vmatmul.mubr.bf16.gmra.mrb[0].mxu0 %v3089
      %v3204 = vpop.f32.mrb[0].mxu0
      %v3205 = vadd.f32 0.0, %v3204
      %v3206 = vpop.f32.mrb[0].mxu0
      %v3207 = vpop.f32.mrb[0].mxu0
      %v3208 = vadd.f32 0.0, %v3207
      %v3209 = vpop.f32.mrb[0].mxu0
      %3210 = vmatprep.mubr.bf16.mxu0 0
      %3211 = vmatmul.mubr.bf16.gmra.mrb[0].mxu0 %v3090
      %v3212 = vpop.f32.mrb[0].mxu0
      %v3213 = vadd.f32 0.0, %v3212
      %v3214 = vpop.f32.mrb[0].mxu0
      %v3215 = vpop.f32.mrb[0].mxu0
      %v3216 = vadd.f32 0.0, %v3215
      %v3217 = vpop.f32.mrb[0].mxu0
      %3218 = vmatprep.mubr.bf16.mxu0 0
      %3219 = vmatmul.mubr.bf16.gmra.mrb[0].mxu0 %v3091
      %v3220 = vpop.f32.mrb[0].mxu0
      %v3221 = vadd.f32 0.0, %v3220
      %v3222 = vpop.f32.mrb[0].mxu0
      %v3223 = vpop.f32.mrb[0].mxu0
      %v3224 = vadd.f32 0.0, %v3223
      %v3225 = vpop.f32.mrb[0].mxu0
      %3226 = vmatprep.mubr.bf16.mxu0 0
      %3227 = vmatmul.mubr.bf16.gmra.mrb[0].mxu0 %v3092
      %v3228 = vpop.f32.mrb[0].mxu0
      %v3229 = vadd.f32 0.0, %v3228
      %v3230 = vpop.f32.mrb[0].mxu0
      %v3231 = vpop.f32.mrb[0].mxu0
      %v3232 = vadd.f32 0.0, %v3231
      %v3233 = vpop.f32.mrb[0].mxu0
      %3234 = vmatprep.mubr.bf16.mxu0 0
      %3235 = vmatmul.mubr.bf16.gmra.mrb[0].mxu0 %v3093
      %v3236 = vpop.f32.mrb[0].mxu0
      %v3237 = vadd.f32 0.0, %v3236
      %v3238 = vpop.f32.mrb[0].mxu0
      %v3239 = vpop.f32.mrb[0].mxu0
      %v3240 = vadd.f32 0.0, %v3239
      %v3241 = vpop.f32.mrb[0].mxu0
      %3242 = vmatprep.mubr.bf16.mxu0 0
      %3243 = vmatmul.mubr.bf16.gmra.mrb[0].mxu0 %v3094
      %v3244 = vpop.f32.mrb[0].mxu0
      %v3245 = vadd.f32 0.0, %v3244
      %v3246 = vpop.f32.mrb[0].mxu0
      %v3247 = vpop.f32.mrb[0].mxu0
      %v3248 = vadd.f32 0.0, %v3247
      %v3249 = vpop.f32.mrb[0].mxu0
      %3250 = vmatprep.mubr.bf16.mxu0 0
      %3251 = vmatmul.mubr.bf16.gmra.mrb[0].mxu0 %v3095
      %v3252 = vpop.f32.mrb[0].mxu0
      %v3253 = vadd.f32 0.0, %v3252
      %v3254 = vpop.f32.mrb[0].mxu0
      %v3255 = vpop.f32.mrb[0].mxu0
      %v3256 = vadd.f32 0.0, %v3255
      %v3257 = vpop.f32.mrb[0].mxu0
      %3258 = vmatprep.mubr.bf16.mxu0 0
      %3259 = vmatmul.mubr.bf16.gmra.mrb[0].mxu0 %v3096
      %v3260 = vpop.f32.mrb[0].mxu0
      %v3261 = vadd.f32 0.0, %v3260
      %v3262 = vpop.f32.mrb[0].mxu0
      %v3263 = vpop.f32.mrb[0].mxu0
      %v3264 = vadd.f32 0.0, %v3263
      %v3265 = vpop.f32.mrb[0].mxu0
      %3266 = vmatprep.mubr.bf16.mxu0 0
      %3267 = vmatmul.mubr.bf16.gmra.mrb[0].mxu0 %v3097
      %v3268 = vpop.f32.mrb[0].mxu0
      %v3269 = vadd.f32 0.0, %v3268
      %v3270 = vpop.f32.mrb[0].mxu0
      %v3271 = vpop.f32.mrb[0].mxu0
      %v3272 = vadd.f32 0.0, %v3271
      %v3273 = vpop.f32.mrb[0].mxu0
      %3274 = vmatprep.mubr.bf16.mxu0 0
      %3275 = vmatmul.mubr.bf16.gmra.mrb[0].mxu0 %v3098
      %v3276 = vpop.f32.mrb[0].mxu0
      %v3277 = vadd.f32 0.0, %v3276
      %v3278 = vpop.f32.mrb[0].mxu0
      %v3279 = vpop.f32.mrb[0].mxu0
      %v3280 = vadd.f32 0.0, %v3279
      %v3281 = vpop.f32.mrb[0].mxu0
      %3282 = vmatprep.mubr.bf16.mxu0 0
      %3283 = vmatmul.mubr.bf16.gmra.mrb[0].mxu0 %v3099
      %v3284 = vpop.f32.mrb[0].mxu0
      %v3285 = vadd.f32 0.0, %v3284
      %v3286 = vpop.f32.mrb[0].mxu0
      %v3287 = vpop.f32.mrb[0].mxu0
      %v3288 = vadd.f32 0.0, %v3287
      %v3289 = vpop.f32.mrb[0].mxu0
      %3290 = vmatprep.mubr.bf16.mxu0 0
      %3291 = vmatmul.mubr.bf16.gmra.mrb[0].mxu0 %v3100
      %v3292 = vpop.f32.mrb[0].mxu0
      %v3293 = vadd.f32 0.0, %v3292
      %v3294 = vpop.f32.mrb[0].mxu0
      %v3295 = vpop.f32.mrb[0].mxu0
      %v3296 = vadd.f32 0.0, %v3295
      %v3297 = vpop.f32.mrb[0].mxu0
      %3298 = vmatprep.mubr.bf16.mxu0 0
      %3299 = vmatmul.mubr.bf16.gmra.mrb[0].mxu0 %v3101
      %v3300 = vpop.f32.mrb[0].mxu0
      %v3301 = vadd.f32 0.0, %v3300
      %v3302 = vpop.f32.mrb[0].mxu0
      %v3303 = vpop.f32.mrb[0].mxu0
      %v3304 = vadd.f32 0.0, %v3303
      %v3305 = vpop.f32.mrb[0].mxu0
      %3306 = vmatprep.mubr.bf16.mxu0 0
      %3307 = vmatmul.mubr.bf16.gmra.mrb[0].mxu0 %v3102
      %v3308 = vpop.f32.mrb[0].mxu0
      %v3309 = vadd.f32 0.0, %v3308
      %v3310 = vpop.f32.mrb[0].mxu0
      %v3311 = vpop.f32.mrb[0].mxu0
      %v3312 = vadd.f32 0.0, %v3311
      %v3313 = vpop.f32.mrb[0].mxu0
      %3314 = vmatprep.mubr.bf16.mxu0 0
      %3315 = vmatmul.mubr.bf16.gmra.mrb[0].mxu0 %v3103
      %v3316 = vpop.f32.mrb[0].mxu0
      %v3317 = vadd.f32 0.0, %v3316
      %v3318 = vpop.f32.mrb[0].mxu0
      %v3319 = vpop.f32.mrb[0].mxu0
      %v3320 = vadd.f32 0.0, %v3319
      %v3321 = vpop.f32.mrb[0].mxu0
      %3322 = vmatprep.mubr.bf16.mxu0 0
      %3323 = vmatmul.mubr.bf16.gmra.mrb[0].mxu0 %v3104
      %v3324 = vpop.f32.mrb[0].mxu0
      %v3325 = vadd.f32 0.0, %v3324
      %v3326 = vpop.f32.mrb[0].mxu0
      %v3327 = vpop.f32.mrb[0].mxu0
      %v3328 = vadd.f32 0.0, %v3327
      %v3329 = vpop.f32.mrb[0].mxu0
      %3330 = vdwg.mxu0
      %v3331 = vadd.f32 %v3057, %v3205
      %v3332 = vadd.f32 %v3058, %v3208
      %v3333 = vadd.f32 %v3059, %v3213
      %v3334 = vadd.f32 %v3060, %v3216
      %v3335 = vadd.f32 %v3061, %v3221
      %v3336 = vadd.f32 %v3062, %v3224
      %v3337 = vadd.f32 %v3063, %v3229
      %v3338 = vadd.f32 %v3064, %v3232
      %v3339 = vadd.f32 %v3065, %v3237
      %v3340 = vadd.f32 %v3066, %v3240
      %v3341 = vadd.f32 %v3067, %v3245
      %v3342 = vadd.f32 %v3068, %v3248
      %v3343 = vadd.f32 %v3069, %v3253
      %v3344 = vadd.f32 %v3070, %v3256
      %v3345 = vadd.f32 %v3071, %v3261
      %v3346 = vadd.f32 %v3072, %v3264
      %v3347 = vadd.f32 %v3073, %v3269
      %v3348 = vadd.f32 %v3074, %v3272
      %v3349 = vadd.f32 %v3075, %v3277
      %v3350 = vadd.f32 %v3076, %v3280
      %v3351 = vadd.f32 %v3077, %v3285
      %v3352 = vadd.f32 %v3078, %v3288
      %v3353 = vadd.f32 %v3079, %v3293
      %v3354 = vadd.f32 %v3080, %v3296
      %v3355 = vadd.f32 %v3081, %v3301
      %v3356 = vadd.f32 %v3082, %v3304
      %v3357 = vadd.f32 %v3083, %v3309
      %v3358 = vadd.f32 %v3084, %v3312
      %v3359 = vadd.f32 %v3085, %v3317
      %v3360 = vadd.f32 %v3086, %v3320
      %v3361 = vadd.f32 %v3087, %v3325
      %v3362 = vadd.f32 %v3088, %v3328
      %3363 = vst [vmem:[%s305] sm:$0xff] %v3331
      %3364 = vst [vmem:[%s305 + $0x8] sm:$0xff] %v3332
      %3365 = vst [vmem:[%s305 + $0x10] sm:$0xff] %v3333
      %3366 = vst [vmem:[%s305 + $0x18] sm:$0xff] %v3334
      %3367 = vst [vmem:[%s305 + $0x20] sm:$0xff] %v3335
      %3368 = vst [vmem:[%s305 + $0x28] sm:$0xff] %v3336
      %3369 = vst [vmem:[%s305 + $0x30] sm:$0xff] %v3337
      %3370 = vst [vmem:[%s305 + $0x38] sm:$0xff] %v3338
      %3371 = vst [vmem:[%s305 + $0x40] sm:$0xff] %v3339
      %3372 = vst [vmem:[%s305 + $0x48] sm:$0xff] %v3340
      %3373 = vst [vmem:[%s305 + $0x50] sm:$0xff] %v3341
      %3374 = vst [vmem:[%s305 + $0x58] sm:$0xff] %v3342
      %3375 = vst [vmem:[%s305 + $0x60] sm:$0xff] %v3343
      %3376 = vst [vmem:[%s305 + $0x68] sm:$0xff] %v3344
      %3377 = vst [vmem:[%s305 + $0x70] sm:$0xff] %v3345
      %3378 = vst [vmem:[%s305 + $0x78] sm:$0xff] %v3346
      %3379 = vst [vmem:[%s305 + $0x80] sm:$0xff] %v3347
      %3380 = vst [vmem:[%s305 + $0x88] sm:$0xff] %v3348
      %3381 = vst [vmem:[%s305 + $0x90] sm:$0xff] %v3349
      %3382 = vst [vmem:[%s305 + $0x98] sm:$0xff] %v3350
      %3383 = vst [vmem:[%s305 + $0xa0] sm:$0xff] %v3351
      %3384 = vst [vmem:[%s305 + $0xa8] sm:$0xff] %v3352
      %3385 = vst [vmem:[%s305 + $0xb0] sm:$0xff] %v3353
      %3386 = vst [vmem:[%s305 + $0xb8] sm:$0xff] %v3354
      %3387 = vst [vmem:[%s305 + $0xc0] sm:$0xff] %v3355
      %3388 = vst [vmem:[%s305 + $0xc8] sm:$0xff] %v3356
      %3389 = vst [vmem:[%s305 + $0xd0] sm:$0xff] %v3357
      %3390 = vst [vmem:[%s305 + $0xd8] sm:$0xff] %v3358
      %3391 = vst [vmem:[%s305 + $0xe0] sm:$0xff] %v3359
      %3392 = vst [vmem:[%s305 + $0xe8] sm:$0xff] %v3360
      %3393 = vst [vmem:[%s305 + $0xf0] sm:$0xff] %v3361
      %3394 = vst [vmem:[%s305 + $0xf8] sm:$0xff] %v3362
      %s3395 = scalar_lea.vmem [#allocation2], 48
      %v3396 = vld [vmem:[%s3395] sm:$0xff]
      %v3397 = vld [vmem:[%s3395 + $0x8] sm:$0xff]
      %v3398 = vld [vmem:[%s3395 + $0x18] sm:$0xff]
      %v3399 = vld [vmem:[%s3395 + $0x20] sm:$0xff]
      %v3400 = vld [vmem:[%s3395 + $0x30] sm:$0xff]
      %v3401 = vld [vmem:[%s3395 + $0x38] sm:$0xff]
      %v3402 = vld [vmem:[%s3395 + $0x48] sm:$0xff]
      %v3403 = vld [vmem:[%s3395 + $0x50] sm:$0xff]
      %v3404 = vld [vmem:[%s3395 + $0x60] sm:$0xff]
      %v3405 = vld [vmem:[%s3395 + $0x68] sm:$0xff]
      %v3406 = vld [vmem:[%s3395 + $0x78] sm:$0xff]
      %v3407 = vld [vmem:[%s3395 + $0x80] sm:$0xff]
      %v3408 = vld [vmem:[%s3395 + $0x90] sm:$0xff]
      %v3409 = vld [vmem:[%s3395 + $0x98] sm:$0xff]
      %v3410 = vld [vmem:[%s3395 + $0xa8] sm:$0xff]
      %v3411 = vld [vmem:[%s3395 + $0xb0] sm:$0xff]
      %v3412 = vld [vmem:[%s3395 + $0xc0] sm:$0xff]
      %v3413 = vld [vmem:[%s3395 + $0xc8] sm:$0xff]
      %v3414 = vld [vmem:[%s3395 + $0xd8] sm:$0xff]
      %v3415 = vld [vmem:[%s3395 + $0xe0] sm:$0xff]
      %v3416 = vld [vmem:[%s3395 + $0xf0] sm:$0xff]
      %v3417 = vld [vmem:[%s3395 + $0xf8] sm:$0xff]
      %v3418 = vld [vmem:[%s3395 + $0x108] sm:$0xff]
      %v3419 = vld [vmem:[%s3395 + $0x110] sm:$0xff]
      %v3420 = vld [vmem:[%s3395 + $0x120] sm:$0xff]
      %v3421 = vld [vmem:[%s3395 + $0x128] sm:$0xff]
      %v3422 = vld [vmem:[%s3395 + $0x138] sm:$0xff]
      %v3423 = vld [vmem:[%s3395 + $0x140] sm:$0xff]
      %v3424 = vld [vmem:[%s3395 + $0x150] sm:$0xff]
      %v3425 = vld [vmem:[%s3395 + $0x158] sm:$0xff]
      %v3426 = vld [vmem:[%s3395 + $0x168] sm:$0xff]
      %v3427 = vld [vmem:[%s3395 + $0x170] sm:$0xff]
      %v3428 = vld [vmem:[%s305] sm:$0xff]
      %v3429 = vld [vmem:[%s305 + $0x8] sm:$0xff]
      %v3430 = vld [vmem:[%s305 + $0x10] sm:$0xff]
      %v3431 = vld [vmem:[%s305 + $0x18] sm:$0xff]
      %v3432 = vld [vmem:[%s305 + $0x20] sm:$0xff]
      %v3433 = vld [vmem:[%s305 + $0x28] sm:$0xff]
      %v3434 = vld [vmem:[%s305 + $0x30] sm:$0xff]
      %v3435 = vld [vmem:[%s305 + $0x38] sm:$0xff]
      %v3436 = vld [vmem:[%s305 + $0x40] sm:$0xff]
      %v3437 = vld [vmem:[%s305 + $0x48] sm:$0xff]
      %v3438 = vld [vmem:[%s305 + $0x50] sm:$0xff]
      %v3439 = vld [vmem:[%s305 + $0x58] sm:$0xff]
      %v3440 = vld [vmem:[%s305 + $0x60] sm:$0xff]
      %v3441 = vld [vmem:[%s305 + $0x68] sm:$0xff]
      %v3442 = vld [vmem:[%s305 + $0x70] sm:$0xff]
      %v3443 = vld [vmem:[%s305 + $0x78] sm:$0xff]
      %v3444 = vld [vmem:[%s305 + $0x80] sm:$0xff]
      %v3445 = vld [vmem:[%s305 + $0x88] sm:$0xff]
      %v3446 = vld [vmem:[%s305 + $0x90] sm:$0xff]
      %v3447 = vld [vmem:[%s305 + $0x98] sm:$0xff]
      %v3448 = vld [vmem:[%s305 + $0xa0] sm:$0xff]
      %v3449 = vld [vmem:[%s305 + $0xa8] sm:$0xff]
      %v3450 = vld [vmem:[%s305 + $0xb0] sm:$0xff]
      %v3451 = vld [vmem:[%s305 + $0xb8] sm:$0xff]
      %v3452 = vld [vmem:[%s305 + $0xc0] sm:$0xff]
      %v3453 = vld [vmem:[%s305 + $0xc8] sm:$0xff]
      %v3454 = vld [vmem:[%s305 + $0xd0] sm:$0xff]
      %v3455 = vld [vmem:[%s305 + $0xd8] sm:$0xff]
      %v3456 = vld [vmem:[%s305 + $0xe0] sm:$0xff]
      %v3457 = vld [vmem:[%s305 + $0xe8] sm:$0xff]
      %v3458 = vld [vmem:[%s305 + $0xf0] sm:$0xff]
      %v3459 = vld [vmem:[%s305 + $0xf8] sm:$0xff]
      %v3460 = vpack.c.bf16 %v3397, %v3396
      %v3461 = vpack.c.bf16 %v3399, %v3398
      %v3462 = vpack.c.bf16 %v3401, %v3400
      %v3463 = vpack.c.bf16 %v3403, %v3402
      %v3464 = vpack.c.bf16 %v3405, %v3404
      %v3465 = vpack.c.bf16 %v3407, %v3406
      %v3466 = vpack.c.bf16 %v3409, %v3408
      %v3467 = vpack.c.bf16 %v3411, %v3410
      %v3468 = vpack.c.bf16 %v3413, %v3412
      %v3469 = vpack.c.bf16 %v3415, %v3414
      %v3470 = vpack.c.bf16 %v3417, %v3416
      %v3471 = vpack.c.bf16 %v3419, %v3418
      %v3472 = vpack.c.bf16 %v3421, %v3420
      %v3473 = vpack.c.bf16 %v3423, %v3422
      %v3474 = vpack.c.bf16 %v3425, %v3424
      %v3475 = vpack.c.bf16 %v3427, %v3426
      %s3476 = scalar_lea.vmem %s3, 384
      %v3477 = vld [vmem:[%s3476] sm:$0xf]
      %v3478 = vld [vmem:[%s3476 + $0x4] sm:$0xf]
      %v3479 = vld [vmem:[%s3476 + $0x8] sm:$0xf]
      %v3480 = vld [vmem:[%s3476 + $0xc] sm:$0xf]
      %v3481 = vld [vmem:[%s3476 + $0x10] sm:$0xf]
      %v3482 = vld [vmem:[%s3476 + $0x14] sm:$0xf]
      %v3483 = vld [vmem:[%s3476 + $0x18] sm:$0xf]
      %v3484 = vld [vmem:[%s3476 + $0x1c] sm:$0xf]
      %v3485 = vld [vmem:[%s3476 + $0x20] sm:$0xf]
      %v3486 = vld [vmem:[%s3476 + $0x24] sm:$0xf]
      %v3487 = vld [vmem:[%s3476 + $0x28] sm:$0xf]
      %v3488 = vld [vmem:[%s3476 + $0x2c] sm:$0xf]
      %v3489 = vld [vmem:[%s3476 + $0x30] sm:$0xf]
      %v3490 = vld [vmem:[%s3476 + $0x34] sm:$0xf]
      %v3491 = vld [vmem:[%s3476 + $0x38] sm:$0xf]
      %v3492 = vld [vmem:[%s3476 + $0x3c] sm:$0xf]
      %v3509 = vunpack.c.l.b16 %v3477
      %v3510 = vunpack.c.l.b16 %v3478
      %v3511 = vunpack.c.l.b16 %v3479
      %v3512 = vunpack.c.l.b16 %v3480
      %v3513 = vunpack.c.l.b16 %v3481
      %v3514 = vunpack.c.l.b16 %v3482
      %v3515 = vunpack.c.l.b16 %v3483
      %v3516 = vunpack.c.l.b16 %v3484
      %v3517 = vunpack.c.l.b16 %v3485
      %v3518 = vunpack.c.l.b16 %v3486
      %v3519 = vunpack.c.l.b16 %v3487
      %v3520 = vunpack.c.l.b16 %v3488
      %v3521 = vunpack.c.l.b16 %v3489
      %v3522 = vunpack.c.l.b16 %v3490
      %v3523 = vunpack.c.l.b16 %v3491
      %v3524 = vunpack.c.l.b16 %v3492
      %v3525 = vpack.c.b16 %v3510, %v3509
      %v3526 = vpack.c.b16 %v3512, %v3511
      %v3527 = vpack.c.b16 %v3514, %v3513
      %v3528 = vpack.c.b16 %v3516, %v3515
      %v3529 = vpack.c.b16 %v3518, %v3517
      %v3530 = vpack.c.b16 %v3520, %v3519
      %v3531 = vpack.c.b16 %v3522, %v3521
      %v3532 = vpack.c.b16 %v3524, %v3523
      %3541 = vmatprep.subr.bf16.mxu0 0
      %3542 = vmatpush1.bf16.msra.mxu0 %v3525
      %3543 = vmatprep.subr.bf16.mxu0 0
      %3544 = vmatpush1.bf16.msra.mxu0 %v3526
      %3545 = vmatprep.subr.bf16.mxu0 0
      %3546 = vmatpush1.bf16.msra.mxu0 %v3527
      %3547 = vmatprep.subr.bf16.mxu0 0
      %3548 = vmatpush1.bf16.msra.mxu0 %v3528
      %3549 = vmatprep.subr.bf16.mxu0 0
      %3550 = vmatpush1.bf16.msra.mxu0 %v3529
      %3551 = vmatprep.subr.bf16.mxu0 0
      %3552 = vmatpush1.bf16.msra.mxu0 %v3530
      %3553 = vmatprep.subr.bf16.mxu0 0
      %3554 = vmatpush1.bf16.msra.mxu0 %v3531
      %3555 = vmatprep.subr.bf16.mxu0 0
      %3556 = vmatpush1.bf16.msra.mxu0 %v3532
      %3557 = vmatprep.subr.bf16.mxu0 0
      %3558 = vmatpush1.bf16.msra.mxu0 0
      %3559 = vmatprep.subr.bf16.mxu0 0
      %3560 = vmatpush1.bf16.msra.mxu0 0
      %3561 = vmatprep.subr.bf16.mxu0 0
      %3562 = vmatpush1.bf16.msra.mxu0 0
      %3563 = vmatprep.subr.bf16.mxu0 0
      %3564 = vmatpush1.bf16.msra.mxu0 0
      %3565 = vmatprep.subr.bf16.mxu0 0
      %3566 = vmatpush1.bf16.msra.mxu0 0
      %3567 = vmatprep.subr.bf16.mxu0 0
      %3568 = vmatpush1.bf16.msra.mxu0 0
      %3569 = vmatprep.subr.bf16.mxu0 0
      %3570 = vmatpush1.bf16.msra.mxu0 0
      %3571 = vmatprep.subr.bf16.mxu0 0
      %3572 = vmatpush1.bf16.msra.mxu0 0
      %3573 = vmatprep.mubr.bf16.mxu0 0
      %3574 = vmatmul.mubr.bf16.gmra.mrb[0].mxu0 %v3460
      %v3575 = vpop.f32.mrb[0].mxu0
      %v3576 = vadd.f32 0.0, %v3575
      %v3577 = vpop.f32.mrb[0].mxu0
      %v3578 = vpop.f32.mrb[0].mxu0
      %v3579 = vadd.f32 0.0, %v3578
      %v3580 = vpop.f32.mrb[0].mxu0
      %3581 = vmatprep.mubr.bf16.mxu0 0
      %3582 = vmatmul.mubr.bf16.gmra.mrb[0].mxu0 %v3461
      %v3583 = vpop.f32.mrb[0].mxu0
      %v3584 = vadd.f32 0.0, %v3583
      %v3585 = vpop.f32.mrb[0].mxu0
      %v3586 = vpop.f32.mrb[0].mxu0
      %v3587 = vadd.f32 0.0, %v3586
      %v3588 = vpop.f32.mrb[0].mxu0
      %3589 = vmatprep.mubr.bf16.mxu0 0
      %3590 = vmatmul.mubr.bf16.gmra.mrb[0].mxu0 %v3462
      %v3591 = vpop.f32.mrb[0].mxu0
      %v3592 = vadd.f32 0.0, %v3591
      %v3593 = vpop.f32.mrb[0].mxu0
      %v3594 = vpop.f32.mrb[0].mxu0
      %v3595 = vadd.f32 0.0, %v3594
      %v3596 = vpop.f32.mrb[0].mxu0
      %3597 = vmatprep.mubr.bf16.mxu0 0
      %3598 = vmatmul.mubr.bf16.gmra.mrb[0].mxu0 %v3463
      %v3599 = vpop.f32.mrb[0].mxu0
      %v3600 = vadd.f32 0.0, %v3599
      %v3601 = vpop.f32.mrb[0].mxu0
      %v3602 = vpop.f32.mrb[0].mxu0
      %v3603 = vadd.f32 0.0, %v3602
      %v3604 = vpop.f32.mrb[0].mxu0
      %3605 = vmatprep.mubr.bf16.mxu0 0
      %3606 = vmatmul.mubr.bf16.gmra.mrb[0].mxu0 %v3464
      %v3607 = vpop.f32.mrb[0].mxu0
      %v3608 = vadd.f32 0.0, %v3607
      %v3609 = vpop.f32.mrb[0].mxu0
      %v3610 = vpop.f32.mrb[0].mxu0
      %v3611 = vadd.f32 0.0, %v3610
      %v3612 = vpop.f32.mrb[0].mxu0
      %3613 = vmatprep.mubr.bf16.mxu0 0
      %3614 = vmatmul.mubr.bf16.gmra.mrb[0].mxu0 %v3465
      %v3615 = vpop.f32.mrb[0].mxu0
      %v3616 = vadd.f32 0.0, %v3615
      %v3617 = vpop.f32.mrb[0].mxu0
      %v3618 = vpop.f32.mrb[0].mxu0
      %v3619 = vadd.f32 0.0, %v3618
      %v3620 = vpop.f32.mrb[0].mxu0
      %3621 = vmatprep.mubr.bf16.mxu0 0
      %3622 = vmatmul.mubr.bf16.gmra.mrb[0].mxu0 %v3466
      %v3623 = vpop.f32.mrb[0].mxu0
      %v3624 = vadd.f32 0.0, %v3623
      %v3625 = vpop.f32.mrb[0].mxu0
      %v3626 = vpop.f32.mrb[0].mxu0
      %v3627 = vadd.f32 0.0, %v3626
      %v3628 = vpop.f32.mrb[0].mxu0
      %3629 = vmatprep.mubr.bf16.mxu0 0
      %3630 = vmatmul.mubr.bf16.gmra.mrb[0].mxu0 %v3467
      %v3631 = vpop.f32.mrb[0].mxu0
      %v3632 = vadd.f32 0.0, %v3631
      %v3633 = vpop.f32.mrb[0].mxu0
      %v3634 = vpop.f32.mrb[0].mxu0
      %v3635 = vadd.f32 0.0, %v3634
      %v3636 = vpop.f32.mrb[0].mxu0
      %3637 = vmatprep.mubr.bf16.mxu0 0
      %3638 = vmatmul.mubr.bf16.gmra.mrb[0].mxu0 %v3468
      %v3639 = vpop.f32.mrb[0].mxu0
      %v3640 = vadd.f32 0.0, %v3639
      %v3641 = vpop.f32.mrb[0].mxu0
      %v3642 = vpop.f32.mrb[0].mxu0
      %v3643 = vadd.f32 0.0, %v3642
      %v3644 = vpop.f32.mrb[0].mxu0
      %3645 = vmatprep.mubr.bf16.mxu0 0
      %3646 = vmatmul.mubr.bf16.gmra.mrb[0].mxu0 %v3469
      %v3647 = vpop.f32.mrb[0].mxu0
      %v3648 = vadd.f32 0.0, %v3647
      %v3649 = vpop.f32.mrb[0].mxu0
      %v3650 = vpop.f32.mrb[0].mxu0
      %v3651 = vadd.f32 0.0, %v3650
      %v3652 = vpop.f32.mrb[0].mxu0
      %3653 = vmatprep.mubr.bf16.mxu0 0
      %3654 = vmatmul.mubr.bf16.gmra.mrb[0].mxu0 %v3470
      %v3655 = vpop.f32.mrb[0].mxu0
      %v3656 = vadd.f32 0.0, %v3655
      %v3657 = vpop.f32.mrb[0].mxu0
      %v3658 = vpop.f32.mrb[0].mxu0
      %v3659 = vadd.f32 0.0, %v3658
      %v3660 = vpop.f32.mrb[0].mxu0
      %3661 = vmatprep.mubr.bf16.mxu0 0
      %3662 = vmatmul.mubr.bf16.gmra.mrb[0].mxu0 %v3471
      %v3663 = vpop.f32.mrb[0].mxu0
      %v3664 = vadd.f32 0.0, %v3663
      %v3665 = vpop.f32.mrb[0].mxu0
      %v3666 = vpop.f32.mrb[0].mxu0
      %v3667 = vadd.f32 0.0, %v3666
      %v3668 = vpop.f32.mrb[0].mxu0
      %3669 = vmatprep.mubr.bf16.mxu0 0
      %3670 = vmatmul.mubr.bf16.gmra.mrb[0].mxu0 %v3472
      %v3671 = vpop.f32.mrb[0].mxu0
      %v3672 = vadd.f32 0.0, %v3671
      %v3673 = vpop.f32.mrb[0].mxu0
      %v3674 = vpop.f32.mrb[0].mxu0
      %v3675 = vadd.f32 0.0, %v3674
      %v3676 = vpop.f32.mrb[0].mxu0
      %3677 = vmatprep.mubr.bf16.mxu0 0
      %3678 = vmatmul.mubr.bf16.gmra.mrb[0].mxu0 %v3473
      %v3679 = vpop.f32.mrb[0].mxu0
      %v3680 = vadd.f32 0.0, %v3679
      %v3681 = vpop.f32.mrb[0].mxu0
      %v3682 = vpop.f32.mrb[0].mxu0
      %v3683 = vadd.f32 0.0, %v3682
      %v3684 = vpop.f32.mrb[0].mxu0
      %3685 = vmatprep.mubr.bf16.mxu0 0
      %3686 = vmatmul.mubr.bf16.gmra.mrb[0].mxu0 %v3474
      %v3687 = vpop.f32.mrb[0].mxu0
      %v3688 = vadd.f32 0.0, %v3687
      %v3689 = vpop.f32.mrb[0].mxu0
      %v3690 = vpop.f32.mrb[0].mxu0
      %v3691 = vadd.f32 0.0, %v3690
      %v3692 = vpop.f32.mrb[0].mxu0
      %3693 = vmatprep.mubr.bf16.mxu0 0
      %3694 = vmatmul.mubr.bf16.gmra.mrb[0].mxu0 %v3475
      %v3695 = vpop.f32.mrb[0].mxu0
      %v3696 = vadd.f32 0.0, %v3695
      %v3697 = vpop.f32.mrb[0].mxu0
      %v3698 = vpop.f32.mrb[0].mxu0
      %v3699 = vadd.f32 0.0, %v3698
      %v3700 = vpop.f32.mrb[0].mxu0
      %3701 = vdwg.mxu0
      %v3702 = vadd.f32 %v3428, %v3576
      %v3703 = vadd.f32 %v3429, %v3579
      %v3704 = vadd.f32 %v3430, %v3584
      %v3705 = vadd.f32 %v3431, %v3587
      %v3706 = vadd.f32 %v3432, %v3592
      %v3707 = vadd.f32 %v3433, %v3595
      %v3708 = vadd.f32 %v3434, %v3600
      %v3709 = vadd.f32 %v3435, %v3603
      %v3710 = vadd.f32 %v3436, %v3608
      %v3711 = vadd.f32 %v3437, %v3611
      %v3712 = vadd.f32 %v3438, %v3616
      %v3713 = vadd.f32 %v3439, %v3619
      %v3714 = vadd.f32 %v3440, %v3624
      %v3715 = vadd.f32 %v3441, %v3627
      %v3716 = vadd.f32 %v3442, %v3632
      %v3717 = vadd.f32 %v3443, %v3635
      %v3718 = vadd.f32 %v3444, %v3640
      %v3719 = vadd.f32 %v3445, %v3643
      %v3720 = vadd.f32 %v3446, %v3648
      %v3721 = vadd.f32 %v3447, %v3651
      %v3722 = vadd.f32 %v3448, %v3656
      %v3723 = vadd.f32 %v3449, %v3659
      %v3724 = vadd.f32 %v3450, %v3664
      %v3725 = vadd.f32 %v3451, %v3667
      %v3726 = vadd.f32 %v3452, %v3672
      %v3727 = vadd.f32 %v3453, %v3675
      %v3728 = vadd.f32 %v3454, %v3680
      %v3729 = vadd.f32 %v3455, %v3683
      %v3730 = vadd.f32 %v3456, %v3688
      %v3731 = vadd.f32 %v3457, %v3691
      %v3732 = vadd.f32 %v3458, %v3696
      %v3733 = vadd.f32 %v3459, %v3699
      %3734 = vst [vmem:[%s305] sm:$0xff] %v3702
      %3735 = vst [vmem:[%s305 + $0x8] sm:$0xff] %v3703
      %3736 = vst [vmem:[%s305 + $0x10] sm:$0xff] %v3704
      %3737 = vst [vmem:[%s305 + $0x18] sm:$0xff] %v3705
      %3738 = vst [vmem:[%s305 + $0x20] sm:$0xff] %v3706
      %3739 = vst [vmem:[%s305 + $0x28] sm:$0xff] %v3707
      %3740 = vst [vmem:[%s305 + $0x30] sm:$0xff] %v3708
      %3741 = vst [vmem:[%s305 + $0x38] sm:$0xff] %v3709
      %3742 = vst [vmem:[%s305 + $0x40] sm:$0xff] %v3710
      %3743 = vst [vmem:[%s305 + $0x48] sm:$0xff] %v3711
      %3744 = vst [vmem:[%s305 + $0x50] sm:$0xff] %v3712
      %3745 = vst [vmem:[%s305 + $0x58] sm:$0xff] %v3713
      %3746 = vst [vmem:[%s305 + $0x60] sm:$0xff] %v3714
      %3747 = vst [vmem:[%s305 + $0x68] sm:$0xff] %v3715
      %3748 = vst [vmem:[%s305 + $0x70] sm:$0xff] %v3716
      %3749 = vst [vmem:[%s305 + $0x78] sm:$0xff] %v3717
      %3750 = vst [vmem:[%s305 + $0x80] sm:$0xff] %v3718
      %3751 = vst [vmem:[%s305 + $0x88] sm:$0xff] %v3719
      %3752 = vst [vmem:[%s305 + $0x90] sm:$0xff] %v3720
      %3753 = vst [vmem:[%s305 + $0x98] sm:$0xff] %v3721
      %3754 = vst [vmem:[%s305 + $0xa0] sm:$0xff] %v3722
      %3755 = vst [vmem:[%s305 + $0xa8] sm:$0xff] %v3723
      %3756 = vst [vmem:[%s305 + $0xb0] sm:$0xff] %v3724
      %3757 = vst [vmem:[%s305 + $0xb8] sm:$0xff] %v3725
      %3758 = vst [vmem:[%s305 + $0xc0] sm:$0xff] %v3726
      %3759 = vst [vmem:[%s305 + $0xc8] sm:$0xff] %v3727
      %3760 = vst [vmem:[%s305 + $0xd0] sm:$0xff] %v3728
      %3761 = vst [vmem:[%s305 + $0xd8] sm:$0xff] %v3729
      %3762 = vst [vmem:[%s305 + $0xe0] sm:$0xff] %v3730
      %3763 = vst [vmem:[%s305 + $0xe8] sm:$0xff] %v3731
      %3764 = vst [vmem:[%s305 + $0xf0] sm:$0xff] %v3732
      %3765 = vst [vmem:[%s305 + $0xf8] sm:$0xff] %v3733
      %v3766 = vld [vmem:[%s3395 + $0x1] sm:$0xff]
      %v3767 = vld [vmem:[%s3395 + $0x9] sm:$0xff]
      %v3768 = vld [vmem:[%s3395 + $0x19] sm:$0xff]
      %v3769 = vld [vmem:[%s3395 + $0x21] sm:$0xff]
      %v3770 = vld [vmem:[%s3395 + $0x31] sm:$0xff]
      %v3771 = vld [vmem:[%s3395 + $0x39] sm:$0xff]
      %v3772 = vld [vmem:[%s3395 + $0x49] sm:$0xff]
      %v3773 = vld [vmem:[%s3395 + $0x51] sm:$0xff]
      %v3774 = vld [vmem:[%s3395 + $0x61] sm:$0xff]
      %v3775 = vld [vmem:[%s3395 + $0x69] sm:$0xff]
      %v3776 = vld [vmem:[%s3395 + $0x79] sm:$0xff]
      %v3777 = vld [vmem:[%s3395 + $0x81] sm:$0xff]
      %v3778 = vld [vmem:[%s3395 + $0x91] sm:$0xff]
      %v3779 = vld [vmem:[%s3395 + $0x99] sm:$0xff]
      %v3780 = vld [vmem:[%s3395 + $0xa9] sm:$0xff]
      %v3781 = vld [vmem:[%s3395 + $0xb1] sm:$0xff]
      %v3782 = vld [vmem:[%s3395 + $0xc1] sm:$0xff]
      %v3783 = vld [vmem:[%s3395 + $0xc9] sm:$0xff]
      %v3784 = vld [vmem:[%s3395 + $0xd9] sm:$0xff]
      %v3785 = vld [vmem:[%s3395 + $0xe1] sm:$0xff]
      %v3786 = vld [vmem:[%s3395 + $0xf1] sm:$0xff]
      %v3787 = vld [vmem:[%s3395 + $0xf9] sm:$0xff]
      %v3788 = vld [vmem:[%s3395 + $0x109] sm:$0xff]
      %v3789 = vld [vmem:[%s3395 + $0x111] sm:$0xff]
      %v3790 = vld [vmem:[%s3395 + $0x121] sm:$0xff]
      %v3791 = vld [vmem:[%s3395 + $0x129] sm:$0xff]
      %v3792 = vld [vmem:[%s3395 + $0x139] sm:$0xff]
      %v3793 = vld [vmem:[%s3395 + $0x141] sm:$0xff]
      %v3794 = vld [vmem:[%s3395 + $0x151] sm:$0xff]
      %v3795 = vld [vmem:[%s3395 + $0x159] sm:$0xff]
      %v3796 = vld [vmem:[%s3395 + $0x169] sm:$0xff]
      %v3797 = vld [vmem:[%s3395 + $0x171] sm:$0xff]
      %v3798 = vld [vmem:[%s305] sm:$0xff]
      %v3799 = vld [vmem:[%s305 + $0x8] sm:$0xff]
      %v3800 = vld [vmem:[%s305 + $0x10] sm:$0xff]
      %v3801 = vld [vmem:[%s305 + $0x18] sm:$0xff]
      %v3802 = vld [vmem:[%s305 + $0x20] sm:$0xff]
      %v3803 = vld [vmem:[%s305 + $0x28] sm:$0xff]
      %v3804 = vld [vmem:[%s305 + $0x30] sm:$0xff]
      %v3805 = vld [vmem:[%s305 + $0x38] sm:$0xff]
      %v3806 = vld [vmem:[%s305 + $0x40] sm:$0xff]
      %v3807 = vld [vmem:[%s305 + $0x48] sm:$0xff]
      %v3808 = vld [vmem:[%s305 + $0x50] sm:$0xff]
      %v3809 = vld [vmem:[%s305 + $0x58] sm:$0xff]
      %v3810 = vld [vmem:[%s305 + $0x60] sm:$0xff]
      %v3811 = vld [vmem:[%s305 + $0x68] sm:$0xff]
      %v3812 = vld [vmem:[%s305 + $0x70] sm:$0xff]
      %v3813 = vld [vmem:[%s305 + $0x78] sm:$0xff]
      %v3814 = vld [vmem:[%s305 + $0x80] sm:$0xff]
      %v3815 = vld [vmem:[%s305 + $0x88] sm:$0xff]
      %v3816 = vld [vmem:[%s305 + $0x90] sm:$0xff]
      %v3817 = vld [vmem:[%s305 + $0x98] sm:$0xff]
      %v3818 = vld [vmem:[%s305 + $0xa0] sm:$0xff]
      %v3819 = vld [vmem:[%s305 + $0xa8] sm:$0xff]
      %v3820 = vld [vmem:[%s305 + $0xb0] sm:$0xff]
      %v3821 = vld [vmem:[%s305 + $0xb8] sm:$0xff]
      %v3822 = vld [vmem:[%s305 + $0xc0] sm:$0xff]
      %v3823 = vld [vmem:[%s305 + $0xc8] sm:$0xff]
      %v3824 = vld [vmem:[%s305 + $0xd0] sm:$0xff]
      %v3825 = vld [vmem:[%s305 + $0xd8] sm:$0xff]
      %v3826 = vld [vmem:[%s305 + $0xe0] sm:$0xff]
      %v3827 = vld [vmem:[%s305 + $0xe8] sm:$0xff]
      %v3828 = vld [vmem:[%s305 + $0xf0] sm:$0xff]
      %v3829 = vld [vmem:[%s305 + $0xf8] sm:$0xff]
      %v3830 = vpack.c.bf16 %v3767, %v3766
      %v3831 = vpack.c.bf16 %v3769, %v3768
      %v3832 = vpack.c.bf16 %v3771, %v3770
      %v3833 = vpack.c.bf16 %v3773, %v3772
      %v3834 = vpack.c.bf16 %v3775, %v3774
      %v3835 = vpack.c.bf16 %v3777, %v3776
      %v3836 = vpack.c.bf16 %v3779, %v3778
      %v3837 = vpack.c.bf16 %v3781, %v3780
      %v3838 = vpack.c.bf16 %v3783, %v3782
      %v3839 = vpack.c.bf16 %v3785, %v3784
      %v3840 = vpack.c.bf16 %v3787, %v3786
      %v3841 = vpack.c.bf16 %v3789, %v3788
      %v3842 = vpack.c.bf16 %v3791, %v3790
      %v3843 = vpack.c.bf16 %v3793, %v3792
      %v3844 = vpack.c.bf16 %v3795, %v3794
      %v3845 = vpack.c.bf16 %v3797, %v3796
      %s3846 = scalar_lea.vmem %s3, 448
      %v3847 = vld [vmem:[%s3846] sm:$0xf]
      %v3848 = vld [vmem:[%s3846 + $0x4] sm:$0xf]
      %v3849 = vld [vmem:[%s3846 + $0x8] sm:$0xf]
      %v3850 = vld [vmem:[%s3846 + $0xc] sm:$0xf]
      %v3851 = vld [vmem:[%s3846 + $0x10] sm:$0xf]
      %v3852 = vld [vmem:[%s3846 + $0x14] sm:$0xf]
      %v3853 = vld [vmem:[%s3846 + $0x18] sm:$0xf]
      %v3854 = vld [vmem:[%s3846 + $0x1c] sm:$0xf]
      %v3855 = vld [vmem:[%s3846 + $0x20] sm:$0xf]
      %v3856 = vld [vmem:[%s3846 + $0x24] sm:$0xf]
      %v3857 = vld [vmem:[%s3846 + $0x28] sm:$0xf]
      %v3858 = vld [vmem:[%s3846 + $0x2c] sm:$0xf]
      %v3859 = vld [vmem:[%s3846 + $0x30] sm:$0xf]
      %v3860 = vld [vmem:[%s3846 + $0x34] sm:$0xf]
      %v3861 = vld [vmem:[%s3846 + $0x38] sm:$0xf]
      %v3862 = vld [vmem:[%s3846 + $0x3c] sm:$0xf]
      %v3879 = vunpack.c.l.b16 %v3847
      %v3880 = vunpack.c.l.b16 %v3848
      %v3881 = vunpack.c.l.b16 %v3849
      %v3882 = vunpack.c.l.b16 %v3850
      %v3883 = vunpack.c.l.b16 %v3851
      %v3884 = vunpack.c.l.b16 %v3852
      %v3885 = vunpack.c.l.b16 %v3853
      %v3886 = vunpack.c.l.b16 %v3854
      %v3887 = vunpack.c.l.b16 %v3855
      %v3888 = vunpack.c.l.b16 %v3856
      %v3889 = vunpack.c.l.b16 %v3857
      %v3890 = vunpack.c.l.b16 %v3858
      %v3891 = vunpack.c.l.b16 %v3859
      %v3892 = vunpack.c.l.b16 %v3860
      %v3893 = vunpack.c.l.b16 %v3861
      %v3894 = vunpack.c.l.b16 %v3862
      %v3895 = vpack.c.b16 %v3880, %v3879
      %v3896 = vpack.c.b16 %v3882, %v3881
      %v3897 = vpack.c.b16 %v3884, %v3883
      %v3898 = vpack.c.b16 %v3886, %v3885
      %v3899 = vpack.c.b16 %v3888, %v3887
      %v3900 = vpack.c.b16 %v3890, %v3889
      %v3901 = vpack.c.b16 %v3892, %v3891
      %v3902 = vpack.c.b16 %v3894, %v3893
      %3911 = vmatprep.subr.bf16.mxu0 0
      %3912 = vmatpush1.bf16.msra.mxu0 %v3895
      %3913 = vmatprep.subr.bf16.mxu0 0
      %3914 = vmatpush1.bf16.msra.mxu0 %v3896
      %3915 = vmatprep.subr.bf16.mxu0 0
      %3916 = vmatpush1.bf16.msra.mxu0 %v3897
      %3917 = vmatprep.subr.bf16.mxu0 0
      %3918 = vmatpush1.bf16.msra.mxu0 %v3898
      %3919 = vmatprep.subr.bf16.mxu0 0
      %3920 = vmatpush1.bf16.msra.mxu0 %v3899
      %3921 = vmatprep.subr.bf16.mxu0 0
      %3922 = vmatpush1.bf16.msra.mxu0 %v3900
      %3923 = vmatprep.subr.bf16.mxu0 0
      %3924 = vmatpush1.bf16.msra.mxu0 %v3901
      %3925 = vmatprep.subr.bf16.mxu0 0
      %3926 = vmatpush1.bf16.msra.mxu0 %v3902
      %3927 = vmatprep.subr.bf16.mxu0 0
      %3928 = vmatpush1.bf16.msra.mxu0 0
      %3929 = vmatprep.subr.bf16.mxu0 0
      %3930 = vmatpush1.bf16.msra.mxu0 0
      %3931 = vmatprep.subr.bf16.mxu0 0
      %3932 = vmatpush1.bf16.msra.mxu0 0
      %3933 = vmatprep.subr.bf16.mxu0 0
      %3934 = vmatpush1.bf16.msra.mxu0 0
      %3935 = vmatprep.subr.bf16.mxu0 0
      %3936 = vmatpush1.bf16.msra.mxu0 0
      %3937 = vmatprep.subr.bf16.mxu0 0
      %3938 = vmatpush1.bf16.msra.mxu0 0
      %3939 = vmatprep.subr.bf16.mxu0 0
      %3940 = vmatpush1.bf16.msra.mxu0 0
      %3941 = vmatprep.subr.bf16.mxu0 0
      %3942 = vmatpush1.bf16.msra.mxu0 0
      %3943 = vmatprep.mubr.bf16.mxu0 0
      %3944 = vmatmul.mubr.bf16.gmra.mrb[0].mxu0 %v3830
      %v3945 = vpop.f32.mrb[0].mxu0
      %v3946 = vadd.f32 0.0, %v3945
      %v3947 = vpop.f32.mrb[0].mxu0
      %v3948 = vpop.f32.mrb[0].mxu0
      %v3949 = vadd.f32 0.0, %v3948
      %v3950 = vpop.f32.mrb[0].mxu0
      %3951 = vmatprep.mubr.bf16.mxu0 0
      %3952 = vmatmul.mubr.bf16.gmra.mrb[0].mxu0 %v3831
      %v3953 = vpop.f32.mrb[0].mxu0
      %v3954 = vadd.f32 0.0, %v3953
      %v3955 = vpop.f32.mrb[0].mxu0
      %v3956 = vpop.f32.mrb[0].mxu0
      %v3957 = vadd.f32 0.0, %v3956
      %v3958 = vpop.f32.mrb[0].mxu0
      %3959 = vmatprep.mubr.bf16.mxu0 0
      %3960 = vmatmul.mubr.bf16.gmra.mrb[0].mxu0 %v3832
      %v3961 = vpop.f32.mrb[0].mxu0
      %v3962 = vadd.f32 0.0, %v3961
      %v3963 = vpop.f32.mrb[0].mxu0
      %v3964 = vpop.f32.mrb[0].mxu0
      %v3965 = vadd.f32 0.0, %v3964
      %v3966 = vpop.f32.mrb[0].mxu0
      %3967 = vmatprep.mubr.bf16.mxu0 0
      %3968 = vmatmul.mubr.bf16.gmra.mrb[0].mxu0 %v3833
      %v3969 = vpop.f32.mrb[0].mxu0
      %v3970 = vadd.f32 0.0, %v3969
      %v3971 = vpop.f32.mrb[0].mxu0
      %v3972 = vpop.f32.mrb[0].mxu0
      %v3973 = vadd.f32 0.0, %v3972
      %v3974 = vpop.f32.mrb[0].mxu0
      %3975 = vmatprep.mubr.bf16.mxu0 0
      %3976 = vmatmul.mubr.bf16.gmra.mrb[0].mxu0 %v3834
      %v3977 = vpop.f32.mrb[0].mxu0
      %v3978 = vadd.f32 0.0, %v3977
      %v3979 = vpop.f32.mrb[0].mxu0
      %v3980 = vpop.f32.mrb[0].mxu0
      %v3981 = vadd.f32 0.0, %v3980
      %v3982 = vpop.f32.mrb[0].mxu0
      %3983 = vmatprep.mubr.bf16.mxu0 0
      %3984 = vmatmul.mubr.bf16.gmra.mrb[0].mxu0 %v3835
      %v3985 = vpop.f32.mrb[0].mxu0
      %v3986 = vadd.f32 0.0, %v3985
      %v3987 = vpop.f32.mrb[0].mxu0
      %v3988 = vpop.f32.mrb[0].mxu0
      %v3989 = vadd.f32 0.0, %v3988
      %v3990 = vpop.f32.mrb[0].mxu0
      %3991 = vmatprep.mubr.bf16.mxu0 0
      %3992 = vmatmul.mubr.bf16.gmra.mrb[0].mxu0 %v3836
      %v3993 = vpop.f32.mrb[0].mxu0
      %v3994 = vadd.f32 0.0, %v3993
      %v3995 = vpop.f32.mrb[0].mxu0
      %v3996 = vpop.f32.mrb[0].mxu0
      %v3997 = vadd.f32 0.0, %v3996
      %v3998 = vpop.f32.mrb[0].mxu0
      %3999 = vmatprep.mubr.bf16.mxu0 0
      %4000 = vmatmul.mubr.bf16.gmra.mrb[0].mxu0 %v3837
      %v4001 = vpop.f32.mrb[0].mxu0
      %v4002 = vadd.f32 0.0, %v4001
      %v4003 = vpop.f32.mrb[0].mxu0
      %v4004 = vpop.f32.mrb[0].mxu0
      %v4005 = vadd.f32 0.0, %v4004
      %v4006 = vpop.f32.mrb[0].mxu0
      %4007 = vmatprep.mubr.bf16.mxu0 0
      %4008 = vmatmul.mubr.bf16.gmra.mrb[0].mxu0 %v3838
      %v4009 = vpop.f32.mrb[0].mxu0
      %v4010 = vadd.f32 0.0, %v4009
      %v4011 = vpop.f32.mrb[0].mxu0
      %v4012 = vpop.f32.mrb[0].mxu0
      %v4013 = vadd.f32 0.0, %v4012
      %v4014 = vpop.f32.mrb[0].mxu0
      %4015 = vmatprep.mubr.bf16.mxu0 0
      %4016 = vmatmul.mubr.bf16.gmra.mrb[0].mxu0 %v3839
      %v4017 = vpop.f32.mrb[0].mxu0
      %v4018 = vadd.f32 0.0, %v4017
      %v4019 = vpop.f32.mrb[0].mxu0
      %v4020 = vpop.f32.mrb[0].mxu0
      %v4021 = vadd.f32 0.0, %v4020
      %v4022 = vpop.f32.mrb[0].mxu0
      %4023 = vmatprep.mubr.bf16.mxu0 0
      %4024 = vmatmul.mubr.bf16.gmra.mrb[0].mxu0 %v3840
      %v4025 = vpop.f32.mrb[0].mxu0
      %v4026 = vadd.f32 0.0, %v4025
      %v4027 = vpop.f32.mrb[0].mxu0
      %v4028 = vpop.f32.mrb[0].mxu0
      %v4029 = vadd.f32 0.0, %v4028
      %v4030 = vpop.f32.mrb[0].mxu0
      %4031 = vmatprep.mubr.bf16.mxu0 0
      %4032 = vmatmul.mubr.bf16.gmra.mrb[0].mxu0 %v3841
      %v4033 = vpop.f32.mrb[0].mxu0
      %v4034 = vadd.f32 0.0, %v4033
      %v4035 = vpop.f32.mrb[0].mxu0
      %v4036 = vpop.f32.mrb[0].mxu0
      %v4037 = vadd.f32 0.0, %v4036
      %v4038 = vpop.f32.mrb[0].mxu0
      %4039 = vmatprep.mubr.bf16.mxu0 0
      %4040 = vmatmul.mubr.bf16.gmra.mrb[0].mxu0 %v3842
      %v4041 = vpop.f32.mrb[0].mxu0
      %v4042 = vadd.f32 0.0, %v4041
      %v4043 = vpop.f32.mrb[0].mxu0
      %v4044 = vpop.f32.mrb[0].mxu0
      %v4045 = vadd.f32 0.0, %v4044
      %v4046 = vpop.f32.mrb[0].mxu0
      %4047 = vmatprep.mubr.bf16.mxu0 0
      %4048 = vmatmul.mubr.bf16.gmra.mrb[0].mxu0 %v3843
      %v4049 = vpop.f32.mrb[0].mxu0
      %v4050 = vadd.f32 0.0, %v4049
      %v4051 = vpop.f32.mrb[0].mxu0
      %v4052 = vpop.f32.mrb[0].mxu0
      %v4053 = vadd.f32 0.0, %v4052
      %v4054 = vpop.f32.mrb[0].mxu0
      %4055 = vmatprep.mubr.bf16.mxu0 0
      %4056 = vmatmul.mubr.bf16.gmra.mrb[0].mxu0 %v3844
      %v4057 = vpop.f32.mrb[0].mxu0
      %v4058 = vadd.f32 0.0, %v4057
      %v4059 = vpop.f32.mrb[0].mxu0
      %v4060 = vpop.f32.mrb[0].mxu0
      %v4061 = vadd.f32 0.0, %v4060
      %v4062 = vpop.f32.mrb[0].mxu0
      %4063 = vmatprep.mubr.bf16.mxu0 0
      %4064 = vmatmul.mubr.bf16.gmra.mrb[0].mxu0 %v3845
      %v4065 = vpop.f32.mrb[0].mxu0
      %v4066 = vadd.f32 0.0, %v4065
      %v4067 = vpop.f32.mrb[0].mxu0
      %v4068 = vpop.f32.mrb[0].mxu0
      %v4069 = vadd.f32 0.0, %v4068
      %v4070 = vpop.f32.mrb[0].mxu0
      %4071 = vdwg.mxu0
      %v4072 = vadd.f32 %v3798, %v3946
      %v4073 = vadd.f32 %v3799, %v3949
      %v4074 = vadd.f32 %v3800, %v3954
      %v4075 = vadd.f32 %v3801, %v3957
      %v4076 = vadd.f32 %v3802, %v3962
      %v4077 = vadd.f32 %v3803, %v3965
      %v4078 = vadd.f32 %v3804, %v3970
      %v4079 = vadd.f32 %v3805, %v3973
      %v4080 = vadd.f32 %v3806, %v3978
      %v4081 = vadd.f32 %v3807, %v3981
      %v4082 = vadd.f32 %v3808, %v3986
      %v4083 = vadd.f32 %v3809, %v3989
      %v4084 = vadd.f32 %v3810, %v3994
      %v4085 = vadd.f32 %v3811, %v3997
      %v4086 = vadd.f32 %v3812, %v4002
      %v4087 = vadd.f32 %v3813, %v4005
      %v4088 = vadd.f32 %v3814, %v4010
      %v4089 = vadd.f32 %v3815, %v4013
      %v4090 = vadd.f32 %v3816, %v4018
      %v4091 = vadd.f32 %v3817, %v4021
      %v4092 = vadd.f32 %v3818, %v4026
      %v4093 = vadd.f32 %v3819, %v4029
      %v4094 = vadd.f32 %v3820, %v4034
      %v4095 = vadd.f32 %v3821, %v4037
      %v4096 = vadd.f32 %v3822, %v4042
      %v4097 = vadd.f32 %v3823, %v4045
      %v4098 = vadd.f32 %v3824, %v4050
      %v4099 = vadd.f32 %v3825, %v4053
      %v4100 = vadd.f32 %v3826, %v4058
      %v4101 = vadd.f32 %v3827, %v4061
      %v4102 = vadd.f32 %v3828, %v4066
      %v4103 = vadd.f32 %v3829, %v4069
      %4104 = vst [vmem:[%s305] sm:$0xff] %v4072
      %4105 = vst [vmem:[%s305 + $0x8] sm:$0xff] %v4073
      %4106 = vst [vmem:[%s305 + $0x10] sm:$0xff] %v4074
      %4107 = vst [vmem:[%s305 + $0x18] sm:$0xff] %v4075
      %4108 = vst [vmem:[%s305 + $0x20] sm:$0xff] %v4076
      %4109 = vst [vmem:[%s305 + $0x28] sm:$0xff] %v4077
      %4110 = vst [vmem:[%s305 + $0x30] sm:$0xff] %v4078
      %4111 = vst [vmem:[%s305 + $0x38] sm:$0xff] %v4079
      %4112 = vst [vmem:[%s305 + $0x40] sm:$0xff] %v4080
      %4113 = vst [vmem:[%s305 + $0x48] sm:$0xff] %v4081
      %4114 = vst [vmem:[%s305 + $0x50] sm:$0xff] %v4082
      %4115 = vst [vmem:[%s305 + $0x58] sm:$0xff] %v4083
      %4116 = vst [vmem:[%s305 + $0x60] sm:$0xff] %v4084
      %4117 = vst [vmem:[%s305 + $0x68] sm:$0xff] %v4085
      %4118 = vst [vmem:[%s305 + $0x70] sm:$0xff] %v4086
      %4119 = vst [vmem:[%s305 + $0x78] sm:$0xff] %v4087
      %4120 = vst [vmem:[%s305 + $0x80] sm:$0xff] %v4088
      %4121 = vst [vmem:[%s305 + $0x88] sm:$0xff] %v4089
      %4122 = vst [vmem:[%s305 + $0x90] sm:$0xff] %v4090
      %4123 = vst [vmem:[%s305 + $0x98] sm:$0xff] %v4091
      %4124 = vst [vmem:[%s305 + $0xa0] sm:$0xff] %v4092
      %4125 = vst [vmem:[%s305 + $0xa8] sm:$0xff] %v4093
      %4126 = vst [vmem:[%s305 + $0xb0] sm:$0xff] %v4094
      %4127 = vst [vmem:[%s305 + $0xb8] sm:$0xff] %v4095
      %4128 = vst [vmem:[%s305 + $0xc0] sm:$0xff] %v4096
      %4129 = vst [vmem:[%s305 + $0xc8] sm:$0xff] %v4097
      %4130 = vst [vmem:[%s305 + $0xd0] sm:$0xff] %v4098
      %4131 = vst [vmem:[%s305 + $0xd8] sm:$0xff] %v4099
      %4132 = vst [vmem:[%s305 + $0xe0] sm:$0xff] %v4100
      %4133 = vst [vmem:[%s305 + $0xe8] sm:$0xff] %v4101
      %4134 = vst [vmem:[%s305 + $0xf0] sm:$0xff] %v4102
      %4135 = vst [vmem:[%s305 + $0xf8] sm:$0xff] %v4103
      %v4136 = vld [vmem:[%s3395 + $0x2] sm:$0xff]
      %v4137 = vld [vmem:[%s3395 + $0xa] sm:$0xff]
      %v4138 = vld [vmem:[%s3395 + $0x1a] sm:$0xff]
      %v4139 = vld [vmem:[%s3395 + $0x22] sm:$0xff]
      %v4140 = vld [vmem:[%s3395 + $0x32] sm:$0xff]
      %v4141 = vld [vmem:[%s3395 + $0x3a] sm:$0xff]
      %v4142 = vld [vmem:[%s3395 + $0x4a] sm:$0xff]
      %v4143 = vld [vmem:[%s3395 + $0x52] sm:$0xff]
      %v4144 = vld [vmem:[%s3395 + $0x62] sm:$0xff]
      %v4145 = vld [vmem:[%s3395 + $0x6a] sm:$0xff]
      %v4146 = vld [vmem:[%s3395 + $0x7a] sm:$0xff]
      %v4147 = vld [vmem:[%s3395 + $0x82] sm:$0xff]
      %v4148 = vld [vmem:[%s3395 + $0x92] sm:$0xff]
      %v4149 = vld [vmem:[%s3395 + $0x9a] sm:$0xff]
      %v4150 = vld [vmem:[%s3395 + $0xaa] sm:$0xff]
      %v4151 = vld [vmem:[%s3395 + $0xb2] sm:$0xff]
      %v4152 = vld [vmem:[%s3395 + $0xc2] sm:$0xff]
      %v4153 = vld [vmem:[%s3395 + $0xca] sm:$0xff]
      %v4154 = vld [vmem:[%s3395 + $0xda] sm:$0xff]
      %v4155 = vld [vmem:[%s3395 + $0xe2] sm:$0xff]
      %v4156 = vld [vmem:[%s3395 + $0xf2] sm:$0xff]
      %v4157 = vld [vmem:[%s3395 + $0xfa] sm:$0xff]
      %v4158 = vld [vmem:[%s3395 + $0x10a] sm:$0xff]
      %v4159 = vld [vmem:[%s3395 + $0x112] sm:$0xff]
      %v4160 = vld [vmem:[%s3395 + $0x122] sm:$0xff]
      %v4161 = vld [vmem:[%s3395 + $0x12a] sm:$0xff]
      %v4162 = vld [vmem:[%s3395 + $0x13a] sm:$0xff]
      %v4163 = vld [vmem:[%s3395 + $0x142] sm:$0xff]
      %v4164 = vld [vmem:[%s3395 + $0x152] sm:$0xff]
      %v4165 = vld [vmem:[%s3395 + $0x15a] sm:$0xff]
      %v4166 = vld [vmem:[%s3395 + $0x16a] sm:$0xff]
      %v4167 = vld [vmem:[%s3395 + $0x172] sm:$0xff]
      %v4168 = vld [vmem:[%s305] sm:$0xff]
      %v4169 = vld [vmem:[%s305 + $0x8] sm:$0xff]
      %v4170 = vld [vmem:[%s305 + $0x10] sm:$0xff]
      %v4171 = vld [vmem:[%s305 + $0x18] sm:$0xff]
      %v4172 = vld [vmem:[%s305 + $0x20] sm:$0xff]
      %v4173 = vld [vmem:[%s305 + $0x28] sm:$0xff]
      %v4174 = vld [vmem:[%s305 + $0x30] sm:$0xff]
      %v4175 = vld [vmem:[%s305 + $0x38] sm:$0xff]
      %v4176 = vld [vmem:[%s305 + $0x40] sm:$0xff]
      %v4177 = vld [vmem:[%s305 + $0x48] sm:$0xff]
      %v4178 = vld [vmem:[%s305 + $0x50] sm:$0xff]
      %v4179 = vld [vmem:[%s305 + $0x58] sm:$0xff]
      %v4180 = vld [vmem:[%s305 + $0x60] sm:$0xff]
      %v4181 = vld [vmem:[%s305 + $0x68] sm:$0xff]
      %v4182 = vld [vmem:[%s305 + $0x70] sm:$0xff]
      %v4183 = vld [vmem:[%s305 + $0x78] sm:$0xff]
      %v4184 = vld [vmem:[%s305 + $0x80] sm:$0xff]
      %v4185 = vld [vmem:[%s305 + $0x88] sm:$0xff]
      %v4186 = vld [vmem:[%s305 + $0x90] sm:$0xff]
      %v4187 = vld [vmem:[%s305 + $0x98] sm:$0xff]
      %v4188 = vld [vmem:[%s305 + $0xa0] sm:$0xff]
      %v4189 = vld [vmem:[%s305 + $0xa8] sm:$0xff]
      %v4190 = vld [vmem:[%s305 + $0xb0] sm:$0xff]
      %v4191 = vld [vmem:[%s305 + $0xb8] sm:$0xff]
      %v4192 = vld [vmem:[%s305 + $0xc0] sm:$0xff]
      %v4193 = vld [vmem:[%s305 + $0xc8] sm:$0xff]
      %v4194 = vld [vmem:[%s305 + $0xd0] sm:$0xff]
      %v4195 = vld [vmem:[%s305 + $0xd8] sm:$0xff]
      %v4196 = vld [vmem:[%s305 + $0xe0] sm:$0xff]
      %v4197 = vld [vmem:[%s305 + $0xe8] sm:$0xff]
      %v4198 = vld [vmem:[%s305 + $0xf0] sm:$0xff]
      %v4199 = vld [vmem:[%s305 + $0xf8] sm:$0xff]
      %v4200 = vpack.c.bf16 %v4137, %v4136
      %v4201 = vpack.c.bf16 %v4139, %v4138
      %v4202 = vpack.c.bf16 %v4141, %v4140
      %v4203 = vpack.c.bf16 %v4143, %v4142
      %v4204 = vpack.c.bf16 %v4145, %v4144
      %v4205 = vpack.c.bf16 %v4147, %v4146
      %v4206 = vpack.c.bf16 %v4149, %v4148
      %v4207 = vpack.c.bf16 %v4151, %v4150
      %v4208 = vpack.c.bf16 %v4153, %v4152
      %v4209 = vpack.c.bf16 %v4155, %v4154
      %v4210 = vpack.c.bf16 %v4157, %v4156
      %v4211 = vpack.c.bf16 %v4159, %v4158
      %v4212 = vpack.c.bf16 %v4161, %v4160
      %v4213 = vpack.c.bf16 %v4163, %v4162
      %v4214 = vpack.c.bf16 %v4165, %v4164
      %v4215 = vpack.c.bf16 %v4167, %v4166
      %s4216 = scalar_lea.vmem %s3, 512
      %v4217 = vld [vmem:[%s4216] sm:$0xf]
      %v4218 = vld [vmem:[%s4216 + $0x4] sm:$0xf]
      %v4219 = vld [vmem:[%s4216 + $0x8] sm:$0xf]
      %v4220 = vld [vmem:[%s4216 + $0xc] sm:$0xf]
      %v4221 = vld [vmem:[%s4216 + $0x10] sm:$0xf]
      %v4222 = vld [vmem:[%s4216 + $0x14] sm:$0xf]
      %v4223 = vld [vmem:[%s4216 + $0x18] sm:$0xf]
      %v4224 = vld [vmem:[%s4216 + $0x1c] sm:$0xf]
      %v4225 = vld [vmem:[%s4216 + $0x20] sm:$0xf]
      %v4226 = vld [vmem:[%s4216 + $0x24] sm:$0xf]
      %v4227 = vld [vmem:[%s4216 + $0x28] sm:$0xf]
      %v4228 = vld [vmem:[%s4216 + $0x2c] sm:$0xf]
      %v4229 = vld [vmem:[%s4216 + $0x30] sm:$0xf]
      %v4230 = vld [vmem:[%s4216 + $0x34] sm:$0xf]
      %v4231 = vld [vmem:[%s4216 + $0x38] sm:$0xf]
      %v4232 = vld [vmem:[%s4216 + $0x3c] sm:$0xf]
      %v4249 = vunpack.c.l.b16 %v4217
      %v4250 = vunpack.c.l.b16 %v4218
      %v4251 = vunpack.c.l.b16 %v4219
      %v4252 = vunpack.c.l.b16 %v4220
      %v4253 = vunpack.c.l.b16 %v4221
      %v4254 = vunpack.c.l.b16 %v4222
      %v4255 = vunpack.c.l.b16 %v4223
      %v4256 = vunpack.c.l.b16 %v4224
      %v4257 = vunpack.c.l.b16 %v4225
      %v4258 = vunpack.c.l.b16 %v4226
      %v4259 = vunpack.c.l.b16 %v4227
      %v4260 = vunpack.c.l.b16 %v4228
      %v4261 = vunpack.c.l.b16 %v4229
      %v4262 = vunpack.c.l.b16 %v4230
      %v4263 = vunpack.c.l.b16 %v4231
      %v4264 = vunpack.c.l.b16 %v4232
      %v4265 = vpack.c.b16 %v4250, %v4249
      %v4266 = vpack.c.b16 %v4252, %v4251
      %v4267 = vpack.c.b16 %v4254, %v4253
      %v4268 = vpack.c.b16 %v4256, %v4255
      %v4269 = vpack.c.b16 %v4258, %v4257
      %v4270 = vpack.c.b16 %v4260, %v4259
      %v4271 = vpack.c.b16 %v4262, %v4261
      %v4272 = vpack.c.b16 %v4264, %v4263
      %4281 = vmatprep.subr.bf16.mxu0 0
      %4282 = vmatpush1.bf16.msra.mxu0 %v4265
      %4283 = vmatprep.subr.bf16.mxu0 0
      %4284 = vmatpush1.bf16.msra.mxu0 %v4266
      %4285 = vmatprep.subr.bf16.mxu0 0
      %4286 = vmatpush1.bf16.msra.mxu0 %v4267
      %4287 = vmatprep.subr.bf16.mxu0 0
      %4288 = vmatpush1.bf16.msra.mxu0 %v4268
      %4289 = vmatprep.subr.bf16.mxu0 0
      %4290 = vmatpush1.bf16.msra.mxu0 %v4269
      %4291 = vmatprep.subr.bf16.mxu0 0
      %4292 = vmatpush1.bf16.msra.mxu0 %v4270
      %4293 = vmatprep.subr.bf16.mxu0 0
      %4294 = vmatpush1.bf16.msra.mxu0 %v4271
      %4295 = vmatprep.subr.bf16.mxu0 0
      %4296 = vmatpush1.bf16.msra.mxu0 %v4272
      %4297 = vmatprep.subr.bf16.mxu0 0
      %4298 = vmatpush1.bf16.msra.mxu0 0
      %4299 = vmatprep.subr.bf16.mxu0 0
      %4300 = vmatpush1.bf16.msra.mxu0 0
      %4301 = vmatprep.subr.bf16.mxu0 0
      %4302 = vmatpush1.bf16.msra.mxu0 0
      %4303 = vmatprep.subr.bf16.mxu0 0
      %4304 = vmatpush1.bf16.msra.mxu0 0
      %4305 = vmatprep.subr.bf16.mxu0 0
      %4306 = vmatpush1.bf16.msra.mxu0 0
      %4307 = vmatprep.subr.bf16.mxu0 0
      %4308 = vmatpush1.bf16.msra.mxu0 0
      %4309 = vmatprep.subr.bf16.mxu0 0
      %4310 = vmatpush1.bf16.msra.mxu0 0
      %4311 = vmatprep.subr.bf16.mxu0 0
      %4312 = vmatpush1.bf16.msra.mxu0 0
      %4313 = vmatprep.mubr.bf16.mxu0 0
      %4314 = vmatmul.mubr.bf16.gmra.mrb[0].mxu0 %v4200
      %v4315 = vpop.f32.mrb[0].mxu0
      %v4316 = vadd.f32 0.0, %v4315
      %v4317 = vpop.f32.mrb[0].mxu0
      %v4318 = vpop.f32.mrb[0].mxu0
      %v4319 = vadd.f32 0.0, %v4318
      %v4320 = vpop.f32.mrb[0].mxu0
      %4321 = vmatprep.mubr.bf16.mxu0 0
      %4322 = vmatmul.mubr.bf16.gmra.mrb[0].mxu0 %v4201
      %v4323 = vpop.f32.mrb[0].mxu0
      %v4324 = vadd.f32 0.0, %v4323
      %v4325 = vpop.f32.mrb[0].mxu0
      %v4326 = vpop.f32.mrb[0].mxu0
      %v4327 = vadd.f32 0.0, %v4326
      %v4328 = vpop.f32.mrb[0].mxu0
      %4329 = vmatprep.mubr.bf16.mxu0 0
      %4330 = vmatmul.mubr.bf16.gmra.mrb[0].mxu0 %v4202
      %v4331 = vpop.f32.mrb[0].mxu0
      %v4332 = vadd.f32 0.0, %v4331
      %v4333 = vpop.f32.mrb[0].mxu0
      %v4334 = vpop.f32.mrb[0].mxu0
      %v4335 = vadd.f32 0.0, %v4334
      %v4336 = vpop.f32.mrb[0].mxu0
      %4337 = vmatprep.mubr.bf16.mxu0 0
      %4338 = vmatmul.mubr.bf16.gmra.mrb[0].mxu0 %v4203
      %v4339 = vpop.f32.mrb[0].mxu0
      %v4340 = vadd.f32 0.0, %v4339
      %v4341 = vpop.f32.mrb[0].mxu0
      %v4342 = vpop.f32.mrb[0].mxu0
      %v4343 = vadd.f32 0.0, %v4342
      %v4344 = vpop.f32.mrb[0].mxu0
      %4345 = vmatprep.mubr.bf16.mxu0 0
      %4346 = vmatmul.mubr.bf16.gmra.mrb[0].mxu0 %v4204
      %v4347 = vpop.f32.mrb[0].mxu0
      %v4348 = vadd.f32 0.0, %v4347
      %v4349 = vpop.f32.mrb[0].mxu0
      %v4350 = vpop.f32.mrb[0].mxu0
      %v4351 = vadd.f32 0.0, %v4350
      %v4352 = vpop.f32.mrb[0].mxu0
      %4353 = vmatprep.mubr.bf16.mxu0 0
      %4354 = vmatmul.mubr.bf16.gmra.mrb[0].mxu0 %v4205
      %v4355 = vpop.f32.mrb[0].mxu0
      %v4356 = vadd.f32 0.0, %v4355
      %v4357 = vpop.f32.mrb[0].mxu0
      %v4358 = vpop.f32.mrb[0].mxu0
      %v4359 = vadd.f32 0.0, %v4358
      %v4360 = vpop.f32.mrb[0].mxu0
      %4361 = vmatprep.mubr.bf16.mxu0 0
      %4362 = vmatmul.mubr.bf16.gmra.mrb[0].mxu0 %v4206
      %v4363 = vpop.f32.mrb[0].mxu0
      %v4364 = vadd.f32 0.0, %v4363
      %v4365 = vpop.f32.mrb[0].mxu0
      %v4366 = vpop.f32.mrb[0].mxu0
      %v4367 = vadd.f32 0.0, %v4366
      %v4368 = vpop.f32.mrb[0].mxu0
      %4369 = vmatprep.mubr.bf16.mxu0 0
      %4370 = vmatmul.mubr.bf16.gmra.mrb[0].mxu0 %v4207
      %v4371 = vpop.f32.mrb[0].mxu0
      %v4372 = vadd.f32 0.0, %v4371
      %v4373 = vpop.f32.mrb[0].mxu0
      %v4374 = vpop.f32.mrb[0].mxu0
      %v4375 = vadd.f32 0.0, %v4374
      %v4376 = vpop.f32.mrb[0].mxu0
      %4377 = vmatprep.mubr.bf16.mxu0 0
      %4378 = vmatmul.mubr.bf16.gmra.mrb[0].mxu0 %v4208
      %v4379 = vpop.f32.mrb[0].mxu0
      %v4380 = vadd.f32 0.0, %v4379
      %v4381 = vpop.f32.mrb[0].mxu0
      %v4382 = vpop.f32.mrb[0].mxu0
      %v4383 = vadd.f32 0.0, %v4382
      %v4384 = vpop.f32.mrb[0].mxu0
      %4385 = vmatprep.mubr.bf16.mxu0 0
      %4386 = vmatmul.mubr.bf16.gmra.mrb[0].mxu0 %v4209
      %v4387 = vpop.f32.mrb[0].mxu0
      %v4388 = vadd.f32 0.0, %v4387
      %v4389 = vpop.f32.mrb[0].mxu0
      %v4390 = vpop.f32.mrb[0].mxu0
      %v4391 = vadd.f32 0.0, %v4390
      %v4392 = vpop.f32.mrb[0].mxu0
      %4393 = vmatprep.mubr.bf16.mxu0 0
      %4394 = vmatmul.mubr.bf16.gmra.mrb[0].mxu0 %v4210
      %v4395 = vpop.f32.mrb[0].mxu0
      %v4396 = vadd.f32 0.0, %v4395
      %v4397 = vpop.f32.mrb[0].mxu0
      %v4398 = vpop.f32.mrb[0].mxu0
      %v4399 = vadd.f32 0.0, %v4398
      %v4400 = vpop.f32.mrb[0].mxu0
      %4401 = vmatprep.mubr.bf16.mxu0 0
      %4402 = vmatmul.mubr.bf16.gmra.mrb[0].mxu0 %v4211
      %v4403 = vpop.f32.mrb[0].mxu0
      %v4404 = vadd.f32 0.0, %v4403
      %v4405 = vpop.f32.mrb[0].mxu0
      %v4406 = vpop.f32.mrb[0].mxu0
      %v4407 = vadd.f32 0.0, %v4406
      %v4408 = vpop.f32.mrb[0].mxu0
      %4409 = vmatprep.mubr.bf16.mxu0 0
      %4410 = vmatmul.mubr.bf16.gmra.mrb[0].mxu0 %v4212
      %v4411 = vpop.f32.mrb[0].mxu0
      %v4412 = vadd.f32 0.0, %v4411
      %v4413 = vpop.f32.mrb[0].mxu0
      %v4414 = vpop.f32.mrb[0].mxu0
      %v4415 = vadd.f32 0.0, %v4414
      %v4416 = vpop.f32.mrb[0].mxu0
      %4417 = vmatprep.mubr.bf16.mxu0 0
      %4418 = vmatmul.mubr.bf16.gmra.mrb[0].mxu0 %v4213
      %v4419 = vpop.f32.mrb[0].mxu0
      %v4420 = vadd.f32 0.0, %v4419
      %v4421 = vpop.f32.mrb[0].mxu0
      %v4422 = vpop.f32.mrb[0].mxu0
      %v4423 = vadd.f32 0.0, %v4422
      %v4424 = vpop.f32.mrb[0].mxu0
      %4425 = vmatprep.mubr.bf16.mxu0 0
      %4426 = vmatmul.mubr.bf16.gmra.mrb[0].mxu0 %v4214
      %v4427 = vpop.f32.mrb[0].mxu0
      %v4428 = vadd.f32 0.0, %v4427
      %v4429 = vpop.f32.mrb[0].mxu0
      %v4430 = vpop.f32.mrb[0].mxu0
      %v4431 = vadd.f32 0.0, %v4430
      %v4432 = vpop.f32.mrb[0].mxu0
      %4433 = vmatprep.mubr.bf16.mxu0 0
      %4434 = vmatmul.mubr.bf16.gmra.mrb[0].mxu0 %v4215
      %v4435 = vpop.f32.mrb[0].mxu0
      %v4436 = vadd.f32 0.0, %v4435
      %v4437 = vpop.f32.mrb[0].mxu0
      %v4438 = vpop.f32.mrb[0].mxu0
      %v4439 = vadd.f32 0.0, %v4438
      %v4440 = vpop.f32.mrb[0].mxu0
      %4441 = vdwg.mxu0
      %v4442 = vadd.f32 %v4168, %v4316
      %v4443 = vadd.f32 %v4169, %v4319
      %v4444 = vadd.f32 %v4170, %v4324
      %v4445 = vadd.f32 %v4171, %v4327
      %v4446 = vadd.f32 %v4172, %v4332
      %v4447 = vadd.f32 %v4173, %v4335
      %v4448 = vadd.f32 %v4174, %v4340
      %v4449 = vadd.f32 %v4175, %v4343
      %v4450 = vadd.f32 %v4176, %v4348
      %v4451 = vadd.f32 %v4177, %v4351
      %v4452 = vadd.f32 %v4178, %v4356
      %v4453 = vadd.f32 %v4179, %v4359
      %v4454 = vadd.f32 %v4180, %v4364
      %v4455 = vadd.f32 %v4181, %v4367
      %v4456 = vadd.f32 %v4182, %v4372
      %v4457 = vadd.f32 %v4183, %v4375
      %v4458 = vadd.f32 %v4184, %v4380
      %v4459 = vadd.f32 %v4185, %v4383
      %v4460 = vadd.f32 %v4186, %v4388
      %v4461 = vadd.f32 %v4187, %v4391
      %v4462 = vadd.f32 %v4188, %v4396
      %v4463 = vadd.f32 %v4189, %v4399
      %v4464 = vadd.f32 %v4190, %v4404
      %v4465 = vadd.f32 %v4191, %v4407
      %v4466 = vadd.f32 %v4192, %v4412
      %v4467 = vadd.f32 %v4193, %v4415
      %v4468 = vadd.f32 %v4194, %v4420
      %v4469 = vadd.f32 %v4195, %v4423
      %v4470 = vadd.f32 %v4196, %v4428
      %v4471 = vadd.f32 %v4197, %v4431
      %v4472 = vadd.f32 %v4198, %v4436
      %v4473 = vadd.f32 %v4199, %v4439
      %4474 = vst [vmem:[%s305] sm:$0xff] %v4442
      %4475 = vst [vmem:[%s305 + $0x8] sm:$0xff] %v4443
      %4476 = vst [vmem:[%s305 + $0x10] sm:$0xff] %v4444
      %4477 = vst [vmem:[%s305 + $0x18] sm:$0xff] %v4445
      %4478 = vst [vmem:[%s305 + $0x20] sm:$0xff] %v4446
      %4479 = vst [vmem:[%s305 + $0x28] sm:$0xff] %v4447
      %4480 = vst [vmem:[%s305 + $0x30] sm:$0xff] %v4448
      %4481 = vst [vmem:[%s305 + $0x38] sm:$0xff] %v4449
      %4482 = vst [vmem:[%s305 + $0x40] sm:$0xff] %v4450
      %4483 = vst [vmem:[%s305 + $0x48] sm:$0xff] %v4451
      %4484 = vst [vmem:[%s305 + $0x50] sm:$0xff] %v4452
      %4485 = vst [vmem:[%s305 + $0x58] sm:$0xff] %v4453
      %4486 = vst [vmem:[%s305 + $0x60] sm:$0xff] %v4454
      %4487 = vst [vmem:[%s305 + $0x68] sm:$0xff] %v4455
      %4488 = vst [vmem:[%s305 + $0x70] sm:$0xff] %v4456
      %4489 = vst [vmem:[%s305 + $0x78] sm:$0xff] %v4457
      %4490 = vst [vmem:[%s305 + $0x80] sm:$0xff] %v4458
      %4491 = vst [vmem:[%s305 + $0x88] sm:$0xff] %v4459
      %4492 = vst [vmem:[%s305 + $0x90] sm:$0xff] %v4460
      %4493 = vst [vmem:[%s305 + $0x98] sm:$0xff] %v4461
      %4494 = vst [vmem:[%s305 + $0xa0] sm:$0xff] %v4462
      %4495 = vst [vmem:[%s305 + $0xa8] sm:$0xff] %v4463
      %4496 = vst [vmem:[%s305 + $0xb0] sm:$0xff] %v4464
      %4497 = vst [vmem:[%s305 + $0xb8] sm:$0xff] %v4465
      %4498 = vst [vmem:[%s305 + $0xc0] sm:$0xff] %v4466
      %4499 = vst [vmem:[%s305 + $0xc8] sm:$0xff] %v4467
      %4500 = vst [vmem:[%s305 + $0xd0] sm:$0xff] %v4468
      %4501 = vst [vmem:[%s305 + $0xd8] sm:$0xff] %v4469
      %4502 = vst [vmem:[%s305 + $0xe0] sm:$0xff] %v4470
      %4503 = vst [vmem:[%s305 + $0xe8] sm:$0xff] %v4471
      %4504 = vst [vmem:[%s305 + $0xf0] sm:$0xff] %v4472
      %4505 = vst [vmem:[%s305 + $0xf8] sm:$0xff] %v4473
      %p4506 = scmp.lt.s32.totalorder %s19, 1
      %s4507 = scalar_select %p4506, %s19, 1
      %s4508 = smul.addr %s4507, 32
      %s4509 = smul.addr %s4508, 8
      %s4510 = scalar_lea.vmem %s8, %s4509
      // Predicated region
      $region53: #{nn_forward.1} parent=51 // pred_check
        %p4511 = pneg %p210
      $region54: #{nn_forward.1} parent=51 // pred_check_branch
        %4513 = sbr.rel (%p4511) target = $region56
      $region55: #{nn_forward.1} parent=51 // pred_region
        _
      $region56: #{nn_forward.1} parent=51 // pred_fallthru
        _
    $region52: #{nn_forward.1} parent=5 // pred_fallthru
      _
    %p4514 = scmp.le.s32.totalorder 2, %s14
    // Predicated region
    $region57: #{nn_forward.1} parent=5 // pred_check
      %p4515 = pneg %p4514
    $region58: #{nn_forward.1} parent=5 // pred_check_branch
      %4517 = sbr.rel (%p4515) target = $region60
    $region59: #{nn_forward.1} parent=5 // pred_region
      %s4518 = ssub.s32 %s14, 2
      // Predicated region
      $region61: #{nn_forward.1} parent=59 // pred_check
        %p4519 = pneg %p216
      $region62: #{nn_forward.1} parent=59 // pred_check_branch
        %4521 = sbr.rel (%p4519) target = $region64
      $region63: #{nn_forward.1} parent=59 // pred_region
        %p4522 = scmp.lt.s32.totalorder %s20, 1
        %s4523 = scalar_select %p4522, %s20, 1
        %s4524 = smul.addr %s4523, 32
        %s4525 = smul.addr %s4524, 8
        %s4526 = scalar_lea.vmem %s8, %s4525
      $region64: #{nn_forward.1} parent=59 // pred_fallthru
        _
    $region60: #{nn_forward.1} parent=5 // pred_fallthru
      _
  $region6: #{nn_forward.1} parent=0 // loop_footer
    %s18 = sadd.s32 1, %s14
  $region7: #{nn_forward.1} parent=0 // loop_footer_branch
    %13 = sbr.rel target = $region3
  $region8: #{nn_forward.1} parent=0 // loop_exit
    _

</llo_original>
